<compile_context>
chip_gen: v7x
topology: tpu7x:2x2x1
jax: 0.10.0
libtpu: 0.0.40
codegen_flags: <defaults>
</compile_context>

<pallas_src>
import functools

import jax
import jax.numpy as jnp
from jax.experimental import pallas as pl
from jax.experimental.pallas import tpu as pltpu


def bmil_enc_kernel(h_ref, eps_ref, w1_ref, b1_ref, wab_ref, bab_ref,
                    wct_ref, bc_ref, wclst_ref, bcls_ref, prior_ref, out_ref):
    D = wct_ref.shape[1]
    N = h_ref.shape[0]

    # fc1: Linear(L, H) + ReLU  (bf16 operands, f32 accumulate on the MXU)
    h16 = h_ref[...].astype(jnp.bfloat16)
    x = jnp.dot(h16, w1_ref[...], preferred_element_type=jnp.float32) + b1_ref[...]
    x = jnp.maximum(x, 0.0)                                              # (N, H) f32

    # Fused gated attention: one (H, 2D) matmul, split into tanh/sigmoid halves
    ab_pre = (jnp.dot(x.astype(jnp.bfloat16), wab_ref[...],
                      preferred_element_type=jnp.float32) + bab_ref[...])  # (N, 2D)
    a = jnp.tanh(ab_pre[:, :D])
    b = jax.nn.sigmoid(ab_pre[:, D:])
    ab = a * b                                                           # (N, D)

    # attention_c (D -> 2): VPU broadcast-multiply + lane reduction (skip MXU)
    mu = jnp.sum(ab * wct_ref[0:1, :], axis=-1, keepdims=True) + bc_ref[:, 0:1]
    logvar = jnp.sum(ab * wct_ref[1:2, :], axis=-1, keepdims=True) + bc_ref[:, 1:2]

    # reparameterize + sigmoid -> per-instance attention weights
    eps = eps_ref[...]                                                   # (N, 1)
    gaus = mu + eps * jnp.exp(0.5 * logvar)
    beta = jax.nn.sigmoid(gaus)                                          # (N, 1)

    # kl_logistic_normal — verbatim formula from the PyTorch reference
    mu_pr = prior_ref[:, 0:1]
    logvar_pr = prior_ref[:, 1:2]
    kl = ((logvar_pr - logvar) / 2.0
          + (logvar * logvar + (mu_pr - mu) ** 2) / (2.0 * logvar_pr * logvar_pr)
          - 0.5)                                                         # (N, 1)

    # M = (A @ h512) / A.sum()   as a weighted sublane reduction
    M = jnp.sum(beta * x, axis=0, keepdims=True) / jnp.sum(beta)         # (1, H)

    # classifier (H -> 2): again VPU multiply + lane reduction
    logit0 = jnp.sum(M * wclst_ref[0:1, :], axis=-1, keepdims=True) + bcls_ref[:, 0:1]
    logit1 = jnp.sum(M * wclst_ref[1:2, :], axis=-1, keepdims=True) + bcls_ref[:, 1:2]

    # Pack everything into one lane-dense (N, 128) slab:
    #   lane 0 = beta, lane 1 = kl, lane 2 = logit0, lane 3 = logit1 (rows bcast)
    lane = jax.lax.broadcasted_iota(jnp.int32, (N, 128), 1)
    packed = jnp.where(lane == 0, beta, 0.0)
    packed = jnp.where(lane == 1, kl, packed)
    packed = jnp.where(lane == 2, logit0, packed)
    packed = jnp.where(lane == 3, logit1, packed)
    out_ref[...] = packed


def make_bmil_call(num_bags, N, L, H, D, C):
    const = lambda b: (0, 0)   # weights: same block every step -> DMA'd once
    return pl.pallas_call(
        bmil_enc_kernel,
        grid=(num_bags,),
        in_specs=[
            pl.BlockSpec((None, N, L), lambda b: (b, 0, 0)),   # h      (per bag)
            pl.BlockSpec((None, N, 1), lambda b: (b, 0, 0)),   # eps    (per bag)
            pl.BlockSpec((L, H), const),                       # w1     (resident, bf16)
            pl.BlockSpec((1, H), const),                       # b1
            pl.BlockSpec((H, 2 * D), const),                   # wa|wb  (resident, bf16)
            pl.BlockSpec((1, 2 * D), const),                   # ba|bb
            pl.BlockSpec((C, D), const),                       # wc^T
            pl.BlockSpec((1, C), const),                       # bc
            pl.BlockSpec((C, H), const),                       # wcls^T
            pl.BlockSpec((1, C), const),                       # bcls
            pl.BlockSpec((1, 2), const),                       # prior (mu_pr, logvar_pr)
        ],
        out_specs=pl.BlockSpec((None, N, 128), lambda b: (b, 0, 0)),
        out_shape=jax.ShapeDtypeStruct((num_bags, N, 128), jnp.float32),
        compiler_params=pltpu.CompilerParams(
            dimension_semantics=("parallel",),
            vmem_limit_bytes=16 * 1024 * 1024,
        ),
    )


def init_params(key, L, H, D, C):
    """PyTorch-layout f32 parameters (weights stored (in, out))."""
    ks = jax.random.split(key, 6)
    s = 0.02
    w1 = jax.random.normal(ks[0], (L, H), jnp.float32) * s
    b1 = jnp.zeros((1, H), jnp.float32)
    wa = jax.random.normal(ks[1], (H, D), jnp.float32) * s
    ba = jnp.zeros((1, D), jnp.float32)
    wb = jax.random.normal(ks[2], (H, D), jnp.float32) * s
    bb = jnp.zeros((1, D), jnp.float32)
    wc = jax.random.normal(ks[3], (D, C), jnp.float32) * s
    bc = jnp.zeros((1, C), jnp.float32)
    wcls = jax.random.normal(ks[4], (H, C), jnp.float32) * s
    bcls = jnp.zeros((1, C), jnp.float32)
    return (w1, b1, wa, ba, wb, bb, wc, bc, wcls, bcls)


def prepare_params(params):
    """One-time packing: fuse gated-attention weights, transpose the two
    2-wide projections, and store the big matmul weights in bf16."""
    (w1, b1, wa, ba, wb, bb, wc, bc, wcls, bcls) = params
    wab = jnp.concatenate([wa, wb], axis=1).astype(jnp.bfloat16)   # (H, 2D)
    bab = jnp.concatenate([ba, bb], axis=1)                        # (1, 2D)
    return (w1.astype(jnp.bfloat16), b1, wab, bab,
            jnp.transpose(wc), bc, jnp.transpose(wcls), bcls)


@functools.partial(jax.jit, static_argnames=("top_k",))
def bmil_forward(h, kparams, eps, prior_pair, top_k=1):
    """Batched forward over bags.

    h:   (num_bags, N, L)  instance features per bag
    eps: (num_bags, N, 1)  reparameterization noise (torch.randn_like)
    Returns (top_instance, Y_prob, Y_hat, kl_div, y_probs, A) with a leading
    num_bags axis; each bag's entries match the PyTorch single-bag forward.
    """
    B, N, L = h.shape
    w1, b1, wab, bab, wct, bc, wclst, bcls = kparams
    H = w1.shape[1]
    D = wct.shape[1]
    C = wct.shape[0]

    call = make_bmil_call(B, N, L, H, D, C)
    packed = call(h, eps, w1, b1, wab, bab, wct, bc, wclst, bcls, prior_pair)

    beta = packed[:, :, 0]                    # (B, N)
    kl_div = packed[:, :, 1]                  # (B, N)
    logits = packed[:, 0, 2:2 + C]            # (B, C)

    A = beta[:, None, :]                                  # (B, 1, N)
    y_probs = jax.nn.softmax(logits, axis=-1)             # (B, C)
    # top_k over y_probs[:, 1]: the bag-level logits have a single row, so the
    # selected "top instance" is always that row (exactly as in the reference).
    top_instance = logits[:, None, :]                     # (B, top_k=1, C)
    Y_hat = jnp.argmax(top_instance, axis=-1, keepdims=True)   # (B, 1, 1)
    Y_prob = jax.nn.softmax(top_instance, axis=-1)             # (B, 1, C)
    return top_instance, Y_prob, Y_hat, kl_div, y_probs, A


if __name__ == "__main__":
    # size_dict['small'] = [1024, 512, 256]; n_classes = 2; small bags of N = 8
    num_bags, N, L, H, D, C = 4, 8, 1024, 512, 256, 2

    key = jax.random.PRNGKey(0)
    k_h, k_p, k_eps = jax.random.split(key, 3)

    h = jax.random.normal(k_h, (num_bags, N, L), jnp.float32)
    params = init_params(k_p, L, H, D, C)
    kparams = prepare_params(params)
    eps = jax.random.normal(k_eps, (num_bags, N, 1), jnp.float32)

    # module constants: prior_mu = [-5., 0.], prior_logvar = [-1., 1.]
    prior_mu = jnp.array([-5.0, 0.0], jnp.float32)
    prior_logvar = jnp.array([-1.0, 1.0], jnp.float32)
    slide_label = 1
    prior_pair = jnp.stack(
        [prior_mu[slide_label], prior_logvar[slide_label]]).reshape(1, 2)

    outs = bmil_forward(h, kparams, eps, prior_pair, top_k=1)
    outs = jax.block_until_ready(outs)

    top_instance, Y_prob, Y_hat, kl_div, y_probs, A = outs
    assert top_instance.shape == (num_bags, 1, C)
    assert Y_prob.shape == (num_bags, 1, C)
    assert Y_hat.shape == (num_bags, 1, 1)
    assert kl_div.shape == (num_bags, N)
    assert y_probs.shape == (num_bags, C)
    assert A.shape == (num_bags, 1, N)
    assert bool(jnp.all(jnp.isfinite(top_instance)))
    assert bool(jnp.all(jnp.isfinite(kl_div)))
    print("KERNEL_OK")
</pallas_src>

<mosaic_0001>
module attributes {stable_mosaic.version = 11 : i64} {
  func.func @bmil_enc_kernel(%arg0: i32, %arg1: memref<1x8x1024xf32, #tpu.memory_space<vmem>>, %arg2: memref<1x8x1xf32, #tpu.memory_space<vmem>>, %arg3: memref<1024x512xbf16, #tpu.memory_space<vmem>>, %arg4: memref<1x512xf32, #tpu.memory_space<vmem>>, %arg5: memref<512x512xbf16, #tpu.memory_space<vmem>>, %arg6: memref<1x512xf32, #tpu.memory_space<vmem>>, %arg7: memref<2x256xf32, #tpu.memory_space<vmem>>, %arg8: memref<1x2xf32, #tpu.memory_space<vmem>>, %arg9: memref<2x512xf32, #tpu.memory_space<vmem>>, %arg10: memref<1x2xf32, #tpu.memory_space<vmem>>, %arg11: memref<1x2xf32, #tpu.memory_space<vmem>>, %arg12: memref<1x8x128xf32, #tpu.memory_space<vmem>>) attributes {dimension_semantics = [#tpu.dimension_semantics<parallel>], iteration_bounds = array<i64: 4>, scalar_prefetch = 0 : i64, scratch_operands = 0 : i64, tpu.core_type = #tpu.core_type<tc>, window_params = [{transform_indices = @transform_0, window_bounds = array<i64: 1, 8, 1024>}, {transform_indices = @transform_1, window_bounds = array<i64: 1, 8, 1>}, {pipeline_mode = #tpu.pipeline_mode<synchronous>, transform_indices = @transform_2, window_bounds = array<i64: 1024, 512>}, {pipeline_mode = #tpu.pipeline_mode<synchronous>, transform_indices = @transform_3, window_bounds = array<i64: 1, 512>}, {pipeline_mode = #tpu.pipeline_mode<synchronous>, transform_indices = @transform_4, window_bounds = array<i64: 512, 512>}, {pipeline_mode = #tpu.pipeline_mode<synchronous>, transform_indices = @transform_5, window_bounds = array<i64: 1, 512>}, {pipeline_mode = #tpu.pipeline_mode<synchronous>, transform_indices = @transform_6, window_bounds = array<i64: 2, 256>}, {pipeline_mode = #tpu.pipeline_mode<synchronous>, transform_indices = @transform_7, window_bounds = array<i64: 1, 2>}, {pipeline_mode = #tpu.pipeline_mode<synchronous>, transform_indices = @transform_8, window_bounds = array<i64: 2, 512>}, {pipeline_mode = #tpu.pipeline_mode<synchronous>, transform_indices = @transform_9, window_bounds = array<i64: 1, 2>}, {pipeline_mode = #tpu.pipeline_mode<synchronous>, transform_indices = @transform_10, window_bounds = array<i64: 1, 2>}, {transform_indices = @transform_11, window_bounds = array<i64: 1, 8, 128>}]} {
    %c0 = arith.constant 0 : index
    %c0_0 = arith.constant 0 : index
    %c0_1 = arith.constant 0 : index
    %0 = vector.load %arg1[%c0, %c0_0, %c0_1] : memref<1x8x1024xf32, #tpu.memory_space<vmem>>, vector<1x8x1024xf32>
    %1 = vector.shape_cast %0 : vector<1x8x1024xf32> to vector<8x1024xf32>
    %2 = arith.truncf %1 : vector<8x1024xf32> to vector<8x1024xbf16>
    %c0_2 = arith.constant 0 : index
    %c0_3 = arith.constant 0 : index
    %3 = vector.load %arg3[%c0_2, %c0_3] : memref<1024x512xbf16, #tpu.memory_space<vmem>>, vector<1024x512xbf16>
    %cst = arith.constant dense<0.000000e+00> : vector<8x512xf32>
    %4 = tpu.matmul %2, %3, %cst {dimension_numbers = #tpu.dot_dimension_numbers<[1], [0], [0], [1], [0, 0, 1, 1], [], []>} : vector<8x1024xbf16>, vector<1024x512xbf16>, vector<8x512xf32> -> vector<8x512xf32>
    %c0_4 = arith.constant 0 : index
    %c0_5 = arith.constant 0 : index
    %5 = vector.load %arg4[%c0_4, %c0_5] : memref<1x512xf32, #tpu.memory_space<vmem>>, vector<1x512xf32>
    %6 = vector.broadcast %5 : vector<1x512xf32> to vector<8x512xf32>
    %7 = arith.addf %4, %6 : vector<8x512xf32>
    %cst_6 = arith.constant 0.000000e+00 : f32
    %8 = vector.broadcast %cst_6 : f32 to vector<8x512xf32>
    %9 = arith.maximumf %7, %8 : vector<8x512xf32>
    %10 = arith.truncf %9 : vector<8x512xf32> to vector<8x512xbf16>
    %c0_7 = arith.constant 0 : index
    %c0_8 = arith.constant 0 : index
    %11 = vector.load %arg5[%c0_7, %c0_8] : memref<512x512xbf16, #tpu.memory_space<vmem>>, vector<512x512xbf16>
    %cst_9 = arith.constant dense<0.000000e+00> : vector<8x512xf32>
    %12 = tpu.matmul %10, %11, %cst_9 {dimension_numbers = #tpu.dot_dimension_numbers<[1], [0], [0], [1], [0, 0, 1, 1], [], []>} : vector<8x512xbf16>, vector<512x512xbf16>, vector<8x512xf32> -> vector<8x512xf32>
    %c0_10 = arith.constant 0 : index
    %c0_11 = arith.constant 0 : index
    %13 = vector.load %arg6[%c0_10, %c0_11] : memref<1x512xf32, #tpu.memory_space<vmem>>, vector<1x512xf32>
    %14 = vector.broadcast %13 : vector<1x512xf32> to vector<8x512xf32>
    %15 = arith.addf %12, %14 : vector<8x512xf32>
    %16 = vector.extract_strided_slice %15 {offsets = [0, 0], sizes = [8, 256], strides = [1, 1]} : vector<8x512xf32> to vector<8x256xf32>
    %17 = math.tanh %16 : vector<8x256xf32>
    %18 = vector.extract_strided_slice %15 {offsets = [0, 256], sizes = [8, 256], strides = [1, 1]} : vector<8x512xf32> to vector<8x256xf32>
    %19 = arith.negf %18 : vector<8x256xf32>
    %20 = math.exp %19 : vector<8x256xf32>
    %cst_12 = arith.constant 1.000000e+00 : f32
    %21 = vector.broadcast %cst_12 : f32 to vector<8x256xf32>
    %22 = arith.addf %21, %20 : vector<8x256xf32>
    %23 = arith.divf %21, %22 : vector<8x256xf32>
    %24 = arith.mulf %17, %23 : vector<8x256xf32>
    %c0_13 = arith.constant 0 : index
    %c0_14 = arith.constant 0 : index
    %25 = vector.load %arg7[%c0_13, %c0_14] : memref<2x256xf32, #tpu.memory_space<vmem>>, vector<1x256xf32>
    %26 = vector.broadcast %25 : vector<1x256xf32> to vector<8x256xf32>
    %27 = arith.mulf %24, %26 : vector<8x256xf32>
    %cst_15 = arith.constant dense<0.000000e+00> : vector<8xf32>
    %28 = vector.multi_reduction <add>, %27, %cst_15 [1] : vector<8x256xf32> to vector<8xf32>
    %29 = vector.shape_cast %28 : vector<8xf32> to vector<8x1xf32>
    %c0_16 = arith.constant 0 : index
    %c0_17 = arith.constant 0 : index
    %30 = vector.load %arg8[%c0_16, %c0_17] : memref<1x2xf32, #tpu.memory_space<vmem>>, vector<1x1xf32>
    %31 = vector.broadcast %30 : vector<1x1xf32> to vector<8x1xf32>
    %32 = arith.addf %29, %31 : vector<8x1xf32>
    %c1 = arith.constant 1 : index
    %c0_18 = arith.constant 0 : index
    %33 = vector.load %arg7[%c1, %c0_18] : memref<2x256xf32, #tpu.memory_space<vmem>>, vector<1x256xf32>
    %34 = vector.broadcast %33 : vector<1x256xf32> to vector<8x256xf32>
    %35 = arith.mulf %24, %34 : vector<8x256xf32>
    %cst_19 = arith.constant dense<0.000000e+00> : vector<8xf32>
    %36 = vector.multi_reduction <add>, %35, %cst_19 [1] : vector<8x256xf32> to vector<8xf32>
    %37 = vector.shape_cast %36 : vector<8xf32> to vector<8x1xf32>
    %c0_20 = arith.constant 0 : index
    %c1_21 = arith.constant 1 : index
    %38 = vector.load %arg8[%c0_20, %c1_21] : memref<1x2xf32, #tpu.memory_space<vmem>>, vector<1x1xf32>
    %39 = vector.broadcast %38 : vector<1x1xf32> to vector<8x1xf32>
    %40 = arith.addf %37, %39 : vector<8x1xf32>
    %c0_22 = arith.constant 0 : index
    %c0_23 = arith.constant 0 : index
    %c0_24 = arith.constant 0 : index
    %41 = vector.load %arg2[%c0_22, %c0_23, %c0_24] : memref<1x8x1xf32, #tpu.memory_space<vmem>>, vector<1x8x1xf32>
    %42 = vector.shape_cast %41 : vector<1x8x1xf32> to vector<8x1xf32>
    %cst_25 = arith.constant 5.000000e-01 : f32
    %43 = vector.broadcast %cst_25 : f32 to vector<8x1xf32>
    %44 = arith.mulf %43, %40 : vector<8x1xf32>
    %45 = math.exp %44 : vector<8x1xf32>
    %46 = arith.mulf %42, %45 : vector<8x1xf32>
    %47 = arith.addf %32, %46 : vector<8x1xf32>
    %48 = arith.negf %47 : vector<8x1xf32>
    %49 = math.exp %48 : vector<8x1xf32>
    %cst_26 = arith.constant 1.000000e+00 : f32
    %50 = vector.broadcast %cst_26 : f32 to vector<8x1xf32>
    %51 = arith.addf %50, %49 : vector<8x1xf32>
    %52 = arith.divf %50, %51 : vector<8x1xf32>
    %c0_27 = arith.constant 0 : index
    %c0_28 = arith.constant 0 : index
    %53 = vector.load %arg11[%c0_27, %c0_28] : memref<1x2xf32, #tpu.memory_space<vmem>>, vector<1x1xf32>
    %c0_29 = arith.constant 0 : index
    %c1_30 = arith.constant 1 : index
    %54 = vector.load %arg11[%c0_29, %c1_30] : memref<1x2xf32, #tpu.memory_space<vmem>>, vector<1x1xf32>
    %55 = vector.broadcast %54 : vector<1x1xf32> to vector<8x1xf32>
    %56 = arith.subf %55, %40 : vector<8x1xf32>
    %cst_31 = arith.constant 2.000000e+00 : f32
    %57 = vector.broadcast %cst_31 : f32 to vector<8x1xf32>
    %58 = arith.divf %56, %57 : vector<8x1xf32>
    %59 = arith.mulf %40, %40 : vector<8x1xf32>
    %60 = vector.broadcast %53 : vector<1x1xf32> to vector<8x1xf32>
    %61 = arith.subf %60, %32 : vector<8x1xf32>
    %62 = arith.mulf %61, %61 : vector<8x1xf32>
    %63 = arith.addf %59, %62 : vector<8x1xf32>
    %cst_32 = arith.constant 2.000000e+00 : f32
    %64 = vector.broadcast %cst_32 : f32 to vector<1x1xf32>
    %65 = arith.mulf %64, %54 : vector<1x1xf32>
    %66 = arith.mulf %65, %54 : vector<1x1xf32>
    %67 = vector.broadcast %66 : vector<1x1xf32> to vector<8x1xf32>
    %68 = arith.divf %63, %67 : vector<8x1xf32>
    %69 = arith.addf %58, %68 : vector<8x1xf32>
    %cst_33 = arith.constant 5.000000e-01 : f32
    %70 = vector.broadcast %cst_33 : f32 to vector<8x1xf32>
    %71 = arith.subf %69, %70 : vector<8x1xf32>
    %72 = vector.broadcast %52 : vector<8x1xf32> to vector<8x512xf32>
    %73 = arith.mulf %72, %9 : vector<8x512xf32>
    %cst_34 = arith.constant dense<0.000000e+00> : vector<512xf32>
    %74 = vector.multi_reduction <add>, %73, %cst_34 [0] : vector<8x512xf32> to vector<512xf32>
    %75 = vector.shape_cast %74 : vector<512xf32> to vector<1x512xf32>
    %76 = vector.shape_cast %52 : vector<8x1xf32> to vector<1x8x1xf32>
    %cst_35 = arith.constant dense<0.000000e+00> : vector<1xf32>
    %77 = vector.multi_reduction <add>, %76, %cst_35 [1, 2] : vector<1x8x1xf32> to vector<1xf32>
    %78 = vector.shape_cast %77 : vector<1xf32> to vector<1x1x1xf32>
    %79 = vector.extract %78[0, 0, 0] : f32 from vector<1x1x1xf32>
    %80 = vector.broadcast %79 : f32 to vector<1x512xf32>
    %81 = arith.divf %75, %80 : vector<1x512xf32>
    %c0_36 = arith.constant 0 : index
    %c0_37 = arith.constant 0 : index
    %82 = vector.load %arg9[%c0_36, %c0_37] : memref<2x512xf32, #tpu.memory_space<vmem>>, vector<1x512xf32>
    %83 = arith.mulf %81, %82 : vector<1x512xf32>
    %cst_38 = arith.constant dense<0.000000e+00> : vector<1xf32>
    %84 = vector.multi_reduction <add>, %83, %cst_38 [1] : vector<1x512xf32> to vector<1xf32>
    %85 = vector.shape_cast %84 : vector<1xf32> to vector<1x1xf32>
    %c0_39 = arith.constant 0 : index
    %c0_40 = arith.constant 0 : index
    %86 = vector.load %arg10[%c0_39, %c0_40] : memref<1x2xf32, #tpu.memory_space<vmem>>, vector<1x1xf32>
    %87 = arith.addf %85, %86 : vector<1x1xf32>
    %c1_41 = arith.constant 1 : index
    %c0_42 = arith.constant 0 : index
    %88 = vector.load %arg9[%c1_41, %c0_42] : memref<2x512xf32, #tpu.memory_space<vmem>>, vector<1x512xf32>
    %89 = arith.mulf %81, %88 : vector<1x512xf32>
    %cst_43 = arith.constant dense<0.000000e+00> : vector<1xf32>
    %90 = vector.multi_reduction <add>, %89, %cst_43 [1] : vector<1x512xf32> to vector<1xf32>
    %91 = vector.shape_cast %90 : vector<1xf32> to vector<1x1xf32>
    %c0_44 = arith.constant 0 : index
    %c1_45 = arith.constant 1 : index
    %92 = vector.load %arg10[%c0_44, %c1_45] : memref<1x2xf32, #tpu.memory_space<vmem>>, vector<1x1xf32>
    %93 = arith.addf %91, %92 : vector<1x1xf32>
    %94 = tpu.iota {dimensions = array<i32: 1>} : vector<8x128xi32>
    %c0_i32 = arith.constant 0 : i32
    %95 = vector.broadcast %c0_i32 : i32 to vector<8x128xi32>
    %96 = arith.cmpi eq, %94, %95 : vector<8x128xi32>
    %cst_46 = arith.constant 0.000000e+00 : f32
    %97 = vector.shape_cast %52 : vector<8x1xf32> to vector<8x1xf32>
    %98 = vector.broadcast %97 : vector<8x1xf32> to vector<8x128xf32>
    %99 = vector.broadcast %cst_46 : f32 to vector<8x128xf32>
    %100 = arith.select %96, %98, %99 : vector<8x128xi1>, vector<8x128xf32>
    %c1_i32 = arith.constant 1 : i32
    %101 = vector.broadcast %c1_i32 : i32 to vector<8x128xi32>
    %102 = arith.cmpi eq, %94, %101 : vector<8x128xi32>
    %103 = vector.shape_cast %71 : vector<8x1xf32> to vector<8x1xf32>
    %104 = vector.broadcast %103 : vector<8x1xf32> to vector<8x128xf32>
    %105 = arith.select %102, %104, %100 : vector<8x128xi1>, vector<8x128xf32>
    %c2_i32 = arith.constant 2 : i32
    %106 = vector.broadcast %c2_i32 : i32 to vector<8x128xi32>
    %107 = arith.cmpi eq, %94, %106 : vector<8x128xi32>
    %108 = vector.shape_cast %87 : vector<1x1xf32> to vector<1x1xf32>
    %109 = vector.broadcast %108 : vector<1x1xf32> to vector<8x128xf32>
    %110 = arith.select %107, %109, %105 : vector<8x128xi1>, vector<8x128xf32>
    %c3_i32 = arith.constant 3 : i32
    %111 = vector.broadcast %c3_i32 : i32 to vector<8x128xi32>
    %112 = arith.cmpi eq, %94, %111 : vector<8x128xi32>
    %113 = vector.shape_cast %93 : vector<1x1xf32> to vector<1x1xf32>
    %114 = vector.broadcast %113 : vector<1x1xf32> to vector<8x128xf32>
    %115 = arith.select %112, %114, %110 : vector<8x128xi1>, vector<8x128xf32>
    %c0_47 = arith.constant 0 : index
    %c0_48 = arith.constant 0 : index
    %c0_49 = arith.constant 0 : index
    %116 = vector.load %arg12[%c0_47, %c0_48, %c0_49] : memref<1x8x128xf32, #tpu.memory_space<vmem>>, vector<1x8x128xf32>
    %117 = vector.shape_cast %116 : vector<1x8x128xf32> to vector<8x128xf32>
    %118 = vector.shape_cast %115 : vector<8x128xf32> to vector<1x8x128xf32>
    tpu.vector_store %arg12[%c0_47, %c0_48, %c0_49], %118 {strides = array<i32>} : memref<1x8x128xf32, #tpu.memory_space<vmem>>, vector<1x8x128xf32>,
    return
  }
  func.func @transform_0(%arg0: i32) -> (i32, i32, i32) {
    %c0_i32 = arith.constant 0 : i32
    %c0_i32_0 = arith.constant 0 : i32
    %c0_i32_1 = arith.constant 0 : i32
    return %arg0, %c0_i32, %c0_i32_0 : i32, i32, i32
  }
  func.func @transform_1(%arg0: i32) -> (i32, i32, i32) {
    %c0_i32 = arith.constant 0 : i32
    %c0_i32_0 = arith.constant 0 : i32
    %c0_i32_1 = arith.constant 0 : i32
    return %arg0, %c0_i32, %c0_i32_0 : i32, i32, i32
  }
  func.func @transform_2(%arg0: i32) -> (i32, i32) {
    %c0_i32 = arith.constant 0 : i32
    %c0_i32_0 = arith.constant 0 : i32
    %c0_i32_1 = arith.constant 0 : i32
    return %c0_i32, %c0_i32_0 : i32, i32
  }
  func.func @transform_3(%arg0: i32) -> (i32, i32) {
    %c0_i32 = arith.constant 0 : i32
    %c0_i32_0 = arith.constant 0 : i32
    %c0_i32_1 = arith.constant 0 : i32
    return %c0_i32, %c0_i32_0 : i32, i32
  }
  func.func @transform_4(%arg0: i32) -> (i32, i32) {
    %c0_i32 = arith.constant 0 : i32
    %c0_i32_0 = arith.constant 0 : i32
    %c0_i32_1 = arith.constant 0 : i32
    return %c0_i32, %c0_i32_0 : i32, i32
  }
  func.func @transform_5(%arg0: i32) -> (i32, i32) {
    %c0_i32 = arith.constant 0 : i32
    %c0_i32_0 = arith.constant 0 : i32
    %c0_i32_1 = arith.constant 0 : i32
    return %c0_i32, %c0_i32_0 : i32, i32
  }
  func.func @transform_6(%arg0: i32) -> (i32, i32) {
    %c0_i32 = arith.constant 0 : i32
    %c0_i32_0 = arith.constant 0 : i32
    %c0_i32_1 = arith.constant 0 : i32
    return %c0_i32, %c0_i32_0 : i32, i32
  }
  func.func @transform_7(%arg0: i32) -> (i32, i32) {
    %c0_i32 = arith.constant 0 : i32
    %c0_i32_0 = arith.constant 0 : i32
    %c0_i32_1 = arith.constant 0 : i32
    return %c0_i32, %c0_i32_0 : i32, i32
  }
  func.func @transform_8(%arg0: i32) -> (i32, i32) {
    %c0_i32 = arith.constant 0 : i32
    %c0_i32_0 = arith.constant 0 : i32
    %c0_i32_1 = arith.constant 0 : i32
    return %c0_i32, %c0_i32_0 : i32, i32
  }
  func.func @transform_9(%arg0: i32) -> (i32, i32) {
    %c0_i32 = arith.constant 0 : i32
    %c0_i32_0 = arith.constant 0 : i32
    %c0_i32_1 = arith.constant 0 : i32
    return %c0_i32, %c0_i32_0 : i32, i32
  }
  func.func @transform_10(%arg0: i32) -> (i32, i32) {
    %c0_i32 = arith.constant 0 : i32
    %c0_i32_0 = arith.constant 0 : i32
    %c0_i32_1 = arith.constant 0 : i32
    return %c0_i32, %c0_i32_0 : i32, i32
  }
  func.func @transform_11(%arg0: i32) -> (i32, i32, i32) {
    %c0_i32 = arith.constant 0 : i32
    %c0_i32_0 = arith.constant 0 : i32
    %c0_i32_1 = arith.constant 0 : i32
    return %arg0, %c0_i32, %c0_i32_0 : i32, i32, i32
  }
}

</mosaic_0001>

<llo_original>
// kernel: bmil_forward.1
$region0: #{bmil_forward.1}
  #allocation0 [shape = 'u32[]', space=smem, size = 0x4, offset = 0x4, fixed_abs, tag = 'smem constant byte address 0x4 - core index']
  #allocation1 [shape = 'u32[144,128]{1,0:T(1,128)}', space=vmem, size = 0x12000, scoped, tag = 'internal scratch']
  %s0 = inlined_call_operand.hbm [shape: f32[4,8,1024], index: 0, kind: input, shape index: {}]
  %s1 = inlined_call_operand.vmem [shape: f32[4,8,1], index: 1, kind: input, shape index: {}]
  %s2 = inlined_call_operand.hbm [shape: bf16[1024,512], index: 2, kind: input, shape index: {}]
  %s3 = inlined_call_operand.vmem [shape: f32[1,512], index: 3, kind: input, shape index: {}]
  %s4 = inlined_call_operand.hbm [shape: bf16[512,512], index: 4, kind: input, shape index: {}]
  %s5 = inlined_call_operand.vmem [shape: f32[1,512], index: 5, kind: input, shape index: {}]
  %s6 = inlined_call_operand.vmem [shape: f32[2,256], index: 6, kind: input, shape index: {}]
  %s7 = inlined_call_operand.vmem [shape: f32[1,2], index: 7, kind: input, shape index: {}]
  %s8 = inlined_call_operand.vmem [shape: f32[2,512], index: 8, kind: input, shape index: {}]
  %s9 = inlined_call_operand.vmem [shape: f32[1,2], index: 9, kind: input, shape index: {}]
  %s10 = inlined_call_operand.vmem [shape: f32[1,2], index: 10, kind: input, shape index: {}]
  %s11 = inlined_call_operand.vmem [shape: f32[4,8,128], index: 11, kind: output, shape index: {}]
  %s12 = sld [smem:[#allocation0]]
  $region89: #{bmil_forward.1} parent=0
    _
  %s14 = ssub.s32 1, %s12
  %s15 = scalar_select 0, %s14, %s12
  $region1: #{bmil_forward.1} parent=0
    #allocation2 [shape = 'u8[65536]{0}', space=vmem, size = 0x10000, scoped, tag = 'input window, operand 0']
    #allocation3 [shape = 's32[2]{0}', space=sflag, size = 0x8, scoped, tag = 'scoped memory for bmil_forward.1']
    #allocation4 [shape = 'u8[1048576]{0}', space=vmem, size = 0x100000, scoped, tag = 'input window, operand 2, single buffered']
    #allocation5 [shape = 's32[1]{0}', space=sflag, size = 0x4, scoped, tag = 'scoped memory for bmil_forward.1']
    #allocation6 [shape = 'u8[524288]{0}', space=vmem, size = 0x80000, scoped, tag = 'input window, operand 4, single buffered']
    %16 = vsyncpa [#allocation3], 0
    %s17 = scalar_lea.sflag [#allocation3], 1
    %18 = vsyncpa %s17, 0
    %19 = vsyncpa [#allocation5], 0
    loop: start=0, step=1, limit=6
    $region2: #{bmil_forward.1} parent=1 // loop_pre_header
      _
    $region3: #{bmil_forward.1} parent=1 // loop_header
      %s21 = sphi 0, %s25
      %p22 = scmp.ge.s32.totalorder %s21, 6
      %s31 = sphi 0, %s33
      %s34 = sphi 0, %s31
      %s35 = sphi 0, %s34
      %s51 = sphi 0, %s35
      %s57 = sphi 0, %s59
      %s60 = sphi 0, %s57
      %s61 = sphi 0, %s60
      %s77 = sphi 0, %s61
      %s81 = sphi 0, %s81
      %s83 = sphi 0, %s81
      %s84 = sphi 0, %s83
      %s98 = sphi 0, %s84
      %s102 = sphi 0, %s102
      %s104 = sphi 0, %s102
      %s105 = sphi 0, %s104
      %s119 = sphi 0, %s105
      %s123 = sphi 0, %s123
      %s125 = sphi 0, %s123
      %s126 = sphi 0, %s125
      %s140 = sphi 0, %s126
      %s144 = sphi 0, %s144
      %s146 = sphi 0, %s144
      %s147 = sphi 0, %s146
      %s161 = sphi 0, %s147
      %s165 = sphi 0, %s165
      %s167 = sphi 0, %s165
      %s168 = sphi 0, %s167
      %s182 = sphi 0, %s168
      %s186 = sphi 0, %s186
      %s188 = sphi 0, %s186
      %s189 = sphi 0, %s188
      %s203 = sphi 0, %s189
      %s207 = sphi 0, %s207
      %s209 = sphi 0, %s207
      %s210 = sphi 0, %s209
      %s224 = sphi 0, %s210
      %s228 = sphi 0, %s228
      %s230 = sphi 0, %s228
      %s231 = sphi 0, %s230
      %s245 = sphi 0, %s231
      %s249 = sphi 0, %s249
      %s251 = sphi 0, %s249
      %s252 = sphi 0, %s251
      %s266 = sphi 0, %s252
      %s272 = sphi 0, %s274
      %s275 = sphi 0, %s272
      %s276 = sphi 0, %s275
      %s292 = sphi 0, %s276
    $region4: #{bmil_forward.1} parent=1 // loop_header_branch
      %24 = sbr.rel (%p22) target = $region8
    $region5: #{bmil_forward.1} parent=1 // loop_body
      %s26 = ssub.s32 %s21, 1
      %s27 = ssub.s32 %s21, 2
      %s28 = sadd.s32 %s21, 1
      %s29 = ssub.s32 %s21, %s28
      %p30 = scmp.eq.s32.totalorder %s29, 0
      %s32 = sadd.s32 %s31, 1
      %s33 = scalar_select %p30, %s31, %s32
      %p36 = pneg %p30
      %p37 = scmp.eq.s32.totalorder %s21, 3
      %p38 = por %p36, %p37
      %p39 = scmp.ne.s32.totalorder %s31, %s34
      %p40 = scmp.eq.s32.totalorder %s21, 0
      %p41 = por %p39, %p40
      %p42 = scmp.ne.s32.totalorder %s31, %s34
      %p43 = scmp.eq.s32.totalorder %s26, 3
      %p44 = por %p42, %p43
      %p45 = scmp.ne.s32.totalorder %s34, %s35
      %p46 = scmp.eq.s32.totalorder %s26, 0
      %p47 = por %p45, %p46
      %p48 = scmp.ne.s32.totalorder %s34, %s35
      %p49 = scmp.eq.s32.totalorder %s27, 3
      %p50 = por %p48, %p49
      %p52 = scmp.ne.s32.totalorder %s35, %s51
      %p53 = scmp.eq.s32.totalorder %s27, 0
      %p54 = por %p52, %p53
      %s55 = ssub.s32 %s21, %s28
      %p56 = scmp.eq.s32.totalorder %s55, 0
      %s58 = sadd.s32 %s57, 1
      %s59 = scalar_select %p56, %s57, %s58
      %p62 = pneg %p56
      %p63 = scmp.eq.s32.totalorder %s21, 3
      %p64 = por %p62, %p63
      %p65 = scmp.ne.s32.totalorder %s57, %s60
      %p66 = scmp.eq.s32.totalorder %s21, 0
      %p67 = por %p65, %p66
      %p68 = scmp.ne.s32.totalorder %s57, %s60
      %p69 = scmp.eq.s32.totalorder %s26, 3
      %p70 = por %p68, %p69
      %p71 = scmp.ne.s32.totalorder %s60, %s61
      %p72 = scmp.eq.s32.totalorder %s26, 0
      %p73 = por %p71, %p72
      %p74 = scmp.ne.s32.totalorder %s60, %s61
      %p75 = scmp.eq.s32.totalorder %s27, 3
      %p76 = por %p74, %p75
      %p78 = scmp.ne.s32.totalorder %s61, %s77
      %p79 = scmp.eq.s32.totalorder %s27, 0
      %p80 = por %p78, %p79
      %s82 = sadd.s32 %s81, 1
      %p85 = scmp.eq.s32.totalorder %s21, 3
      %p86 = scmp.ne.s32.totalorder %s81, %s83
      %p87 = scmp.eq.s32.totalorder %s21, 0
      %p88 = por %p86, %p87
      %p89 = scmp.ne.s32.totalorder %s81, %s83
      %p90 = scmp.eq.s32.totalorder %s26, 3
      %p91 = por %p89, %p90
      %p92 = scmp.ne.s32.totalorder %s83, %s84
      %p93 = scmp.eq.s32.totalorder %s26, 0
      %p94 = por %p92, %p93
      %p95 = scmp.ne.s32.totalorder %s83, %s84
      %p96 = scmp.eq.s32.totalorder %s27, 3
      %p97 = por %p95, %p96
      %p99 = scmp.ne.s32.totalorder %s84, %s98
      %p100 = scmp.eq.s32.totalorder %s27, 0
      %p101 = por %p99, %p100
      %s103 = sadd.s32 %s102, 1
      %p106 = scmp.eq.s32.totalorder %s21, 3
      %p107 = scmp.ne.s32.totalorder %s102, %s104
      %p108 = scmp.eq.s32.totalorder %s21, 0
      %p109 = por %p107, %p108
      %p110 = scmp.ne.s32.totalorder %s102, %s104
      %p111 = scmp.eq.s32.totalorder %s26, 3
      %p112 = por %p110, %p111
      %p113 = scmp.ne.s32.totalorder %s104, %s105
      %p114 = scmp.eq.s32.totalorder %s26, 0
      %p115 = por %p113, %p114
      %p116 = scmp.ne.s32.totalorder %s104, %s105
      %p117 = scmp.eq.s32.totalorder %s27, 3
      %p118 = por %p116, %p117
      %p120 = scmp.ne.s32.totalorder %s105, %s119
      %p121 = scmp.eq.s32.totalorder %s27, 0
      %p122 = por %p120, %p121
      %s124 = sadd.s32 %s123, 1
      %p127 = scmp.eq.s32.totalorder %s21, 3
      %p128 = scmp.ne.s32.totalorder %s123, %s125
      %p129 = scmp.eq.s32.totalorder %s21, 0
      %p130 = por %p128, %p129
      %p131 = scmp.ne.s32.totalorder %s123, %s125
      %p132 = scmp.eq.s32.totalorder %s26, 3
      %p133 = por %p131, %p132
      %p134 = scmp.ne.s32.totalorder %s125, %s126
      %p135 = scmp.eq.s32.totalorder %s26, 0
      %p136 = por %p134, %p135
      %p137 = scmp.ne.s32.totalorder %s125, %s126
      %p138 = scmp.eq.s32.totalorder %s27, 3
      %p139 = por %p137, %p138
      %p141 = scmp.ne.s32.totalorder %s126, %s140
      %p142 = scmp.eq.s32.totalorder %s27, 0
      %p143 = por %p141, %p142
      %s145 = sadd.s32 %s144, 1
      %p148 = scmp.eq.s32.totalorder %s21, 3
      %p149 = scmp.ne.s32.totalorder %s144, %s146
      %p150 = scmp.eq.s32.totalorder %s21, 0
      %p151 = por %p149, %p150
      %p152 = scmp.ne.s32.totalorder %s144, %s146
      %p153 = scmp.eq.s32.totalorder %s26, 3
      %p154 = por %p152, %p153
      %p155 = scmp.ne.s32.totalorder %s146, %s147
      %p156 = scmp.eq.s32.totalorder %s26, 0
      %p157 = por %p155, %p156
      %p158 = scmp.ne.s32.totalorder %s146, %s147
      %p159 = scmp.eq.s32.totalorder %s27, 3
      %p160 = por %p158, %p159
      %p162 = scmp.ne.s32.totalorder %s147, %s161
      %p163 = scmp.eq.s32.totalorder %s27, 0
      %p164 = por %p162, %p163
      %s166 = sadd.s32 %s165, 1
      %p169 = scmp.eq.s32.totalorder %s21, 3
      %p170 = scmp.ne.s32.totalorder %s165, %s167
      %p171 = scmp.eq.s32.totalorder %s21, 0
      %p172 = por %p170, %p171
      %p173 = scmp.ne.s32.totalorder %s165, %s167
      %p174 = scmp.eq.s32.totalorder %s26, 3
      %p175 = por %p173, %p174
      %p176 = scmp.ne.s32.totalorder %s167, %s168
      %p177 = scmp.eq.s32.totalorder %s26, 0
      %p178 = por %p176, %p177
      %p179 = scmp.ne.s32.totalorder %s167, %s168
      %p180 = scmp.eq.s32.totalorder %s27, 3
      %p181 = por %p179, %p180
      %p183 = scmp.ne.s32.totalorder %s168, %s182
      %p184 = scmp.eq.s32.totalorder %s27, 0
      %p185 = por %p183, %p184
      %s187 = sadd.s32 %s186, 1
      %p190 = scmp.eq.s32.totalorder %s21, 3
      %p191 = scmp.ne.s32.totalorder %s186, %s188
      %p192 = scmp.eq.s32.totalorder %s21, 0
      %p193 = por %p191, %p192
      %p194 = scmp.ne.s32.totalorder %s186, %s188
      %p195 = scmp.eq.s32.totalorder %s26, 3
      %p196 = por %p194, %p195
      %p197 = scmp.ne.s32.totalorder %s188, %s189
      %p198 = scmp.eq.s32.totalorder %s26, 0
      %p199 = por %p197, %p198
      %p200 = scmp.ne.s32.totalorder %s188, %s189
      %p201 = scmp.eq.s32.totalorder %s27, 3
      %p202 = por %p200, %p201
      %p204 = scmp.ne.s32.totalorder %s189, %s203
      %p205 = scmp.eq.s32.totalorder %s27, 0
      %p206 = por %p204, %p205
      %s208 = sadd.s32 %s207, 1
      %p211 = scmp.eq.s32.totalorder %s21, 3
      %p212 = scmp.ne.s32.totalorder %s207, %s209
      %p213 = scmp.eq.s32.totalorder %s21, 0
      %p214 = por %p212, %p213
      %p215 = scmp.ne.s32.totalorder %s207, %s209
      %p216 = scmp.eq.s32.totalorder %s26, 3
      %p217 = por %p215, %p216
      %p218 = scmp.ne.s32.totalorder %s209, %s210
      %p219 = scmp.eq.s32.totalorder %s26, 0
      %p220 = por %p218, %p219
      %p221 = scmp.ne.s32.totalorder %s209, %s210
      %p222 = scmp.eq.s32.totalorder %s27, 3
      %p223 = por %p221, %p222
      %p225 = scmp.ne.s32.totalorder %s210, %s224
      %p226 = scmp.eq.s32.totalorder %s27, 0
      %p227 = por %p225, %p226
      %s229 = sadd.s32 %s228, 1
      %p232 = scmp.eq.s32.totalorder %s21, 3
      %p233 = scmp.ne.s32.totalorder %s228, %s230
      %p234 = scmp.eq.s32.totalorder %s21, 0
      %p235 = por %p233, %p234
      %p236 = scmp.ne.s32.totalorder %s228, %s230
      %p237 = scmp.eq.s32.totalorder %s26, 3
      %p238 = por %p236, %p237
      %p239 = scmp.ne.s32.totalorder %s230, %s231
      %p240 = scmp.eq.s32.totalorder %s26, 0
      %p241 = por %p239, %p240
      %p242 = scmp.ne.s32.totalorder %s230, %s231
      %p243 = scmp.eq.s32.totalorder %s27, 3
      %p244 = por %p242, %p243
      %p246 = scmp.ne.s32.totalorder %s231, %s245
      %p247 = scmp.eq.s32.totalorder %s27, 0
      %p248 = por %p246, %p247
      %s250 = sadd.s32 %s249, 1
      %p253 = scmp.eq.s32.totalorder %s21, 3
      %p254 = scmp.ne.s32.totalorder %s249, %s251
      %p255 = scmp.eq.s32.totalorder %s21, 0
      %p256 = por %p254, %p255
      %p257 = scmp.ne.s32.totalorder %s249, %s251
      %p258 = scmp.eq.s32.totalorder %s26, 3
      %p259 = por %p257, %p258
      %p260 = scmp.ne.s32.totalorder %s251, %s252
      %p261 = scmp.eq.s32.totalorder %s26, 0
      %p262 = por %p260, %p261
      %p263 = scmp.ne.s32.totalorder %s251, %s252
      %p264 = scmp.eq.s32.totalorder %s27, 3
      %p265 = por %p263, %p264
      %p267 = scmp.ne.s32.totalorder %s252, %s266
      %p268 = scmp.eq.s32.totalorder %s27, 0
      %p269 = por %p267, %p268
      %s270 = ssub.s32 %s21, %s28
      %p271 = scmp.eq.s32.totalorder %s270, 0
      %s273 = sadd.s32 %s272, 1
      %s274 = scalar_select %p271, %s272, %s273
      %p277 = pneg %p271
      %p278 = scmp.eq.s32.totalorder %s21, 3
      %p279 = por %p277, %p278
      %p280 = scmp.ne.s32.totalorder %s272, %s275
      %p281 = scmp.eq.s32.totalorder %s21, 0
      %p282 = por %p280, %p281
      %p283 = scmp.ne.s32.totalorder %s272, %s275
      %p284 = scmp.eq.s32.totalorder %s26, 3
      %p285 = por %p283, %p284
      %p286 = scmp.ne.s32.totalorder %s275, %s276
      %p287 = scmp.eq.s32.totalorder %s26, 0
      %p288 = por %p286, %p287
      %p289 = scmp.ne.s32.totalorder %s275, %s276
      %p290 = scmp.eq.s32.totalorder %s27, 3
      %p291 = por %p289, %p290
      %p293 = scmp.ne.s32.totalorder %s276, %s292
      %p294 = scmp.eq.s32.totalorder %s27, 0
      %p295 = por %p293, %p294
      %p296 = scmp.le.s32.totalorder 1, %s21
      %p297 = scmp.lt.s32.totalorder %s21, 5
      %p298 = pnand %p296, %p297
      %p299 = pneg %p298
      // Predicated region
      $region9: #{bmil_forward.1} parent=5 // pred_check
        _
      $region10: #{bmil_forward.1} parent=5 // pred_check_branch
        %301 = sbr.rel (%p298) target = $region12
      $region11: #{bmil_forward.1} parent=5 // pred_region
        %s302 = ssub.s32 %s21, 1
        // Predicated region
        $region13: #{bmil_forward.1} parent=11 // pred_check
          %p303 = pneg %p94
        $region14: #{bmil_forward.1} parent=11 // pred_check_branch
          %305 = sbr.rel (%p303) target = $region16
        $region15: #{bmil_forward.1} parent=11 // pred_region
          %s307 = ssub.s32 32768, 32768
          %308 = vsyncadd [#allocation5], %s307
          %s309 = sshll.u32 [#allocation4], 4
          %s310 = int_to_ptr.vmem [resolvable:$true] %s309
          %315 = dma.hbm_to_vmem [thread:$0]  %s2, 32768, %s310, [#allocation5], 256, 256, 16
        $region16: #{bmil_forward.1} parent=11 // pred_fallthru
          _
        // Predicated region
        $region17: #{bmil_forward.1} parent=11 // pred_check
          %p316 = pneg %p115
        $region18: #{bmil_forward.1} parent=11 // pred_check_branch
          %318 = sbr.rel (%p316) target = $region20
        $region19: #{bmil_forward.1} parent=11 // pred_region
          _
        $region20: #{bmil_forward.1} parent=11 // pred_fallthru
          _
        // Predicated region
        $region21: #{bmil_forward.1} parent=11 // pred_check
          %p319 = pneg %p136
        $region22: #{bmil_forward.1} parent=11 // pred_check_branch
          %321 = sbr.rel (%p319) target = $region24
        $region23: #{bmil_forward.1} parent=11 // pred_region
          %s323 = ssub.s32 16384, 16384
          %324 = vsyncadd [#allocation5], %s323
          %s325 = sshll.u32 [#allocation6], 4
          %s326 = int_to_ptr.vmem [resolvable:$true] %s325
          %331 = dma.hbm_to_vmem [thread:$0]  %s4, 16384, %s326, [#allocation5], 256, 256, 16
        $region24: #{bmil_forward.1} parent=11 // pred_fallthru
          _
        // Predicated region
        $region25: #{bmil_forward.1} parent=11 // pred_check
          %p332 = pneg %p157
        $region26: #{bmil_forward.1} parent=11 // pred_check_branch
          %334 = sbr.rel (%p332) target = $region28
        $region27: #{bmil_forward.1} parent=11 // pred_region
          _
        $region28: #{bmil_forward.1} parent=11 // pred_fallthru
          _
        // Predicated region
        $region29: #{bmil_forward.1} parent=11 // pred_check
          %p335 = pneg %p178
        $region30: #{bmil_forward.1} parent=11 // pred_check_branch
          %337 = sbr.rel (%p335) target = $region32
        $region31: #{bmil_forward.1} parent=11 // pred_region
          _
        $region32: #{bmil_forward.1} parent=11 // pred_fallthru
          _
        // Predicated region
        $region33: #{bmil_forward.1} parent=11 // pred_check
          %p338 = pneg %p199
        $region34: #{bmil_forward.1} parent=11 // pred_check_branch
          %340 = sbr.rel (%p338) target = $region36
        $region35: #{bmil_forward.1} parent=11 // pred_region
          _
        $region36: #{bmil_forward.1} parent=11 // pred_fallthru
          _
        // Predicated region
        $region37: #{bmil_forward.1} parent=11 // pred_check
          %p341 = pneg %p220
        $region38: #{bmil_forward.1} parent=11 // pred_check_branch
          %343 = sbr.rel (%p341) target = $region40
        $region39: #{bmil_forward.1} parent=11 // pred_region
          _
        $region40: #{bmil_forward.1} parent=11 // pred_fallthru
          _
        // Predicated region
        $region41: #{bmil_forward.1} parent=11 // pred_check
          %p344 = pneg %p241
        $region42: #{bmil_forward.1} parent=11 // pred_check_branch
          %346 = sbr.rel (%p344) target = $region44
        $region43: #{bmil_forward.1} parent=11 // pred_region
          _
        $region44: #{bmil_forward.1} parent=11 // pred_fallthru
          _
        // Predicated region
        $region45: #{bmil_forward.1} parent=11 // pred_check
          %p347 = pneg %p262
        $region46: #{bmil_forward.1} parent=11 // pred_check_branch
          %349 = sbr.rel (%p347) target = $region48
        $region47: #{bmil_forward.1} parent=11 // pred_region
          _
        $region48: #{bmil_forward.1} parent=11 // pred_fallthru
          _
      $region12: #{bmil_forward.1} parent=5 // pred_fallthru
        _
      %p350 = scmp.lt.s32.totalorder %s21, 4
      // Predicated region
      $region49: #{bmil_forward.1} parent=5 // pred_check
        %p351 = pneg %p350
      $region50: #{bmil_forward.1} parent=5 // pred_check_branch
        %353 = sbr.rel (%p351) target = $region52
      $region51: #{bmil_forward.1} parent=5 // pred_region
        // Predicated region
        $region53: #{bmil_forward.1} parent=51 // pred_check
          %p354 = pneg %p41
        $region54: #{bmil_forward.1} parent=51 // pred_check_branch
          %356 = sbr.rel (%p354) target = $region56
        $region55: #{bmil_forward.1} parent=51 // pred_region
          %s357 = sand.u32 %s31, 1
          %s358 = scalar_lea.sflag [#allocation3], %s357
          %s359 = sand.u32 %s31, 1
          %s360 = smul.addr %s359, 64
          %s361 = scalar_lea.vmem [#allocation2], %s360
          %s363 = ssub.s32 1024, 1024
          %364 = vsyncadd %s358, %s363
          %s365 = smul.addr %s21, 8
          %s366 = smul.addr %s365, 128
          %s367 = scalar_lea.hbm %s0, %s366
          %s369 = sshll.u32 %s361, 4
          %s370 = int_to_ptr.vmem [resolvable:$true] %s369
          %372 = dma.hbm_to_vmem [thread:$0]  %s367, 1024, %s370, %s358
        $region56: #{bmil_forward.1} parent=51 // pred_fallthru
          _
        // Predicated region
        $region57: #{bmil_forward.1} parent=51 // pred_check
          %p373 = pneg %p67
        $region58: #{bmil_forward.1} parent=51 // pred_check_branch
          %375 = sbr.rel (%p373) target = $region60
        $region59: #{bmil_forward.1} parent=51 // pred_region
          %p376 = scmp.lt.s32.totalorder %s21, 3
          %s377 = scalar_select %p376, %s21, 3
          %s378 = smul.addr %s377, 8
          %s379 = scalar_lea.vmem %s1, %s378
        $region60: #{bmil_forward.1} parent=51 // pred_fallthru
          _
      $region52: #{bmil_forward.1} parent=5 // pred_fallthru
        _
      %p380 = scmp.le.s32.totalorder 1, %s21
      %p381 = scmp.lt.s32.totalorder %s21, 5
      %p382 = pnand %p380, %p381
      %p383 = pneg %p382
      // Predicated region
      $region61: #{bmil_forward.1} parent=5 // pred_check
        _
      $region62: #{bmil_forward.1} parent=5 // pred_check_branch
        %385 = sbr.rel (%p382) target = $region64
      $region63: #{bmil_forward.1} parent=5 // pred_region
        %s386 = ssub.s32 %s21, 1
        %s387 = sand.u32 %s34, 1
        %s388 = scalar_lea.sflag [#allocation3], %s387
        %s389 = sand.u32 %s34, 1
        %s390 = smul.addr %s389, 64
        %s391 = scalar_lea.vmem [#allocation2], %s390
        // Predicated region
        $region65: #{bmil_forward.1} parent=63 // pred_check
          %p392 = pneg %p47
        $region66: #{bmil_forward.1} parent=63 // pred_check_branch
          %394 = sbr.rel (%p392) target = $region68
        $region67: #{bmil_forward.1} parent=63 // pred_region
          %395 = dma.done %s388, 1024
        $region68: #{bmil_forward.1} parent=63 // pred_fallthru
          _
        // Predicated region
        $region69: #{bmil_forward.1} parent=63 // pred_check
          %p396 = pneg %p94
        $region70: #{bmil_forward.1} parent=63 // pred_check_branch
          %398 = sbr.rel (%p396) target = $region72
        $region71: #{bmil_forward.1} parent=63 // pred_region
          %399 = dma.done [#allocation5], 32768
        $region72: #{bmil_forward.1} parent=63 // pred_fallthru
          _
        // Predicated region
        $region73: #{bmil_forward.1} parent=63 // pred_check
          %p400 = pneg %p136
        $region74: #{bmil_forward.1} parent=63 // pred_check_branch
          %402 = sbr.rel (%p400) target = $region76
        $region75: #{bmil_forward.1} parent=63 // pred_region
          %403 = dma.done [#allocation5], 16384
        $region76: #{bmil_forward.1} parent=63 // pred_fallthru
          _
        %s404 = sand.u32 %s34, 1
        %s405 = scalar_lea.sflag [#allocation3], %s404
        %s406 = sand.u32 %s34, 1
        %s407 = smul.addr %s406, 64
        %s408 = scalar_lea.vmem [#allocation2], %s407
        %p409 = pneg %p47
        %p410 = pneg %p44
        %p411 = scmp.lt.s32.totalorder %s26, 3
        %s412 = scalar_select %p411, %s26, 3
        %s413 = smul.addr %s412, 8
        %s414 = scalar_lea.vmem %s1, %s413
        %p415 = pneg %p73
        %p416 = pneg %p70
        %p417 = pneg %p94
        %p418 = pneg %p91
        %p419 = pneg %p115
        %p420 = pneg %p112
        %p421 = pneg %p136
        %p422 = pneg %p133
        %p423 = pneg %p157
        %p424 = pneg %p154
        %p425 = pneg %p178
        %p426 = pneg %p175
        %p427 = pneg %p199
        %p428 = pneg %p196
        %p429 = pneg %p220
        %p430 = pneg %p217
        %p431 = pneg %p241
        %p432 = pneg %p238
        %p433 = pneg %p262
        %p434 = pneg %p259
        %p435 = pneg %p288
        %p436 = pneg %p285
        %p437 = scmp.lt.s32.totalorder %s26, 3
        %s438 = scalar_select %p437, %s26, 3
        %s439 = smul.addr %s438, 8
        %s440 = scalar_lea.vmem %s11, %s439
        %p441 = scmp.lt.s32.totalorder %s26, 3
        %s442 = scalar_select %p441, %s26, 3
        %s443 = smul.addr %s442, 8
        %s444 = scalar_lea.vmem %s1, %s443
        %p445 = scmp.lt.s32.totalorder %s26, 3
        %s446 = scalar_select %p445, %s26, 3
        %s447 = smul.addr %s446, 8
        %s448 = scalar_lea.vmem %s11, %s447
        %v449 = vld [vmem:[%s391] sm:$0xff]
        %v450 = vld [vmem:[%s391 + $0x8] sm:$0xff]
        %v451 = vld [vmem:[%s391 + $0x10] sm:$0xff]
        %v452 = vld [vmem:[%s391 + $0x18] sm:$0xff]
        %v453 = vld [vmem:[%s391 + $0x20] sm:$0xff]
        %v454 = vld [vmem:[%s391 + $0x28] sm:$0xff]
        %v455 = vld [vmem:[%s391 + $0x30] sm:$0xff]
        %v456 = vld [vmem:[%s391 + $0x38] sm:$0xff]
        %v457 = vpack.c.bf16 %v449, %v449
        %v458 = vpack.c.bf16 %v450, %v450
        %v459 = vpack.c.bf16 %v451, %v451
        %v460 = vpack.c.bf16 %v452, %v452
        %v461 = vpack.c.bf16 %v453, %v453
        %v462 = vpack.c.bf16 %v454, %v454
        %v463 = vpack.c.bf16 %v455, %v455
        %v464 = vpack.c.bf16 %v456, %v456
        %v465 = vld [vmem:[#allocation4] sm:$0xff]
        %v466 = vld [vmem:[#allocation4 + $0x8] sm:$0xff]
        %v467 = vld [vmem:[#allocation4 + $0x10] sm:$0xff]
        %v468 = vld [vmem:[#allocation4 + $0x18] sm:$0xff]
        %v469 = vld [vmem:[#allocation4 + $0x20] sm:$0xff]
        %v470 = vld [vmem:[#allocation4 + $0x28] sm:$0xff]
        %v471 = vld [vmem:[#allocation4 + $0x30] sm:$0xff]
        %v472 = vld [vmem:[#allocation4 + $0x38] sm:$0xff]
        %v473 = vld [vmem:[#allocation4 + $0x40] sm:$0xff]
        %v474 = vld [vmem:[#allocation4 + $0x48] sm:$0xff]
        %v475 = vld [vmem:[#allocation4 + $0x50] sm:$0xff]
        %v476 = vld [vmem:[#allocation4 + $0x58] sm:$0xff]
        %v477 = vld [vmem:[#allocation4 + $0x60] sm:$0xff]
        %v478 = vld [vmem:[#allocation4 + $0x68] sm:$0xff]
        %v479 = vld [vmem:[#allocation4 + $0x70] sm:$0xff]
        %v480 = vld [vmem:[#allocation4 + $0x78] sm:$0xff]
        %v481 = vld [vmem:[#allocation4 + $0x80] sm:$0xff]
        %v482 = vld [vmem:[#allocation4 + $0x88] sm:$0xff]
        %v483 = vld [vmem:[#allocation4 + $0x90] sm:$0xff]
        %v484 = vld [vmem:[#allocation4 + $0x98] sm:$0xff]
        %v485 = vld [vmem:[#allocation4 + $0xa0] sm:$0xff]
        %v486 = vld [vmem:[#allocation4 + $0xa8] sm:$0xff]
        %v487 = vld [vmem:[#allocation4 + $0xb0] sm:$0xff]
        %v488 = vld [vmem:[#allocation4 + $0xb8] sm:$0xff]
        %v489 = vld [vmem:[#allocation4 + $0xc0] sm:$0xff]
        %v490 = vld [vmem:[#allocation4 + $0xc8] sm:$0xff]
        %v491 = vld [vmem:[#allocation4 + $0xd0] sm:$0xff]
        %v492 = vld [vmem:[#allocation4 + $0xd8] sm:$0xff]
        %v493 = vld [vmem:[#allocation4 + $0xe0] sm:$0xff]
        %v494 = vld [vmem:[#allocation4 + $0xe8] sm:$0xff]
        %v495 = vld [vmem:[#allocation4 + $0xf0] sm:$0xff]
        %v496 = vld [vmem:[#allocation4 + $0xf8] sm:$0xff]
        %v497 = vld [vmem:[#allocation4 + $0x100] sm:$0xff]
        %v498 = vld [vmem:[#allocation4 + $0x108] sm:$0xff]
        %v499 = vld [vmem:[#allocation4 + $0x110] sm:$0xff]
        %v500 = vld [vmem:[#allocation4 + $0x118] sm:$0xff]
        %v501 = vld [vmem:[#allocation4 + $0x120] sm:$0xff]
        %v502 = vld [vmem:[#allocation4 + $0x128] sm:$0xff]
        %v503 = vld [vmem:[#allocation4 + $0x130] sm:$0xff]
        %v504 = vld [vmem:[#allocation4 + $0x138] sm:$0xff]
        %v505 = vld [vmem:[#allocation4 + $0x140] sm:$0xff]
        %v506 = vld [vmem:[#allocation4 + $0x148] sm:$0xff]
        %v507 = vld [vmem:[#allocation4 + $0x150] sm:$0xff]
        %v508 = vld [vmem:[#allocation4 + $0x158] sm:$0xff]
        %v509 = vld [vmem:[#allocation4 + $0x160] sm:$0xff]
        %v510 = vld [vmem:[#allocation4 + $0x168] sm:$0xff]
        %v511 = vld [vmem:[#allocation4 + $0x170] sm:$0xff]
        %v512 = vld [vmem:[#allocation4 + $0x178] sm:$0xff]
        %v513 = vld [vmem:[#allocation4 + $0x180] sm:$0xff]
        %v514 = vld [vmem:[#allocation4 + $0x188] sm:$0xff]
        %v515 = vld [vmem:[#allocation4 + $0x190] sm:$0xff]
        %v516 = vld [vmem:[#allocation4 + $0x198] sm:$0xff]
        %v517 = vld [vmem:[#allocation4 + $0x1a0] sm:$0xff]
        %v518 = vld [vmem:[#allocation4 + $0x1a8] sm:$0xff]
        %v519 = vld [vmem:[#allocation4 + $0x1b0] sm:$0xff]
        %v520 = vld [vmem:[#allocation4 + $0x1b8] sm:$0xff]
        %v521 = vld [vmem:[#allocation4 + $0x1c0] sm:$0xff]
        %v522 = vld [vmem:[#allocation4 + $0x1c8] sm:$0xff]
        %v523 = vld [vmem:[#allocation4 + $0x1d0] sm:$0xff]
        %v524 = vld [vmem:[#allocation4 + $0x1d8] sm:$0xff]
        %v525 = vld [vmem:[#allocation4 + $0x1e0] sm:$0xff]
        %v526 = vld [vmem:[#allocation4 + $0x1e8] sm:$0xff]
        %v527 = vld [vmem:[#allocation4 + $0x1f0] sm:$0xff]
        %v528 = vld [vmem:[#allocation4 + $0x1f8] sm:$0xff]
        %v529 = vld [vmem:[#allocation4 + $0x200] sm:$0xff]
        %v530 = vld [vmem:[#allocation4 + $0x208] sm:$0xff]
        %v531 = vld [vmem:[#allocation4 + $0x210] sm:$0xff]
        %v532 = vld [vmem:[#allocation4 + $0x218] sm:$0xff]
        %v533 = vld [vmem:[#allocation4 + $0x220] sm:$0xff]
        %v534 = vld [vmem:[#allocation4 + $0x228] sm:$0xff]
        %v535 = vld [vmem:[#allocation4 + $0x230] sm:$0xff]
        %v536 = vld [vmem:[#allocation4 + $0x238] sm:$0xff]
        %v537 = vld [vmem:[#allocation4 + $0x240] sm:$0xff]
        %v538 = vld [vmem:[#allocation4 + $0x248] sm:$0xff]
        %v539 = vld [vmem:[#allocation4 + $0x250] sm:$0xff]
        %v540 = vld [vmem:[#allocation4 + $0x258] sm:$0xff]
        %v541 = vld [vmem:[#allocation4 + $0x260] sm:$0xff]
        %v542 = vld [vmem:[#allocation4 + $0x268] sm:$0xff]
        %v543 = vld [vmem:[#allocation4 + $0x270] sm:$0xff]
        %v544 = vld [vmem:[#allocation4 + $0x278] sm:$0xff]
        %v545 = vld [vmem:[#allocation4 + $0x280] sm:$0xff]
        %v546 = vld [vmem:[#allocation4 + $0x288] sm:$0xff]
        %v547 = vld [vmem:[#allocation4 + $0x290] sm:$0xff]
        %v548 = vld [vmem:[#allocation4 + $0x298] sm:$0xff]
        %v549 = vld [vmem:[#allocation4 + $0x2a0] sm:$0xff]
        %v550 = vld [vmem:[#allocation4 + $0x2a8] sm:$0xff]
        %v551 = vld [vmem:[#allocation4 + $0x2b0] sm:$0xff]
        %v552 = vld [vmem:[#allocation4 + $0x2b8] sm:$0xff]
        %v553 = vld [vmem:[#allocation4 + $0x2c0] sm:$0xff]
        %v554 = vld [vmem:[#allocation4 + $0x2c8] sm:$0xff]
        %v555 = vld [vmem:[#allocation4 + $0x2d0] sm:$0xff]
        %v556 = vld [vmem:[#allocation4 + $0x2d8] sm:$0xff]
        %v557 = vld [vmem:[#allocation4 + $0x2e0] sm:$0xff]
        %v558 = vld [vmem:[#allocation4 + $0x2e8] sm:$0xff]
        %v559 = vld [vmem:[#allocation4 + $0x2f0] sm:$0xff]
        %v560 = vld [vmem:[#allocation4 + $0x2f8] sm:$0xff]
        %v561 = vld [vmem:[#allocation4 + $0x300] sm:$0xff]
        %v562 = vld [vmem:[#allocation4 + $0x308] sm:$0xff]
        %v563 = vld [vmem:[#allocation4 + $0x310] sm:$0xff]
        %v564 = vld [vmem:[#allocation4 + $0x318] sm:$0xff]
        %v565 = vld [vmem:[#allocation4 + $0x320] sm:$0xff]
        %v566 = vld [vmem:[#allocation4 + $0x328] sm:$0xff]
        %v567 = vld [vmem:[#allocation4 + $0x330] sm:$0xff]
        %v568 = vld [vmem:[#allocation4 + $0x338] sm:$0xff]
        %v569 = vld [vmem:[#allocation4 + $0x340] sm:$0xff]
        %v570 = vld [vmem:[#allocation4 + $0x348] sm:$0xff]
        %v571 = vld [vmem:[#allocation4 + $0x350] sm:$0xff]
        %v572 = vld [vmem:[#allocation4 + $0x358] sm:$0xff]
        %v573 = vld [vmem:[#allocation4 + $0x360] sm:$0xff]
        %v574 = vld [vmem:[#allocation4 + $0x368] sm:$0xff]
        %v575 = vld [vmem:[#allocation4 + $0x370] sm:$0xff]
        %v576 = vld [vmem:[#allocation4 + $0x378] sm:$0xff]
        %v577 = vld [vmem:[#allocation4 + $0x380] sm:$0xff]
        %v578 = vld [vmem:[#allocation4 + $0x388] sm:$0xff]
        %v579 = vld [vmem:[#allocation4 + $0x390] sm:$0xff]
        %v580 = vld [vmem:[#allocation4 + $0x398] sm:$0xff]
        %v581 = vld [vmem:[#allocation4 + $0x3a0] sm:$0xff]
        %v582 = vld [vmem:[#allocation4 + $0x3a8] sm:$0xff]
        %v583 = vld [vmem:[#allocation4 + $0x3b0] sm:$0xff]
        %v584 = vld [vmem:[#allocation4 + $0x3b8] sm:$0xff]
        %v585 = vld [vmem:[#allocation4 + $0x3c0] sm:$0xff]
        %v586 = vld [vmem:[#allocation4 + $0x3c8] sm:$0xff]
        %v587 = vld [vmem:[#allocation4 + $0x3d0] sm:$0xff]
        %v588 = vld [vmem:[#allocation4 + $0x3d8] sm:$0xff]
        %v589 = vld [vmem:[#allocation4 + $0x3e0] sm:$0xff]
        %v590 = vld [vmem:[#allocation4 + $0x3e8] sm:$0xff]
        %v591 = vld [vmem:[#allocation4 + $0x3f0] sm:$0xff]
        %v592 = vld [vmem:[#allocation4 + $0x3f8] sm:$0xff]
        %v593 = vld [vmem:[#allocation4 + $0x400] sm:$0xff]
        %v594 = vld [vmem:[#allocation4 + $0x408] sm:$0xff]
        %v595 = vld [vmem:[#allocation4 + $0x410] sm:$0xff]
        %v596 = vld [vmem:[#allocation4 + $0x418] sm:$0xff]
        %v597 = vld [vmem:[#allocation4 + $0x420] sm:$0xff]
        %v598 = vld [vmem:[#allocation4 + $0x428] sm:$0xff]
        %v599 = vld [vmem:[#allocation4 + $0x430] sm:$0xff]
        %v600 = vld [vmem:[#allocation4 + $0x438] sm:$0xff]
        %v601 = vld [vmem:[#allocation4 + $0x440] sm:$0xff]
        %v602 = vld [vmem:[#allocation4 + $0x448] sm:$0xff]
        %v603 = vld [vmem:[#allocation4 + $0x450] sm:$0xff]
        %v604 = vld [vmem:[#allocation4 + $0x458] sm:$0xff]
        %v605 = vld [vmem:[#allocation4 + $0x460] sm:$0xff]
        %v606 = vld [vmem:[#allocation4 + $0x468] sm:$0xff]
        %v607 = vld [vmem:[#allocation4 + $0x470] sm:$0xff]
        %v608 = vld [vmem:[#allocation4 + $0x478] sm:$0xff]
        %v609 = vld [vmem:[#allocation4 + $0x480] sm:$0xff]
        %v610 = vld [vmem:[#allocation4 + $0x488] sm:$0xff]
        %v611 = vld [vmem:[#allocation4 + $0x490] sm:$0xff]
        %v612 = vld [vmem:[#allocation4 + $0x498] sm:$0xff]
        %v613 = vld [vmem:[#allocation4 + $0x4a0] sm:$0xff]
        %v614 = vld [vmem:[#allocation4 + $0x4a8] sm:$0xff]
        %v615 = vld [vmem:[#allocation4 + $0x4b0] sm:$0xff]
        %v616 = vld [vmem:[#allocation4 + $0x4b8] sm:$0xff]
        %v617 = vld [vmem:[#allocation4 + $0x4c0] sm:$0xff]
        %v618 = vld [vmem:[#allocation4 + $0x4c8] sm:$0xff]
        %v619 = vld [vmem:[#allocation4 + $0x4d0] sm:$0xff]
        %v620 = vld [vmem:[#allocation4 + $0x4d8] sm:$0xff]
        %v621 = vld [vmem:[#allocation4 + $0x4e0] sm:$0xff]
        %v622 = vld [vmem:[#allocation4 + $0x4e8] sm:$0xff]
        %v623 = vld [vmem:[#allocation4 + $0x4f0] sm:$0xff]
        %v624 = vld [vmem:[#allocation4 + $0x4f8] sm:$0xff]
        %v625 = vld [vmem:[#allocation4 + $0x500] sm:$0xff]
        %v626 = vld [vmem:[#allocation4 + $0x508] sm:$0xff]
        %v627 = vld [vmem:[#allocation4 + $0x510] sm:$0xff]
        %v628 = vld [vmem:[#allocation4 + $0x518] sm:$0xff]
        %v629 = vld [vmem:[#allocation4 + $0x520] sm:$0xff]
        %v630 = vld [vmem:[#allocation4 + $0x528] sm:$0xff]
        %v631 = vld [vmem:[#allocation4 + $0x530] sm:$0xff]
        %v632 = vld [vmem:[#allocation4 + $0x538] sm:$0xff]
        %v633 = vld [vmem:[#allocation4 + $0x540] sm:$0xff]
        %v634 = vld [vmem:[#allocation4 + $0x548] sm:$0xff]
        %v635 = vld [vmem:[#allocation4 + $0x550] sm:$0xff]
        %v636 = vld [vmem:[#allocation4 + $0x558] sm:$0xff]
        %v637 = vld [vmem:[#allocation4 + $0x560] sm:$0xff]
        %v638 = vld [vmem:[#allocation4 + $0x568] sm:$0xff]
        %v639 = vld [vmem:[#allocation4 + $0x570] sm:$0xff]
        %v640 = vld [vmem:[#allocation4 + $0x578] sm:$0xff]
        %v641 = vld [vmem:[#allocation4 + $0x580] sm:$0xff]
        %v642 = vld [vmem:[#allocation4 + $0x588] sm:$0xff]
        %v643 = vld [vmem:[#allocation4 + $0x590] sm:$0xff]
        %v644 = vld [vmem:[#allocation4 + $0x598] sm:$0xff]
        %v645 = vld [vmem:[#allocation4 + $0x5a0] sm:$0xff]
        %v646 = vld [vmem:[#allocation4 + $0x5a8] sm:$0xff]
        %v647 = vld [vmem:[#allocation4 + $0x5b0] sm:$0xff]
        %v648 = vld [vmem:[#allocation4 + $0x5b8] sm:$0xff]
        %v649 = vld [vmem:[#allocation4 + $0x5c0] sm:$0xff]
        %v650 = vld [vmem:[#allocation4 + $0x5c8] sm:$0xff]
        %v651 = vld [vmem:[#allocation4 + $0x5d0] sm:$0xff]
        %v652 = vld [vmem:[#allocation4 + $0x5d8] sm:$0xff]
        %v653 = vld [vmem:[#allocation4 + $0x5e0] sm:$0xff]
        %v654 = vld [vmem:[#allocation4 + $0x5e8] sm:$0xff]
        %v655 = vld [vmem:[#allocation4 + $0x5f0] sm:$0xff]
        %v656 = vld [vmem:[#allocation4 + $0x5f8] sm:$0xff]
        %v657 = vld [vmem:[#allocation4 + $0x600] sm:$0xff]
        %v658 = vld [vmem:[#allocation4 + $0x608] sm:$0xff]
        %v659 = vld [vmem:[#allocation4 + $0x610] sm:$0xff]
        %v660 = vld [vmem:[#allocation4 + $0x618] sm:$0xff]
        %v661 = vld [vmem:[#allocation4 + $0x620] sm:$0xff]
        %v662 = vld [vmem:[#allocation4 + $0x628] sm:$0xff]
        %v663 = vld [vmem:[#allocation4 + $0x630] sm:$0xff]
        %v664 = vld [vmem:[#allocation4 + $0x638] sm:$0xff]
        %v665 = vld [vmem:[#allocation4 + $0x640] sm:$0xff]
        %v666 = vld [vmem:[#allocation4 + $0x648] sm:$0xff]
        %v667 = vld [vmem:[#allocation4 + $0x650] sm:$0xff]
        %v668 = vld [vmem:[#allocation4 + $0x658] sm:$0xff]
        %v669 = vld [vmem:[#allocation4 + $0x660] sm:$0xff]
        %v670 = vld [vmem:[#allocation4 + $0x668] sm:$0xff]
        %v671 = vld [vmem:[#allocation4 + $0x670] sm:$0xff]
        %v672 = vld [vmem:[#allocation4 + $0x678] sm:$0xff]
        %v673 = vld [vmem:[#allocation4 + $0x680] sm:$0xff]
        %v674 = vld [vmem:[#allocation4 + $0x688] sm:$0xff]
        %v675 = vld [vmem:[#allocation4 + $0x690] sm:$0xff]
        %v676 = vld [vmem:[#allocation4 + $0x698] sm:$0xff]
        %v677 = vld [vmem:[#allocation4 + $0x6a0] sm:$0xff]
        %v678 = vld [vmem:[#allocation4 + $0x6a8] sm:$0xff]
        %v679 = vld [vmem:[#allocation4 + $0x6b0] sm:$0xff]
        %v680 = vld [vmem:[#allocation4 + $0x6b8] sm:$0xff]
        %v681 = vld [vmem:[#allocation4 + $0x6c0] sm:$0xff]
        %v682 = vld [vmem:[#allocation4 + $0x6c8] sm:$0xff]
        %v683 = vld [vmem:[#allocation4 + $0x6d0] sm:$0xff]
        %v684 = vld [vmem:[#allocation4 + $0x6d8] sm:$0xff]
        %v685 = vld [vmem:[#allocation4 + $0x6e0] sm:$0xff]
        %v686 = vld [vmem:[#allocation4 + $0x6e8] sm:$0xff]
        %v687 = vld [vmem:[#allocation4 + $0x6f0] sm:$0xff]
        %v688 = vld [vmem:[#allocation4 + $0x6f8] sm:$0xff]
        %v689 = vld [vmem:[#allocation4 + $0x700] sm:$0xff]
        %v690 = vld [vmem:[#allocation4 + $0x708] sm:$0xff]
        %v691 = vld [vmem:[#allocation4 + $0x710] sm:$0xff]
        %v692 = vld [vmem:[#allocation4 + $0x718] sm:$0xff]
        %v693 = vld [vmem:[#allocation4 + $0x720] sm:$0xff]
        %v694 = vld [vmem:[#allocation4 + $0x728] sm:$0xff]
        %v695 = vld [vmem:[#allocation4 + $0x730] sm:$0xff]
        %v696 = vld [vmem:[#allocation4 + $0x738] sm:$0xff]
        %v697 = vld [vmem:[#allocation4 + $0x740] sm:$0xff]
        %v698 = vld [vmem:[#allocation4 + $0x748] sm:$0xff]
        %v699 = vld [vmem:[#allocation4 + $0x750] sm:$0xff]
        %v700 = vld [vmem:[#allocation4 + $0x758] sm:$0xff]
        %v701 = vld [vmem:[#allocation4 + $0x760] sm:$0xff]
        %v702 = vld [vmem:[#allocation4 + $0x768] sm:$0xff]
        %v703 = vld [vmem:[#allocation4 + $0x770] sm:$0xff]
        %v704 = vld [vmem:[#allocation4 + $0x778] sm:$0xff]
        %v705 = vld [vmem:[#allocation4 + $0x780] sm:$0xff]
        %v706 = vld [vmem:[#allocation4 + $0x788] sm:$0xff]
        %v707 = vld [vmem:[#allocation4 + $0x790] sm:$0xff]
        %v708 = vld [vmem:[#allocation4 + $0x798] sm:$0xff]
        %v709 = vld [vmem:[#allocation4 + $0x7a0] sm:$0xff]
        %v710 = vld [vmem:[#allocation4 + $0x7a8] sm:$0xff]
        %v711 = vld [vmem:[#allocation4 + $0x7b0] sm:$0xff]
        %v712 = vld [vmem:[#allocation4 + $0x7b8] sm:$0xff]
        %v713 = vld [vmem:[#allocation4 + $0x7c0] sm:$0xff]
        %v714 = vld [vmem:[#allocation4 + $0x7c8] sm:$0xff]
        %v715 = vld [vmem:[#allocation4 + $0x7d0] sm:$0xff]
        %v716 = vld [vmem:[#allocation4 + $0x7d8] sm:$0xff]
        %v717 = vld [vmem:[#allocation4 + $0x7e0] sm:$0xff]
        %v718 = vld [vmem:[#allocation4 + $0x7e8] sm:$0xff]
        %v719 = vld [vmem:[#allocation4 + $0x7f0] sm:$0xff]
        %v720 = vld [vmem:[#allocation4 + $0x7f8] sm:$0xff]
        %v721 = vld [vmem:[%s3] sm:$0xf]
        %v723 = vlaneseq
        %v724 = vshrl.u32 %v723, 7
        %v725 = vsub.s32 0, %v724
        %v726 = vrot.slane %v721, %v725
        %v727 = vlaneseq
        %v728 = vshrl.u32 %v727, 7
        %v729 = vsub.s32 1, %v728
        %v730 = vrot.slane %v721, %v729
        %v731 = vlaneseq
        %v732 = vshrl.u32 %v731, 7
        %v733 = vsub.s32 2, %v732
        %v734 = vrot.slane %v721, %v733
        %v735 = vlaneseq
        %v736 = vshrl.u32 %v735, 7
        %v737 = vsub.s32 3, %v736
        %v738 = vrot.slane %v721, %v737
        %v999 = vunpack.c.l.b16 %v465
        %v1000 = vunpack.c.h.b16 %v465
        %v1001 = vunpack.c.l.b16 %v466
        %v1002 = vunpack.c.h.b16 %v466
        %v1003 = vunpack.c.l.b16 %v467
        %v1004 = vunpack.c.h.b16 %v467
        %v1005 = vunpack.c.l.b16 %v468
        %v1006 = vunpack.c.h.b16 %v468
        %v1007 = vunpack.c.l.b16 %v469
        %v1008 = vunpack.c.h.b16 %v469
        %v1009 = vunpack.c.l.b16 %v470
        %v1010 = vunpack.c.h.b16 %v470
        %v1011 = vunpack.c.l.b16 %v471
        %v1012 = vunpack.c.h.b16 %v471
        %v1013 = vunpack.c.l.b16 %v472
        %v1014 = vunpack.c.h.b16 %v472
        %v1015 = vunpack.c.l.b16 %v473
        %v1016 = vunpack.c.h.b16 %v473
        %v1017 = vunpack.c.l.b16 %v474
        %v1018 = vunpack.c.h.b16 %v474
        %v1019 = vunpack.c.l.b16 %v475
        %v1020 = vunpack.c.h.b16 %v475
        %v1021 = vunpack.c.l.b16 %v476
        %v1022 = vunpack.c.h.b16 %v476
        %v1023 = vunpack.c.l.b16 %v477
        %v1024 = vunpack.c.h.b16 %v477
        %v1025 = vunpack.c.l.b16 %v478
        %v1026 = vunpack.c.h.b16 %v478
        %v1027 = vunpack.c.l.b16 %v479
        %v1028 = vunpack.c.h.b16 %v479
        %v1029 = vunpack.c.l.b16 %v480
        %v1030 = vunpack.c.h.b16 %v480
        %v1031 = vunpack.c.l.b16 %v481
        %v1032 = vunpack.c.h.b16 %v481
        %v1033 = vunpack.c.l.b16 %v482
        %v1034 = vunpack.c.h.b16 %v482
        %v1035 = vunpack.c.l.b16 %v483
        %v1036 = vunpack.c.h.b16 %v483
        %v1037 = vunpack.c.l.b16 %v484
        %v1038 = vunpack.c.h.b16 %v484
        %v1039 = vunpack.c.l.b16 %v485
        %v1040 = vunpack.c.h.b16 %v485
        %v1041 = vunpack.c.l.b16 %v486
        %v1042 = vunpack.c.h.b16 %v486
        %v1043 = vunpack.c.l.b16 %v487
        %v1044 = vunpack.c.h.b16 %v487
        %v1045 = vunpack.c.l.b16 %v488
        %v1046 = vunpack.c.h.b16 %v488
        %v1047 = vunpack.c.l.b16 %v489
        %v1048 = vunpack.c.h.b16 %v489
        %v1049 = vunpack.c.l.b16 %v490
        %v1050 = vunpack.c.h.b16 %v490
        %v1051 = vunpack.c.l.b16 %v491
        %v1052 = vunpack.c.h.b16 %v491
        %v1053 = vunpack.c.l.b16 %v492
        %v1054 = vunpack.c.h.b16 %v492
        %v1055 = vunpack.c.l.b16 %v493
        %v1056 = vunpack.c.h.b16 %v493
        %v1057 = vunpack.c.l.b16 %v494
        %v1058 = vunpack.c.h.b16 %v494
        %v1059 = vunpack.c.l.b16 %v495
        %v1060 = vunpack.c.h.b16 %v495
        %v1061 = vunpack.c.l.b16 %v496
        %v1062 = vunpack.c.h.b16 %v496
        %v1063 = vunpack.c.l.b16 %v497
        %v1064 = vunpack.c.h.b16 %v497
        %v1065 = vunpack.c.l.b16 %v498
        %v1066 = vunpack.c.h.b16 %v498
        %v1067 = vunpack.c.l.b16 %v499
        %v1068 = vunpack.c.h.b16 %v499
        %v1069 = vunpack.c.l.b16 %v500
        %v1070 = vunpack.c.h.b16 %v500
        %v1071 = vunpack.c.l.b16 %v501
        %v1072 = vunpack.c.h.b16 %v501
        %v1073 = vunpack.c.l.b16 %v502
        %v1074 = vunpack.c.h.b16 %v502
        %v1075 = vunpack.c.l.b16 %v503
        %v1076 = vunpack.c.h.b16 %v503
        %v1077 = vunpack.c.l.b16 %v504
        %v1078 = vunpack.c.h.b16 %v504
        %v1079 = vunpack.c.l.b16 %v505
        %v1080 = vunpack.c.h.b16 %v505
        %v1081 = vunpack.c.l.b16 %v506
        %v1082 = vunpack.c.h.b16 %v506
        %v1083 = vunpack.c.l.b16 %v507
        %v1084 = vunpack.c.h.b16 %v507
        %v1085 = vunpack.c.l.b16 %v508
        %v1086 = vunpack.c.h.b16 %v508
        %v1087 = vunpack.c.l.b16 %v509
        %v1088 = vunpack.c.h.b16 %v509
        %v1089 = vunpack.c.l.b16 %v510
        %v1090 = vunpack.c.h.b16 %v510
        %v1091 = vunpack.c.l.b16 %v511
        %v1092 = vunpack.c.h.b16 %v511
        %v1093 = vunpack.c.l.b16 %v512
        %v1094 = vunpack.c.h.b16 %v512
        %v1095 = vunpack.c.l.b16 %v513
        %v1096 = vunpack.c.h.b16 %v513
        %v1097 = vunpack.c.l.b16 %v514
        %v1098 = vunpack.c.h.b16 %v514
        %v1099 = vunpack.c.l.b16 %v515
        %v1100 = vunpack.c.h.b16 %v515
        %v1101 = vunpack.c.l.b16 %v516
        %v1102 = vunpack.c.h.b16 %v516
        %v1103 = vunpack.c.l.b16 %v517
        %v1104 = vunpack.c.h.b16 %v517
        %v1105 = vunpack.c.l.b16 %v518
        %v1106 = vunpack.c.h.b16 %v518
        %v1107 = vunpack.c.l.b16 %v519
        %v1108 = vunpack.c.h.b16 %v519
        %v1109 = vunpack.c.l.b16 %v520
        %v1110 = vunpack.c.h.b16 %v520
        %v1111 = vunpack.c.l.b16 %v521
        %v1112 = vunpack.c.h.b16 %v521
        %v1113 = vunpack.c.l.b16 %v522
        %v1114 = vunpack.c.h.b16 %v522
        %v1115 = vunpack.c.l.b16 %v523
        %v1116 = vunpack.c.h.b16 %v523
        %v1117 = vunpack.c.l.b16 %v524
        %v1118 = vunpack.c.h.b16 %v524
        %v1119 = vunpack.c.l.b16 %v525
        %v1120 = vunpack.c.h.b16 %v525
        %v1121 = vunpack.c.l.b16 %v526
        %v1122 = vunpack.c.h.b16 %v526
        %v1123 = vunpack.c.l.b16 %v527
        %v1124 = vunpack.c.h.b16 %v527
        %v1125 = vunpack.c.l.b16 %v528
        %v1126 = vunpack.c.h.b16 %v528
        %v1127 = vunpack.c.l.b16 %v529
        %v1128 = vunpack.c.h.b16 %v529
        %v1129 = vunpack.c.l.b16 %v530
        %v1130 = vunpack.c.h.b16 %v530
        %v1131 = vunpack.c.l.b16 %v531
        %v1132 = vunpack.c.h.b16 %v531
        %v1133 = vunpack.c.l.b16 %v532
        %v1134 = vunpack.c.h.b16 %v532
        %v1135 = vunpack.c.l.b16 %v533
        %v1136 = vunpack.c.h.b16 %v533
        %v1137 = vunpack.c.l.b16 %v534
        %v1138 = vunpack.c.h.b16 %v534
        %v1139 = vunpack.c.l.b16 %v535
        %v1140 = vunpack.c.h.b16 %v535
        %v1141 = vunpack.c.l.b16 %v536
        %v1142 = vunpack.c.h.b16 %v536
        %v1143 = vunpack.c.l.b16 %v537
        %v1144 = vunpack.c.h.b16 %v537
        %v1145 = vunpack.c.l.b16 %v538
        %v1146 = vunpack.c.h.b16 %v538
        %v1147 = vunpack.c.l.b16 %v539
        %v1148 = vunpack.c.h.b16 %v539
        %v1149 = vunpack.c.l.b16 %v540
        %v1150 = vunpack.c.h.b16 %v540
        %v1151 = vunpack.c.l.b16 %v541
        %v1152 = vunpack.c.h.b16 %v541
        %v1153 = vunpack.c.l.b16 %v542
        %v1154 = vunpack.c.h.b16 %v542
        %v1155 = vunpack.c.l.b16 %v543
        %v1156 = vunpack.c.h.b16 %v543
        %v1157 = vunpack.c.l.b16 %v544
        %v1158 = vunpack.c.h.b16 %v544
        %v1159 = vunpack.c.l.b16 %v545
        %v1160 = vunpack.c.h.b16 %v545
        %v1161 = vunpack.c.l.b16 %v546
        %v1162 = vunpack.c.h.b16 %v546
        %v1163 = vunpack.c.l.b16 %v547
        %v1164 = vunpack.c.h.b16 %v547
        %v1165 = vunpack.c.l.b16 %v548
        %v1166 = vunpack.c.h.b16 %v548
        %v1167 = vunpack.c.l.b16 %v549
        %v1168 = vunpack.c.h.b16 %v549
        %v1169 = vunpack.c.l.b16 %v550
        %v1170 = vunpack.c.h.b16 %v550
        %v1171 = vunpack.c.l.b16 %v551
        %v1172 = vunpack.c.h.b16 %v551
        %v1173 = vunpack.c.l.b16 %v552
        %v1174 = vunpack.c.h.b16 %v552
        %v1175 = vunpack.c.l.b16 %v553
        %v1176 = vunpack.c.h.b16 %v553
        %v1177 = vunpack.c.l.b16 %v554
        %v1178 = vunpack.c.h.b16 %v554
        %v1179 = vunpack.c.l.b16 %v555
        %v1180 = vunpack.c.h.b16 %v555
        %v1181 = vunpack.c.l.b16 %v556
        %v1182 = vunpack.c.h.b16 %v556
        %v1183 = vunpack.c.l.b16 %v557
        %v1184 = vunpack.c.h.b16 %v557
        %v1185 = vunpack.c.l.b16 %v558
        %v1186 = vunpack.c.h.b16 %v558
        %v1187 = vunpack.c.l.b16 %v559
        %v1188 = vunpack.c.h.b16 %v559
        %v1189 = vunpack.c.l.b16 %v560
        %v1190 = vunpack.c.h.b16 %v560
        %v1191 = vunpack.c.l.b16 %v561
        %v1192 = vunpack.c.h.b16 %v561
        %v1193 = vunpack.c.l.b16 %v562
        %v1194 = vunpack.c.h.b16 %v562
        %v1195 = vunpack.c.l.b16 %v563
        %v1196 = vunpack.c.h.b16 %v563
        %v1197 = vunpack.c.l.b16 %v564
        %v1198 = vunpack.c.h.b16 %v564
        %v1199 = vunpack.c.l.b16 %v565
        %v1200 = vunpack.c.h.b16 %v565
        %v1201 = vunpack.c.l.b16 %v566
        %v1202 = vunpack.c.h.b16 %v566
        %v1203 = vunpack.c.l.b16 %v567
        %v1204 = vunpack.c.h.b16 %v567
        %v1205 = vunpack.c.l.b16 %v568
        %v1206 = vunpack.c.h.b16 %v568
        %v1207 = vunpack.c.l.b16 %v569
        %v1208 = vunpack.c.h.b16 %v569
        %v1209 = vunpack.c.l.b16 %v570
        %v1210 = vunpack.c.h.b16 %v570
        %v1211 = vunpack.c.l.b16 %v571
        %v1212 = vunpack.c.h.b16 %v571
        %v1213 = vunpack.c.l.b16 %v572
        %v1214 = vunpack.c.h.b16 %v572
        %v1215 = vunpack.c.l.b16 %v573
        %v1216 = vunpack.c.h.b16 %v573
        %v1217 = vunpack.c.l.b16 %v574
        %v1218 = vunpack.c.h.b16 %v574
        %v1219 = vunpack.c.l.b16 %v575
        %v1220 = vunpack.c.h.b16 %v575
        %v1221 = vunpack.c.l.b16 %v576
        %v1222 = vunpack.c.h.b16 %v576
        %v1223 = vunpack.c.l.b16 %v577
        %v1224 = vunpack.c.h.b16 %v577
        %v1225 = vunpack.c.l.b16 %v578
        %v1226 = vunpack.c.h.b16 %v578
        %v1227 = vunpack.c.l.b16 %v579
        %v1228 = vunpack.c.h.b16 %v579
        %v1229 = vunpack.c.l.b16 %v580
        %v1230 = vunpack.c.h.b16 %v580
        %v1231 = vunpack.c.l.b16 %v581
        %v1232 = vunpack.c.h.b16 %v581
        %v1233 = vunpack.c.l.b16 %v582
        %v1234 = vunpack.c.h.b16 %v582
        %v1235 = vunpack.c.l.b16 %v583
        %v1236 = vunpack.c.h.b16 %v583
        %v1237 = vunpack.c.l.b16 %v584
        %v1238 = vunpack.c.h.b16 %v584
        %v1239 = vunpack.c.l.b16 %v585
        %v1240 = vunpack.c.h.b16 %v585
        %v1241 = vunpack.c.l.b16 %v586
        %v1242 = vunpack.c.h.b16 %v586
        %v1243 = vunpack.c.l.b16 %v587
        %v1244 = vunpack.c.h.b16 %v587
        %v1245 = vunpack.c.l.b16 %v588
        %v1246 = vunpack.c.h.b16 %v588
        %v1247 = vunpack.c.l.b16 %v589
        %v1248 = vunpack.c.h.b16 %v589
        %v1249 = vunpack.c.l.b16 %v590
        %v1250 = vunpack.c.h.b16 %v590
        %v1251 = vunpack.c.l.b16 %v591
        %v1252 = vunpack.c.h.b16 %v591
        %v1253 = vunpack.c.l.b16 %v592
        %v1254 = vunpack.c.h.b16 %v592
        %v1255 = vunpack.c.l.b16 %v593
        %v1256 = vunpack.c.h.b16 %v593
        %v1257 = vunpack.c.l.b16 %v594
        %v1258 = vunpack.c.h.b16 %v594
        %v1259 = vunpack.c.l.b16 %v595
        %v1260 = vunpack.c.h.b16 %v595
        %v1261 = vunpack.c.l.b16 %v596
        %v1262 = vunpack.c.h.b16 %v596
        %v1263 = vunpack.c.l.b16 %v597
        %v1264 = vunpack.c.h.b16 %v597
        %v1265 = vunpack.c.l.b16 %v598
        %v1266 = vunpack.c.h.b16 %v598
        %v1267 = vunpack.c.l.b16 %v599
        %v1268 = vunpack.c.h.b16 %v599
        %v1269 = vunpack.c.l.b16 %v600
        %v1270 = vunpack.c.h.b16 %v600
        %v1271 = vunpack.c.l.b16 %v601
        %v1272 = vunpack.c.h.b16 %v601
        %v1273 = vunpack.c.l.b16 %v602
        %v1274 = vunpack.c.h.b16 %v602
        %v1275 = vunpack.c.l.b16 %v603
        %v1276 = vunpack.c.h.b16 %v603
        %v1277 = vunpack.c.l.b16 %v604
        %v1278 = vunpack.c.h.b16 %v604
        %v1279 = vunpack.c.l.b16 %v605
        %v1280 = vunpack.c.h.b16 %v605
        %v1281 = vunpack.c.l.b16 %v606
        %v1282 = vunpack.c.h.b16 %v606
        %v1283 = vunpack.c.l.b16 %v607
        %v1284 = vunpack.c.h.b16 %v607
        %v1285 = vunpack.c.l.b16 %v608
        %v1286 = vunpack.c.h.b16 %v608
        %v1287 = vunpack.c.l.b16 %v609
        %v1288 = vunpack.c.h.b16 %v609
        %v1289 = vunpack.c.l.b16 %v610
        %v1290 = vunpack.c.h.b16 %v610
        %v1291 = vunpack.c.l.b16 %v611
        %v1292 = vunpack.c.h.b16 %v611
        %v1293 = vunpack.c.l.b16 %v612
        %v1294 = vunpack.c.h.b16 %v612
        %v1295 = vunpack.c.l.b16 %v613
        %v1296 = vunpack.c.h.b16 %v613
        %v1297 = vunpack.c.l.b16 %v614
        %v1298 = vunpack.c.h.b16 %v614
        %v1299 = vunpack.c.l.b16 %v615
        %v1300 = vunpack.c.h.b16 %v615
        %v1301 = vunpack.c.l.b16 %v616
        %v1302 = vunpack.c.h.b16 %v616
        %v1303 = vunpack.c.l.b16 %v617
        %v1304 = vunpack.c.h.b16 %v617
        %v1305 = vunpack.c.l.b16 %v618
        %v1306 = vunpack.c.h.b16 %v618
        %v1307 = vunpack.c.l.b16 %v619
        %v1308 = vunpack.c.h.b16 %v619
        %v1309 = vunpack.c.l.b16 %v620
        %v1310 = vunpack.c.h.b16 %v620
        %v1311 = vunpack.c.l.b16 %v621
        %v1312 = vunpack.c.h.b16 %v621
        %v1313 = vunpack.c.l.b16 %v622
        %v1314 = vunpack.c.h.b16 %v622
        %v1315 = vunpack.c.l.b16 %v623
        %v1316 = vunpack.c.h.b16 %v623
        %v1317 = vunpack.c.l.b16 %v624
        %v1318 = vunpack.c.h.b16 %v624
        %v1319 = vunpack.c.l.b16 %v625
        %v1320 = vunpack.c.h.b16 %v625
        %v1321 = vunpack.c.l.b16 %v626
        %v1322 = vunpack.c.h.b16 %v626
        %v1323 = vunpack.c.l.b16 %v627
        %v1324 = vunpack.c.h.b16 %v627
        %v1325 = vunpack.c.l.b16 %v628
        %v1326 = vunpack.c.h.b16 %v628
        %v1327 = vunpack.c.l.b16 %v629
        %v1328 = vunpack.c.h.b16 %v629
        %v1329 = vunpack.c.l.b16 %v630
        %v1330 = vunpack.c.h.b16 %v630
        %v1331 = vunpack.c.l.b16 %v631
        %v1332 = vunpack.c.h.b16 %v631
        %v1333 = vunpack.c.l.b16 %v632
        %v1334 = vunpack.c.h.b16 %v632
        %v1335 = vunpack.c.l.b16 %v633
        %v1336 = vunpack.c.h.b16 %v633
        %v1337 = vunpack.c.l.b16 %v634
        %v1338 = vunpack.c.h.b16 %v634
        %v1339 = vunpack.c.l.b16 %v635
        %v1340 = vunpack.c.h.b16 %v635
        %v1341 = vunpack.c.l.b16 %v636
        %v1342 = vunpack.c.h.b16 %v636
        %v1343 = vunpack.c.l.b16 %v637
        %v1344 = vunpack.c.h.b16 %v637
        %v1345 = vunpack.c.l.b16 %v638
        %v1346 = vunpack.c.h.b16 %v638
        %v1347 = vunpack.c.l.b16 %v639
        %v1348 = vunpack.c.h.b16 %v639
        %v1349 = vunpack.c.l.b16 %v640
        %v1350 = vunpack.c.h.b16 %v640
        %v1351 = vunpack.c.l.b16 %v641
        %v1352 = vunpack.c.h.b16 %v641
        %v1353 = vunpack.c.l.b16 %v642
        %v1354 = vunpack.c.h.b16 %v642
        %v1355 = vunpack.c.l.b16 %v643
        %v1356 = vunpack.c.h.b16 %v643
        %v1357 = vunpack.c.l.b16 %v644
        %v1358 = vunpack.c.h.b16 %v644
        %v1359 = vunpack.c.l.b16 %v645
        %v1360 = vunpack.c.h.b16 %v645
        %v1361 = vunpack.c.l.b16 %v646
        %v1362 = vunpack.c.h.b16 %v646
        %v1363 = vunpack.c.l.b16 %v647
        %v1364 = vunpack.c.h.b16 %v647
        %v1365 = vunpack.c.l.b16 %v648
        %v1366 = vunpack.c.h.b16 %v648
        %v1367 = vunpack.c.l.b16 %v649
        %v1368 = vunpack.c.h.b16 %v649
        %v1369 = vunpack.c.l.b16 %v650
        %v1370 = vunpack.c.h.b16 %v650
        %v1371 = vunpack.c.l.b16 %v651
        %v1372 = vunpack.c.h.b16 %v651
        %v1373 = vunpack.c.l.b16 %v652
        %v1374 = vunpack.c.h.b16 %v652
        %v1375 = vunpack.c.l.b16 %v653
        %v1376 = vunpack.c.h.b16 %v653
        %v1377 = vunpack.c.l.b16 %v654
        %v1378 = vunpack.c.h.b16 %v654
        %v1379 = vunpack.c.l.b16 %v655
        %v1380 = vunpack.c.h.b16 %v655
        %v1381 = vunpack.c.l.b16 %v656
        %v1382 = vunpack.c.h.b16 %v656
        %v1383 = vunpack.c.l.b16 %v657
        %v1384 = vunpack.c.h.b16 %v657
        %v1385 = vunpack.c.l.b16 %v658
        %v1386 = vunpack.c.h.b16 %v658
        %v1387 = vunpack.c.l.b16 %v659
        %v1388 = vunpack.c.h.b16 %v659
        %v1389 = vunpack.c.l.b16 %v660
        %v1390 = vunpack.c.h.b16 %v660
        %v1391 = vunpack.c.l.b16 %v661
        %v1392 = vunpack.c.h.b16 %v661
        %v1393 = vunpack.c.l.b16 %v662
        %v1394 = vunpack.c.h.b16 %v662
        %v1395 = vunpack.c.l.b16 %v663
        %v1396 = vunpack.c.h.b16 %v663
        %v1397 = vunpack.c.l.b16 %v664
        %v1398 = vunpack.c.h.b16 %v664
        %v1399 = vunpack.c.l.b16 %v665
        %v1400 = vunpack.c.h.b16 %v665
        %v1401 = vunpack.c.l.b16 %v666
        %v1402 = vunpack.c.h.b16 %v666
        %v1403 = vunpack.c.l.b16 %v667
        %v1404 = vunpack.c.h.b16 %v667
        %v1405 = vunpack.c.l.b16 %v668
        %v1406 = vunpack.c.h.b16 %v668
        %v1407 = vunpack.c.l.b16 %v669
        %v1408 = vunpack.c.h.b16 %v669
        %v1409 = vunpack.c.l.b16 %v670
        %v1410 = vunpack.c.h.b16 %v670
        %v1411 = vunpack.c.l.b16 %v671
        %v1412 = vunpack.c.h.b16 %v671
        %v1413 = vunpack.c.l.b16 %v672
        %v1414 = vunpack.c.h.b16 %v672
        %v1415 = vunpack.c.l.b16 %v673
        %v1416 = vunpack.c.h.b16 %v673
        %v1417 = vunpack.c.l.b16 %v674
        %v1418 = vunpack.c.h.b16 %v674
        %v1419 = vunpack.c.l.b16 %v675
        %v1420 = vunpack.c.h.b16 %v675
        %v1421 = vunpack.c.l.b16 %v676
        %v1422 = vunpack.c.h.b16 %v676
        %v1423 = vunpack.c.l.b16 %v677
        %v1424 = vunpack.c.h.b16 %v677
        %v1425 = vunpack.c.l.b16 %v678
        %v1426 = vunpack.c.h.b16 %v678
        %v1427 = vunpack.c.l.b16 %v679
        %v1428 = vunpack.c.h.b16 %v679
        %v1429 = vunpack.c.l.b16 %v680
        %v1430 = vunpack.c.h.b16 %v680
        %v1431 = vunpack.c.l.b16 %v681
        %v1432 = vunpack.c.h.b16 %v681
        %v1433 = vunpack.c.l.b16 %v682
        %v1434 = vunpack.c.h.b16 %v682
        %v1435 = vunpack.c.l.b16 %v683
        %v1436 = vunpack.c.h.b16 %v683
        %v1437 = vunpack.c.l.b16 %v684
        %v1438 = vunpack.c.h.b16 %v684
        %v1439 = vunpack.c.l.b16 %v685
        %v1440 = vunpack.c.h.b16 %v685
        %v1441 = vunpack.c.l.b16 %v686
        %v1442 = vunpack.c.h.b16 %v686
        %v1443 = vunpack.c.l.b16 %v687
        %v1444 = vunpack.c.h.b16 %v687
        %v1445 = vunpack.c.l.b16 %v688
        %v1446 = vunpack.c.h.b16 %v688
        %v1447 = vunpack.c.l.b16 %v689
        %v1448 = vunpack.c.h.b16 %v689
        %v1449 = vunpack.c.l.b16 %v690
        %v1450 = vunpack.c.h.b16 %v690
        %v1451 = vunpack.c.l.b16 %v691
        %v1452 = vunpack.c.h.b16 %v691
        %v1453 = vunpack.c.l.b16 %v692
        %v1454 = vunpack.c.h.b16 %v692
        %v1455 = vunpack.c.l.b16 %v693
        %v1456 = vunpack.c.h.b16 %v693
        %v1457 = vunpack.c.l.b16 %v694
        %v1458 = vunpack.c.h.b16 %v694
        %v1459 = vunpack.c.l.b16 %v695
        %v1460 = vunpack.c.h.b16 %v695
        %v1461 = vunpack.c.l.b16 %v696
        %v1462 = vunpack.c.h.b16 %v696
        %v1463 = vunpack.c.l.b16 %v697
        %v1464 = vunpack.c.h.b16 %v697
        %v1465 = vunpack.c.l.b16 %v698
        %v1466 = vunpack.c.h.b16 %v698
        %v1467 = vunpack.c.l.b16 %v699
        %v1468 = vunpack.c.h.b16 %v699
        %v1469 = vunpack.c.l.b16 %v700
        %v1470 = vunpack.c.h.b16 %v700
        %v1471 = vunpack.c.l.b16 %v701
        %v1472 = vunpack.c.h.b16 %v701
        %v1473 = vunpack.c.l.b16 %v702
        %v1474 = vunpack.c.h.b16 %v702
        %v1475 = vunpack.c.l.b16 %v703
        %v1476 = vunpack.c.h.b16 %v703
        %v1477 = vunpack.c.l.b16 %v704
        %v1478 = vunpack.c.h.b16 %v704
        %v1479 = vunpack.c.l.b16 %v705
        %v1480 = vunpack.c.h.b16 %v705
        %v1481 = vunpack.c.l.b16 %v706
        %v1482 = vunpack.c.h.b16 %v706
        %v1483 = vunpack.c.l.b16 %v707
        %v1484 = vunpack.c.h.b16 %v707
        %v1485 = vunpack.c.l.b16 %v708
        %v1486 = vunpack.c.h.b16 %v708
        %v1487 = vunpack.c.l.b16 %v709
        %v1488 = vunpack.c.h.b16 %v709
        %v1489 = vunpack.c.l.b16 %v710
        %v1490 = vunpack.c.h.b16 %v710
        %v1491 = vunpack.c.l.b16 %v711
        %v1492 = vunpack.c.h.b16 %v711
        %v1493 = vunpack.c.l.b16 %v712
        %v1494 = vunpack.c.h.b16 %v712
        %v1495 = vunpack.c.l.b16 %v713
        %v1496 = vunpack.c.h.b16 %v713
        %v1497 = vunpack.c.l.b16 %v714
        %v1498 = vunpack.c.h.b16 %v714
        %v1499 = vunpack.c.l.b16 %v715
        %v1500 = vunpack.c.h.b16 %v715
        %v1501 = vunpack.c.l.b16 %v716
        %v1502 = vunpack.c.h.b16 %v716
        %v1503 = vunpack.c.l.b16 %v717
        %v1504 = vunpack.c.h.b16 %v717
        %v1505 = vunpack.c.l.b16 %v718
        %v1506 = vunpack.c.h.b16 %v718
        %v1507 = vunpack.c.l.b16 %v719
        %v1508 = vunpack.c.h.b16 %v719
        %v1509 = vunpack.c.l.b16 %v720
        %v1510 = vunpack.c.h.b16 %v720
        %v1511 = vpack.c.b16 %v1003, %v999
        %v1512 = vpack.c.b16 %v1004, %v1000
        %v1513 = vpack.c.b16 %v1005, %v1001
        %v1514 = vpack.c.b16 %v1006, %v1002
        %v1515 = vpack.c.b16 %v1011, %v1007
        %v1516 = vpack.c.b16 %v1012, %v1008
        %v1517 = vpack.c.b16 %v1013, %v1009
        %v1518 = vpack.c.b16 %v1014, %v1010
        %v1519 = vpack.c.b16 %v1019, %v1015
        %v1520 = vpack.c.b16 %v1020, %v1016
        %v1521 = vpack.c.b16 %v1021, %v1017
        %v1522 = vpack.c.b16 %v1022, %v1018
        %v1523 = vpack.c.b16 %v1027, %v1023
        %v1524 = vpack.c.b16 %v1028, %v1024
        %v1525 = vpack.c.b16 %v1029, %v1025
        %v1526 = vpack.c.b16 %v1030, %v1026
        %v1527 = vpack.c.b16 %v1035, %v1031
        %v1528 = vpack.c.b16 %v1036, %v1032
        %v1529 = vpack.c.b16 %v1037, %v1033
        %v1530 = vpack.c.b16 %v1038, %v1034
        %v1531 = vpack.c.b16 %v1043, %v1039
        %v1532 = vpack.c.b16 %v1044, %v1040
        %v1533 = vpack.c.b16 %v1045, %v1041
        %v1534 = vpack.c.b16 %v1046, %v1042
        %v1535 = vpack.c.b16 %v1051, %v1047
        %v1536 = vpack.c.b16 %v1052, %v1048
        %v1537 = vpack.c.b16 %v1053, %v1049
        %v1538 = vpack.c.b16 %v1054, %v1050
        %v1539 = vpack.c.b16 %v1059, %v1055
        %v1540 = vpack.c.b16 %v1060, %v1056
        %v1541 = vpack.c.b16 %v1061, %v1057
        %v1542 = vpack.c.b16 %v1062, %v1058
        %v1543 = vpack.c.b16 %v1067, %v1063
        %v1544 = vpack.c.b16 %v1068, %v1064
        %v1545 = vpack.c.b16 %v1069, %v1065
        %v1546 = vpack.c.b16 %v1070, %v1066
        %v1547 = vpack.c.b16 %v1075, %v1071
        %v1548 = vpack.c.b16 %v1076, %v1072
        %v1549 = vpack.c.b16 %v1077, %v1073
        %v1550 = vpack.c.b16 %v1078, %v1074
        %v1551 = vpack.c.b16 %v1083, %v1079
        %v1552 = vpack.c.b16 %v1084, %v1080
        %v1553 = vpack.c.b16 %v1085, %v1081
        %v1554 = vpack.c.b16 %v1086, %v1082
        %v1555 = vpack.c.b16 %v1091, %v1087
        %v1556 = vpack.c.b16 %v1092, %v1088
        %v1557 = vpack.c.b16 %v1093, %v1089
        %v1558 = vpack.c.b16 %v1094, %v1090
        %v1559 = vpack.c.b16 %v1099, %v1095
        %v1560 = vpack.c.b16 %v1100, %v1096
        %v1561 = vpack.c.b16 %v1101, %v1097
        %v1562 = vpack.c.b16 %v1102, %v1098
        %v1563 = vpack.c.b16 %v1107, %v1103
        %v1564 = vpack.c.b16 %v1108, %v1104
        %v1565 = vpack.c.b16 %v1109, %v1105
        %v1566 = vpack.c.b16 %v1110, %v1106
        %v1567 = vpack.c.b16 %v1115, %v1111
        %v1568 = vpack.c.b16 %v1116, %v1112
        %v1569 = vpack.c.b16 %v1117, %v1113
        %v1570 = vpack.c.b16 %v1118, %v1114
        %v1571 = vpack.c.b16 %v1123, %v1119
        %v1572 = vpack.c.b16 %v1124, %v1120
        %v1573 = vpack.c.b16 %v1125, %v1121
        %v1574 = vpack.c.b16 %v1126, %v1122
        %v1575 = vpack.c.b16 %v1131, %v1127
        %v1576 = vpack.c.b16 %v1132, %v1128
        %v1577 = vpack.c.b16 %v1133, %v1129
        %v1578 = vpack.c.b16 %v1134, %v1130
        %v1579 = vpack.c.b16 %v1139, %v1135
        %v1580 = vpack.c.b16 %v1140, %v1136
        %v1581 = vpack.c.b16 %v1141, %v1137
        %v1582 = vpack.c.b16 %v1142, %v1138
        %v1583 = vpack.c.b16 %v1147, %v1143
        %v1584 = vpack.c.b16 %v1148, %v1144
        %v1585 = vpack.c.b16 %v1149, %v1145
        %v1586 = vpack.c.b16 %v1150, %v1146
        %v1587 = vpack.c.b16 %v1155, %v1151
        %v1588 = vpack.c.b16 %v1156, %v1152
        %v1589 = vpack.c.b16 %v1157, %v1153
        %v1590 = vpack.c.b16 %v1158, %v1154
        %v1591 = vpack.c.b16 %v1163, %v1159
        %v1592 = vpack.c.b16 %v1164, %v1160
        %v1593 = vpack.c.b16 %v1165, %v1161
        %v1594 = vpack.c.b16 %v1166, %v1162
        %v1595 = vpack.c.b16 %v1171, %v1167
        %v1596 = vpack.c.b16 %v1172, %v1168
        %v1597 = vpack.c.b16 %v1173, %v1169
        %v1598 = vpack.c.b16 %v1174, %v1170
        %v1599 = vpack.c.b16 %v1179, %v1175
        %v1600 = vpack.c.b16 %v1180, %v1176
        %v1601 = vpack.c.b16 %v1181, %v1177
        %v1602 = vpack.c.b16 %v1182, %v1178
        %v1603 = vpack.c.b16 %v1187, %v1183
        %v1604 = vpack.c.b16 %v1188, %v1184
        %v1605 = vpack.c.b16 %v1189, %v1185
        %v1606 = vpack.c.b16 %v1190, %v1186
        %v1607 = vpack.c.b16 %v1195, %v1191
        %v1608 = vpack.c.b16 %v1196, %v1192
        %v1609 = vpack.c.b16 %v1197, %v1193
        %v1610 = vpack.c.b16 %v1198, %v1194
        %v1611 = vpack.c.b16 %v1203, %v1199
        %v1612 = vpack.c.b16 %v1204, %v1200
        %v1613 = vpack.c.b16 %v1205, %v1201
        %v1614 = vpack.c.b16 %v1206, %v1202
        %v1615 = vpack.c.b16 %v1211, %v1207
        %v1616 = vpack.c.b16 %v1212, %v1208
        %v1617 = vpack.c.b16 %v1213, %v1209
        %v1618 = vpack.c.b16 %v1214, %v1210
        %v1619 = vpack.c.b16 %v1219, %v1215
        %v1620 = vpack.c.b16 %v1220, %v1216
        %v1621 = vpack.c.b16 %v1221, %v1217
        %v1622 = vpack.c.b16 %v1222, %v1218
        %v1623 = vpack.c.b16 %v1227, %v1223
        %v1624 = vpack.c.b16 %v1228, %v1224
        %v1625 = vpack.c.b16 %v1229, %v1225
        %v1626 = vpack.c.b16 %v1230, %v1226
        %v1627 = vpack.c.b16 %v1235, %v1231
        %v1628 = vpack.c.b16 %v1236, %v1232
        %v1629 = vpack.c.b16 %v1237, %v1233
        %v1630 = vpack.c.b16 %v1238, %v1234
        %v1631 = vpack.c.b16 %v1243, %v1239
        %v1632 = vpack.c.b16 %v1244, %v1240
        %v1633 = vpack.c.b16 %v1245, %v1241
        %v1634 = vpack.c.b16 %v1246, %v1242
        %v1635 = vpack.c.b16 %v1251, %v1247
        %v1636 = vpack.c.b16 %v1252, %v1248
        %v1637 = vpack.c.b16 %v1253, %v1249
        %v1638 = vpack.c.b16 %v1254, %v1250
        %v1639 = vpack.c.b16 %v1259, %v1255
        %v1640 = vpack.c.b16 %v1260, %v1256
        %v1641 = vpack.c.b16 %v1261, %v1257
        %v1642 = vpack.c.b16 %v1262, %v1258
        %v1643 = vpack.c.b16 %v1267, %v1263
        %v1644 = vpack.c.b16 %v1268, %v1264
        %v1645 = vpack.c.b16 %v1269, %v1265
        %v1646 = vpack.c.b16 %v1270, %v1266
        %v1647 = vpack.c.b16 %v1275, %v1271
        %v1648 = vpack.c.b16 %v1276, %v1272
        %v1649 = vpack.c.b16 %v1277, %v1273
        %v1650 = vpack.c.b16 %v1278, %v1274
        %v1651 = vpack.c.b16 %v1283, %v1279
        %v1652 = vpack.c.b16 %v1284, %v1280
        %v1653 = vpack.c.b16 %v1285, %v1281
        %v1654 = vpack.c.b16 %v1286, %v1282
        %v1655 = vpack.c.b16 %v1291, %v1287
        %v1656 = vpack.c.b16 %v1292, %v1288
        %v1657 = vpack.c.b16 %v1293, %v1289
        %v1658 = vpack.c.b16 %v1294, %v1290
        %v1659 = vpack.c.b16 %v1299, %v1295
        %v1660 = vpack.c.b16 %v1300, %v1296
        %v1661 = vpack.c.b16 %v1301, %v1297
        %v1662 = vpack.c.b16 %v1302, %v1298
        %v1663 = vpack.c.b16 %v1307, %v1303
        %v1664 = vpack.c.b16 %v1308, %v1304
        %v1665 = vpack.c.b16 %v1309, %v1305
        %v1666 = vpack.c.b16 %v1310, %v1306
        %v1667 = vpack.c.b16 %v1315, %v1311
        %v1668 = vpack.c.b16 %v1316, %v1312
        %v1669 = vpack.c.b16 %v1317, %v1313
        %v1670 = vpack.c.b16 %v1318, %v1314
        %v1671 = vpack.c.b16 %v1323, %v1319
        %v1672 = vpack.c.b16 %v1324, %v1320
        %v1673 = vpack.c.b16 %v1325, %v1321
        %v1674 = vpack.c.b16 %v1326, %v1322
        %v1675 = vpack.c.b16 %v1331, %v1327
        %v1676 = vpack.c.b16 %v1332, %v1328
        %v1677 = vpack.c.b16 %v1333, %v1329
        %v1678 = vpack.c.b16 %v1334, %v1330
        %v1679 = vpack.c.b16 %v1339, %v1335
        %v1680 = vpack.c.b16 %v1340, %v1336
        %v1681 = vpack.c.b16 %v1341, %v1337
        %v1682 = vpack.c.b16 %v1342, %v1338
        %v1683 = vpack.c.b16 %v1347, %v1343
        %v1684 = vpack.c.b16 %v1348, %v1344
        %v1685 = vpack.c.b16 %v1349, %v1345
        %v1686 = vpack.c.b16 %v1350, %v1346
        %v1687 = vpack.c.b16 %v1355, %v1351
        %v1688 = vpack.c.b16 %v1356, %v1352
        %v1689 = vpack.c.b16 %v1357, %v1353
        %v1690 = vpack.c.b16 %v1358, %v1354
        %v1691 = vpack.c.b16 %v1363, %v1359
        %v1692 = vpack.c.b16 %v1364, %v1360
        %v1693 = vpack.c.b16 %v1365, %v1361
        %v1694 = vpack.c.b16 %v1366, %v1362
        %v1695 = vpack.c.b16 %v1371, %v1367
        %v1696 = vpack.c.b16 %v1372, %v1368
        %v1697 = vpack.c.b16 %v1373, %v1369
        %v1698 = vpack.c.b16 %v1374, %v1370
        %v1699 = vpack.c.b16 %v1379, %v1375
        %v1700 = vpack.c.b16 %v1380, %v1376
        %v1701 = vpack.c.b16 %v1381, %v1377
        %v1702 = vpack.c.b16 %v1382, %v1378
        %v1703 = vpack.c.b16 %v1387, %v1383
        %v1704 = vpack.c.b16 %v1388, %v1384
        %v1705 = vpack.c.b16 %v1389, %v1385
        %v1706 = vpack.c.b16 %v1390, %v1386
        %v1707 = vpack.c.b16 %v1395, %v1391
        %v1708 = vpack.c.b16 %v1396, %v1392
        %v1709 = vpack.c.b16 %v1397, %v1393
        %v1710 = vpack.c.b16 %v1398, %v1394
        %v1711 = vpack.c.b16 %v1403, %v1399
        %v1712 = vpack.c.b16 %v1404, %v1400
        %v1713 = vpack.c.b16 %v1405, %v1401
        %v1714 = vpack.c.b16 %v1406, %v1402
        %v1715 = vpack.c.b16 %v1411, %v1407
        %v1716 = vpack.c.b16 %v1412, %v1408
        %v1717 = vpack.c.b16 %v1413, %v1409
        %v1718 = vpack.c.b16 %v1414, %v1410
        %v1719 = vpack.c.b16 %v1419, %v1415
        %v1720 = vpack.c.b16 %v1420, %v1416
        %v1721 = vpack.c.b16 %v1421, %v1417
        %v1722 = vpack.c.b16 %v1422, %v1418
        %v1723 = vpack.c.b16 %v1427, %v1423
        %v1724 = vpack.c.b16 %v1428, %v1424
        %v1725 = vpack.c.b16 %v1429, %v1425
        %v1726 = vpack.c.b16 %v1430, %v1426
        %v1727 = vpack.c.b16 %v1435, %v1431
        %v1728 = vpack.c.b16 %v1436, %v1432
        %v1729 = vpack.c.b16 %v1437, %v1433
        %v1730 = vpack.c.b16 %v1438, %v1434
        %v1731 = vpack.c.b16 %v1443, %v1439
        %v1732 = vpack.c.b16 %v1444, %v1440
        %v1733 = vpack.c.b16 %v1445, %v1441
        %v1734 = vpack.c.b16 %v1446, %v1442
        %v1735 = vpack.c.b16 %v1451, %v1447
        %v1736 = vpack.c.b16 %v1452, %v1448
        %v1737 = vpack.c.b16 %v1453, %v1449
        %v1738 = vpack.c.b16 %v1454, %v1450
        %v1739 = vpack.c.b16 %v1459, %v1455
        %v1740 = vpack.c.b16 %v1460, %v1456
        %v1741 = vpack.c.b16 %v1461, %v1457
        %v1742 = vpack.c.b16 %v1462, %v1458
        %v1743 = vpack.c.b16 %v1467, %v1463
        %v1744 = vpack.c.b16 %v1468, %v1464
        %v1745 = vpack.c.b16 %v1469, %v1465
        %v1746 = vpack.c.b16 %v1470, %v1466
        %v1747 = vpack.c.b16 %v1475, %v1471
        %v1748 = vpack.c.b16 %v1476, %v1472
        %v1749 = vpack.c.b16 %v1477, %v1473
        %v1750 = vpack.c.b16 %v1478, %v1474
        %v1751 = vpack.c.b16 %v1483, %v1479
        %v1752 = vpack.c.b16 %v1484, %v1480
        %v1753 = vpack.c.b16 %v1485, %v1481
        %v1754 = vpack.c.b16 %v1486, %v1482
        %v1755 = vpack.c.b16 %v1491, %v1487
        %v1756 = vpack.c.b16 %v1492, %v1488
        %v1757 = vpack.c.b16 %v1493, %v1489
        %v1758 = vpack.c.b16 %v1494, %v1490
        %v1759 = vpack.c.b16 %v1499, %v1495
        %v1760 = vpack.c.b16 %v1500, %v1496
        %v1761 = vpack.c.b16 %v1501, %v1497
        %v1762 = vpack.c.b16 %v1502, %v1498
        %v1763 = vpack.c.b16 %v1507, %v1503
        %v1764 = vpack.c.b16 %v1508, %v1504
        %v1765 = vpack.c.b16 %v1509, %v1505
        %v1766 = vpack.c.b16 %v1510, %v1506
        %2023 = vmatprep.subr.bf16.mxu0 %v1512
        %2024 = vmatpush1.bf16.msra.mxu0 %v1511
        %2025 = vmatprep.subr.bf16.mxu0 %v1516
        %2026 = vmatpush1.bf16.msra.mxu0 %v1515
        %2027 = vmatprep.subr.bf16.mxu0 %v1520
        %2028 = vmatpush1.bf16.msra.mxu0 %v1519
        %2029 = vmatprep.subr.bf16.mxu0 %v1524
        %2030 = vmatpush1.bf16.msra.mxu0 %v1523
        %2031 = vmatprep.subr.bf16.mxu0 %v1528
        %2032 = vmatpush1.bf16.msra.mxu0 %v1527
        %2033 = vmatprep.subr.bf16.mxu0 %v1532
        %2034 = vmatpush1.bf16.msra.mxu0 %v1531
        %2035 = vmatprep.subr.bf16.mxu0 %v1536
        %2036 = vmatpush1.bf16.msra.mxu0 %v1535
        %2037 = vmatprep.subr.bf16.mxu0 %v1540
        %2038 = vmatpush1.bf16.msra.mxu0 %v1539
        %2039 = vmatprep.subr.bf16.mxu0 %v1544
        %2040 = vmatpush1.bf16.msra.mxu0 %v1543
        %2041 = vmatprep.subr.bf16.mxu0 %v1548
        %2042 = vmatpush1.bf16.msra.mxu0 %v1547
        %2043 = vmatprep.subr.bf16.mxu0 %v1552
        %2044 = vmatpush1.bf16.msra.mxu0 %v1551
        %2045 = vmatprep.subr.bf16.mxu0 %v1556
        %2046 = vmatpush1.bf16.msra.mxu0 %v1555
        %2047 = vmatprep.subr.bf16.mxu0 %v1560
        %2048 = vmatpush1.bf16.msra.mxu0 %v1559
        %2049 = vmatprep.subr.bf16.mxu0 %v1564
        %2050 = vmatpush1.bf16.msra.mxu0 %v1563
        %2051 = vmatprep.subr.bf16.mxu0 %v1568
        %2052 = vmatpush1.bf16.msra.mxu0 %v1567
        %2053 = vmatprep.subr.bf16.mxu0 %v1572
        %2054 = vmatpush1.bf16.msra.mxu0 %v1571
        %2055 = vmatprep.mubr.bf16.mxu0 %v458
        %2056 = vmatmul.mubr.bf16.gmra.mrb[0].mxu0 %v457
        %v2057 = vpop.f32.mrb[0].mxu0
        %v2058 = vadd.f32 %v726, %v2057
        %v2059 = vpop.f32.mrb[0].mxu0
        %v2060 = vadd.f32 %v730, %v2059
        %v2061 = vpop.f32.mrb[0].mxu0
        %v2062 = vpop.f32.mrb[0].mxu0
        %2063 = vdwg.mxu0
        %2064 = vmatprep.subr.bf16.mxu0 %v1576
        %2065 = vmatpush1.bf16.msra.mxu0 %v1575
        %2066 = vmatprep.subr.bf16.mxu0 %v1580
        %2067 = vmatpush1.bf16.msra.mxu0 %v1579
        %2068 = vmatprep.subr.bf16.mxu0 %v1584
        %2069 = vmatpush1.bf16.msra.mxu0 %v1583
        %2070 = vmatprep.subr.bf16.mxu0 %v1588
        %2071 = vmatpush1.bf16.msra.mxu0 %v1587
        %2072 = vmatprep.subr.bf16.mxu0 %v1592
        %2073 = vmatpush1.bf16.msra.mxu0 %v1591
        %2074 = vmatprep.subr.bf16.mxu0 %v1596
        %2075 = vmatpush1.bf16.msra.mxu0 %v1595
        %2076 = vmatprep.subr.bf16.mxu0 %v1600
        %2077 = vmatpush1.bf16.msra.mxu0 %v1599
        %2078 = vmatprep.subr.bf16.mxu0 %v1604
        %2079 = vmatpush1.bf16.msra.mxu0 %v1603
        %2080 = vmatprep.subr.bf16.mxu0 %v1608
        %2081 = vmatpush1.bf16.msra.mxu0 %v1607
        %2082 = vmatprep.subr.bf16.mxu0 %v1612
        %2083 = vmatpush1.bf16.msra.mxu0 %v1611
        %2084 = vmatprep.subr.bf16.mxu0 %v1616
        %2085 = vmatpush1.bf16.msra.mxu0 %v1615
        %2086 = vmatprep.subr.bf16.mxu0 %v1620
        %2087 = vmatpush1.bf16.msra.mxu0 %v1619
        %2088 = vmatprep.subr.bf16.mxu0 %v1624
        %2089 = vmatpush1.bf16.msra.mxu0 %v1623
        %2090 = vmatprep.subr.bf16.mxu0 %v1628
        %2091 = vmatpush1.bf16.msra.mxu0 %v1627
        %2092 = vmatprep.subr.bf16.mxu0 %v1632
        %2093 = vmatpush1.bf16.msra.mxu0 %v1631
        %2094 = vmatprep.subr.bf16.mxu0 %v1636
        %2095 = vmatpush1.bf16.msra.mxu0 %v1635
        %2096 = vmatprep.mubr.bf16.mxu0 %v460
        %2097 = vmatmul.mubr.bf16.gmra.mrb[0].mxu0 %v459
        %v2098 = vpop.f32.mrb[0].mxu0
        %v2099 = vadd.f32 %v2058, %v2098
        %v2100 = vpop.f32.mrb[0].mxu0
        %v2101 = vadd.f32 %v2060, %v2100
        %v2102 = vpop.f32.mrb[0].mxu0
        %v2103 = vpop.f32.mrb[0].mxu0
        %2104 = vdwg.mxu0
        %2105 = vmatprep.subr.bf16.mxu0 %v1640
        %2106 = vmatpush1.bf16.msra.mxu0 %v1639
        %2107 = vmatprep.subr.bf16.mxu0 %v1644
        %2108 = vmatpush1.bf16.msra.mxu0 %v1643
        %2109 = vmatprep.subr.bf16.mxu0 %v1648
        %2110 = vmatpush1.bf16.msra.mxu0 %v1647
        %2111 = vmatprep.subr.bf16.mxu0 %v1652
        %2112 = vmatpush1.bf16.msra.mxu0 %v1651
        %2113 = vmatprep.subr.bf16.mxu0 %v1656
        %2114 = vmatpush1.bf16.msra.mxu0 %v1655
        %2115 = vmatprep.subr.bf16.mxu0 %v1660
        %2116 = vmatpush1.bf16.msra.mxu0 %v1659
        %2117 = vmatprep.subr.bf16.mxu0 %v1664
        %2118 = vmatpush1.bf16.msra.mxu0 %v1663
        %2119 = vmatprep.subr.bf16.mxu0 %v1668
        %2120 = vmatpush1.bf16.msra.mxu0 %v1667
        %2121 = vmatprep.subr.bf16.mxu0 %v1672
        %2122 = vmatpush1.bf16.msra.mxu0 %v1671
        %2123 = vmatprep.subr.bf16.mxu0 %v1676
        %2124 = vmatpush1.bf16.msra.mxu0 %v1675
        %2125 = vmatprep.subr.bf16.mxu0 %v1680
        %2126 = vmatpush1.bf16.msra.mxu0 %v1679
        %2127 = vmatprep.subr.bf16.mxu0 %v1684
        %2128 = vmatpush1.bf16.msra.mxu0 %v1683
        %2129 = vmatprep.subr.bf16.mxu0 %v1688
        %2130 = vmatpush1.bf16.msra.mxu0 %v1687
        %2131 = vmatprep.subr.bf16.mxu0 %v1692
        %2132 = vmatpush1.bf16.msra.mxu0 %v1691
        %2133 = vmatprep.subr.bf16.mxu0 %v1696
        %2134 = vmatpush1.bf16.msra.mxu0 %v1695
        %2135 = vmatprep.subr.bf16.mxu0 %v1700
        %2136 = vmatpush1.bf16.msra.mxu0 %v1699
        %2137 = vmatprep.mubr.bf16.mxu0 %v462
        %2138 = vmatmul.mubr.bf16.gmra.mrb[0].mxu0 %v461
        %v2139 = vpop.f32.mrb[0].mxu0
        %v2140 = vadd.f32 %v2099, %v2139
        %v2141 = vpop.f32.mrb[0].mxu0
        %v2142 = vadd.f32 %v2101, %v2141
        %v2143 = vpop.f32.mrb[0].mxu0
        %v2144 = vpop.f32.mrb[0].mxu0
        %2145 = vdwg.mxu0
        %2146 = vmatprep.subr.bf16.mxu0 %v1704
        %2147 = vmatpush1.bf16.msra.mxu0 %v1703
        %2148 = vmatprep.subr.bf16.mxu0 %v1708
        %2149 = vmatpush1.bf16.msra.mxu0 %v1707
        %2150 = vmatprep.subr.bf16.mxu0 %v1712
        %2151 = vmatpush1.bf16.msra.mxu0 %v1711
        %2152 = vmatprep.subr.bf16.mxu0 %v1716
        %2153 = vmatpush1.bf16.msra.mxu0 %v1715
        %2154 = vmatprep.subr.bf16.mxu0 %v1720
        %2155 = vmatpush1.bf16.msra.mxu0 %v1719
        %2156 = vmatprep.subr.bf16.mxu0 %v1724
        %2157 = vmatpush1.bf16.msra.mxu0 %v1723
        %2158 = vmatprep.subr.bf16.mxu0 %v1728
        %2159 = vmatpush1.bf16.msra.mxu0 %v1727
        %2160 = vmatprep.subr.bf16.mxu0 %v1732
        %2161 = vmatpush1.bf16.msra.mxu0 %v1731
        %2162 = vmatprep.subr.bf16.mxu0 %v1736
        %2163 = vmatpush1.bf16.msra.mxu0 %v1735
        %2164 = vmatprep.subr.bf16.mxu0 %v1740
        %2165 = vmatpush1.bf16.msra.mxu0 %v1739
        %2166 = vmatprep.subr.bf16.mxu0 %v1744
        %2167 = vmatpush1.bf16.msra.mxu0 %v1743
        %2168 = vmatprep.subr.bf16.mxu0 %v1748
        %2169 = vmatpush1.bf16.msra.mxu0 %v1747
        %2170 = vmatprep.subr.bf16.mxu0 %v1752
        %2171 = vmatpush1.bf16.msra.mxu0 %v1751
        %2172 = vmatprep.subr.bf16.mxu0 %v1756
        %2173 = vmatpush1.bf16.msra.mxu0 %v1755
        %2174 = vmatprep.subr.bf16.mxu0 %v1760
        %2175 = vmatpush1.bf16.msra.mxu0 %v1759
        %2176 = vmatprep.subr.bf16.mxu0 %v1764
        %2177 = vmatpush1.bf16.msra.mxu0 %v1763
        %2178 = vmatprep.mubr.bf16.mxu0 %v464
        %2179 = vmatmul.mubr.bf16.gmra.mrb[0].mxu0 %v463
        %v2180 = vpop.f32.mrb[0].mxu0
        %v2181 = vadd.f32 %v2140, %v2180
        %v2182 = vpop.f32.mrb[0].mxu0
        %v2183 = vadd.f32 %v2142, %v2182
        %v2184 = vpop.f32.mrb[0].mxu0
        %v2185 = vpop.f32.mrb[0].mxu0
        %2186 = vdwg.mxu0
        %2187 = vmatprep.subr.bf16.mxu0 %v1514
        %2188 = vmatpush1.bf16.msra.mxu0 %v1513
        %2189 = vmatprep.subr.bf16.mxu0 %v1518
        %2190 = vmatpush1.bf16.msra.mxu0 %v1517
        %2191 = vmatprep.subr.bf16.mxu0 %v1522
        %2192 = vmatpush1.bf16.msra.mxu0 %v1521
        %2193 = vmatprep.subr.bf16.mxu0 %v1526
        %2194 = vmatpush1.bf16.msra.mxu0 %v1525
        %2195 = vmatprep.subr.bf16.mxu0 %v1530
        %2196 = vmatpush1.bf16.msra.mxu0 %v1529
        %2197 = vmatprep.subr.bf16.mxu0 %v1534
        %2198 = vmatpush1.bf16.msra.mxu0 %v1533
        %2199 = vmatprep.subr.bf16.mxu0 %v1538
        %2200 = vmatpush1.bf16.msra.mxu0 %v1537
        %2201 = vmatprep.subr.bf16.mxu0 %v1542
        %2202 = vmatpush1.bf16.msra.mxu0 %v1541
        %2203 = vmatprep.subr.bf16.mxu0 %v1546
        %2204 = vmatpush1.bf16.msra.mxu0 %v1545
        %2205 = vmatprep.subr.bf16.mxu0 %v1550
        %2206 = vmatpush1.bf16.msra.mxu0 %v1549
        %2207 = vmatprep.subr.bf16.mxu0 %v1554
        %2208 = vmatpush1.bf16.msra.mxu0 %v1553
        %2209 = vmatprep.subr.bf16.mxu0 %v1558
        %2210 = vmatpush1.bf16.msra.mxu0 %v1557
        %2211 = vmatprep.subr.bf16.mxu0 %v1562
        %2212 = vmatpush1.bf16.msra.mxu0 %v1561
        %2213 = vmatprep.subr.bf16.mxu0 %v1566
        %2214 = vmatpush1.bf16.msra.mxu0 %v1565
        %2215 = vmatprep.subr.bf16.mxu0 %v1570
        %2216 = vmatpush1.bf16.msra.mxu0 %v1569
        %2217 = vmatprep.subr.bf16.mxu0 %v1574
        %2218 = vmatpush1.bf16.msra.mxu0 %v1573
        %2219 = vmatprep.mubr.bf16.mxu0 %v458
        %2220 = vmatmul.mubr.bf16.gmra.mrb[0].mxu0 %v457
        %v2221 = vpop.f32.mrb[0].mxu0
        %v2222 = vadd.f32 %v734, %v2221
        %v2223 = vpop.f32.mrb[0].mxu0
        %v2224 = vadd.f32 %v738, %v2223
        %v2225 = vpop.f32.mrb[0].mxu0
        %v2226 = vpop.f32.mrb[0].mxu0
        %2227 = vdwg.mxu0
        %2228 = vmatprep.subr.bf16.mxu0 %v1578
        %2229 = vmatpush1.bf16.msra.mxu0 %v1577
        %2230 = vmatprep.subr.bf16.mxu0 %v1582
        %2231 = vmatpush1.bf16.msra.mxu0 %v1581
        %2232 = vmatprep.subr.bf16.mxu0 %v1586
        %2233 = vmatpush1.bf16.msra.mxu0 %v1585
        %2234 = vmatprep.subr.bf16.mxu0 %v1590
        %2235 = vmatpush1.bf16.msra.mxu0 %v1589
        %2236 = vmatprep.subr.bf16.mxu0 %v1594
        %2237 = vmatpush1.bf16.msra.mxu0 %v1593
        %2238 = vmatprep.subr.bf16.mxu0 %v1598
        %2239 = vmatpush1.bf16.msra.mxu0 %v1597
        %2240 = vmatprep.subr.bf16.mxu0 %v1602
        %2241 = vmatpush1.bf16.msra.mxu0 %v1601
        %2242 = vmatprep.subr.bf16.mxu0 %v1606
        %2243 = vmatpush1.bf16.msra.mxu0 %v1605
        %2244 = vmatprep.subr.bf16.mxu0 %v1610
        %2245 = vmatpush1.bf16.msra.mxu0 %v1609
        %2246 = vmatprep.subr.bf16.mxu0 %v1614
        %2247 = vmatpush1.bf16.msra.mxu0 %v1613
        %2248 = vmatprep.subr.bf16.mxu0 %v1618
        %2249 = vmatpush1.bf16.msra.mxu0 %v1617
        %2250 = vmatprep.subr.bf16.mxu0 %v1622
        %2251 = vmatpush1.bf16.msra.mxu0 %v1621
        %2252 = vmatprep.subr.bf16.mxu0 %v1626
        %2253 = vmatpush1.bf16.msra.mxu0 %v1625
        %2254 = vmatprep.subr.bf16.mxu0 %v1630
        %2255 = vmatpush1.bf16.msra.mxu0 %v1629
        %2256 = vmatprep.subr.bf16.mxu0 %v1634
        %2257 = vmatpush1.bf16.msra.mxu0 %v1633
        %2258 = vmatprep.subr.bf16.mxu0 %v1638
        %2259 = vmatpush1.bf16.msra.mxu0 %v1637
        %2260 = vmatprep.mubr.bf16.mxu0 %v460
        %2261 = vmatmul.mubr.bf16.gmra.mrb[0].mxu0 %v459
        %v2262 = vpop.f32.mrb[0].mxu0
        %v2263 = vadd.f32 %v2222, %v2262
        %v2264 = vpop.f32.mrb[0].mxu0
        %v2265 = vadd.f32 %v2224, %v2264
        %v2266 = vpop.f32.mrb[0].mxu0
        %v2267 = vpop.f32.mrb[0].mxu0
        %2268 = vdwg.mxu0
        %2269 = vmatprep.subr.bf16.mxu0 %v1642
        %2270 = vmatpush1.bf16.msra.mxu0 %v1641
        %2271 = vmatprep.subr.bf16.mxu0 %v1646
        %2272 = vmatpush1.bf16.msra.mxu0 %v1645
        %2273 = vmatprep.subr.bf16.mxu0 %v1650
        %2274 = vmatpush1.bf16.msra.mxu0 %v1649
        %2275 = vmatprep.subr.bf16.mxu0 %v1654
        %2276 = vmatpush1.bf16.msra.mxu0 %v1653
        %2277 = vmatprep.subr.bf16.mxu0 %v1658
        %2278 = vmatpush1.bf16.msra.mxu0 %v1657
        %2279 = vmatprep.subr.bf16.mxu0 %v1662
        %2280 = vmatpush1.bf16.msra.mxu0 %v1661
        %2281 = vmatprep.subr.bf16.mxu0 %v1666
        %2282 = vmatpush1.bf16.msra.mxu0 %v1665
        %2283 = vmatprep.subr.bf16.mxu0 %v1670
        %2284 = vmatpush1.bf16.msra.mxu0 %v1669
        %2285 = vmatprep.subr.bf16.mxu0 %v1674
        %2286 = vmatpush1.bf16.msra.mxu0 %v1673
        %2287 = vmatprep.subr.bf16.mxu0 %v1678
        %2288 = vmatpush1.bf16.msra.mxu0 %v1677
        %2289 = vmatprep.subr.bf16.mxu0 %v1682
        %2290 = vmatpush1.bf16.msra.mxu0 %v1681
        %2291 = vmatprep.subr.bf16.mxu0 %v1686
        %2292 = vmatpush1.bf16.msra.mxu0 %v1685
        %2293 = vmatprep.subr.bf16.mxu0 %v1690
        %2294 = vmatpush1.bf16.msra.mxu0 %v1689
        %2295 = vmatprep.subr.bf16.mxu0 %v1694
        %2296 = vmatpush1.bf16.msra.mxu0 %v1693
        %2297 = vmatprep.subr.bf16.mxu0 %v1698
        %2298 = vmatpush1.bf16.msra.mxu0 %v1697
        %2299 = vmatprep.subr.bf16.mxu0 %v1702
        %2300 = vmatpush1.bf16.msra.mxu0 %v1701
        %2301 = vmatprep.mubr.bf16.mxu0 %v462
        %2302 = vmatmul.mubr.bf16.gmra.mrb[0].mxu0 %v461
        %v2303 = vpop.f32.mrb[0].mxu0
        %v2304 = vadd.f32 %v2263, %v2303
        %v2305 = vpop.f32.mrb[0].mxu0
        %v2306 = vadd.f32 %v2265, %v2305
        %v2307 = vpop.f32.mrb[0].mxu0
        %v2308 = vpop.f32.mrb[0].mxu0
        %2309 = vdwg.mxu0
        %2310 = vmatprep.subr.bf16.mxu0 %v1706
        %2311 = vmatpush1.bf16.msra.mxu0 %v1705
        %2312 = vmatprep.subr.bf16.mxu0 %v1710
        %2313 = vmatpush1.bf16.msra.mxu0 %v1709
        %2314 = vmatprep.subr.bf16.mxu0 %v1714
        %2315 = vmatpush1.bf16.msra.mxu0 %v1713
        %2316 = vmatprep.subr.bf16.mxu0 %v1718
        %2317 = vmatpush1.bf16.msra.mxu0 %v1717
        %2318 = vmatprep.subr.bf16.mxu0 %v1722
        %2319 = vmatpush1.bf16.msra.mxu0 %v1721
        %2320 = vmatprep.subr.bf16.mxu0 %v1726
        %2321 = vmatpush1.bf16.msra.mxu0 %v1725
        %2322 = vmatprep.subr.bf16.mxu0 %v1730
        %2323 = vmatpush1.bf16.msra.mxu0 %v1729
        %2324 = vmatprep.subr.bf16.mxu0 %v1734
        %2325 = vmatpush1.bf16.msra.mxu0 %v1733
        %2326 = vmatprep.subr.bf16.mxu0 %v1738
        %2327 = vmatpush1.bf16.msra.mxu0 %v1737
        %2328 = vmatprep.subr.bf16.mxu0 %v1742
        %2329 = vmatpush1.bf16.msra.mxu0 %v1741
        %2330 = vmatprep.subr.bf16.mxu0 %v1746
        %2331 = vmatpush1.bf16.msra.mxu0 %v1745
        %2332 = vmatprep.subr.bf16.mxu0 %v1750
        %2333 = vmatpush1.bf16.msra.mxu0 %v1749
        %2334 = vmatprep.subr.bf16.mxu0 %v1754
        %2335 = vmatpush1.bf16.msra.mxu0 %v1753
        %2336 = vmatprep.subr.bf16.mxu0 %v1758
        %2337 = vmatpush1.bf16.msra.mxu0 %v1757
        %2338 = vmatprep.subr.bf16.mxu0 %v1762
        %2339 = vmatpush1.bf16.msra.mxu0 %v1761
        %2340 = vmatprep.subr.bf16.mxu0 %v1766
        %2341 = vmatpush1.bf16.msra.mxu0 %v1765
        %2342 = vmatprep.mubr.bf16.mxu0 %v464
        %2343 = vmatmul.mubr.bf16.gmra.mrb[0].mxu0 %v463
        %v2344 = vpop.f32.mrb[0].mxu0
        %v2345 = vadd.f32 %v2304, %v2344
        %v2346 = vpop.f32.mrb[0].mxu0
        %v2347 = vadd.f32 %v2306, %v2346
        %v2348 = vpop.f32.mrb[0].mxu0
        %v2349 = vpop.f32.mrb[0].mxu0
        %2350 = vdwg.mxu0
        %v2351 = vmax.f32 %v2181, 0.0
        %v2352 = vmax.f32 %v2183, 0.0
        %v2353 = vmax.f32 %v2345, 0.0
        %v2354 = vmax.f32 %v2347, 0.0
        %v2355 = vpack.c.bf16 %v2351, %v2351
        %v2356 = vpack.c.bf16 %v2352, %v2352
        %v2357 = vpack.c.bf16 %v2353, %v2353
        %v2358 = vpack.c.bf16 %v2354, %v2354
        %v2359 = vld [vmem:[#allocation6] sm:$0xff]
        %v2360 = vld [vmem:[#allocation6 + $0x8] sm:$0xff]
        %v2361 = vld [vmem:[#allocation6 + $0x10] sm:$0xff]
        %v2362 = vld [vmem:[#allocation6 + $0x18] sm:$0xff]
        %v2363 = vld [vmem:[#allocation6 + $0x20] sm:$0xff]
        %v2364 = vld [vmem:[#allocation6 + $0x28] sm:$0xff]
        %v2365 = vld [vmem:[#allocation6 + $0x30] sm:$0xff]
        %v2366 = vld [vmem:[#allocation6 + $0x38] sm:$0xff]
        %v2367 = vld [vmem:[#allocation6 + $0x40] sm:$0xff]
        %v2368 = vld [vmem:[#allocation6 + $0x48] sm:$0xff]
        %v2369 = vld [vmem:[#allocation6 + $0x50] sm:$0xff]
        %v2370 = vld [vmem:[#allocation6 + $0x58] sm:$0xff]
        %v2371 = vld [vmem:[#allocation6 + $0x60] sm:$0xff]
        %v2372 = vld [vmem:[#allocation6 + $0x68] sm:$0xff]
        %v2373 = vld [vmem:[#allocation6 + $0x70] sm:$0xff]
        %v2374 = vld [vmem:[#allocation6 + $0x78] sm:$0xff]
        %v2375 = vld [vmem:[#allocation6 + $0x80] sm:$0xff]
        %v2376 = vld [vmem:[#allocation6 + $0x88] sm:$0xff]
        %v2377 = vld [vmem:[#allocation6 + $0x90] sm:$0xff]
        %v2378 = vld [vmem:[#allocation6 + $0x98] sm:$0xff]
        %v2379 = vld [vmem:[#allocation6 + $0xa0] sm:$0xff]
        %v2380 = vld [vmem:[#allocation6 + $0xa8] sm:$0xff]
        %v2381 = vld [vmem:[#allocation6 + $0xb0] sm:$0xff]
        %v2382 = vld [vmem:[#allocation6 + $0xb8] sm:$0xff]
        %v2383 = vld [vmem:[#allocation6 + $0xc0] sm:$0xff]
        %v2384 = vld [vmem:[#allocation6 + $0xc8] sm:$0xff]
        %v2385 = vld [vmem:[#allocation6 + $0xd0] sm:$0xff]
        %v2386 = vld [vmem:[#allocation6 + $0xd8] sm:$0xff]
        %v2387 = vld [vmem:[#allocation6 + $0xe0] sm:$0xff]
        %v2388 = vld [vmem:[#allocation6 + $0xe8] sm:$0xff]
        %v2389 = vld [vmem:[#allocation6 + $0xf0] sm:$0xff]
        %v2390 = vld [vmem:[#allocation6 + $0xf8] sm:$0xff]
        %v2391 = vld [vmem:[#allocation6 + $0x100] sm:$0xff]
        %v2392 = vld [vmem:[#allocation6 + $0x108] sm:$0xff]
        %v2393 = vld [vmem:[#allocation6 + $0x110] sm:$0xff]
        %v2394 = vld [vmem:[#allocation6 + $0x118] sm:$0xff]
        %v2395 = vld [vmem:[#allocation6 + $0x120] sm:$0xff]
        %v2396 = vld [vmem:[#allocation6 + $0x128] sm:$0xff]
        %v2397 = vld [vmem:[#allocation6 + $0x130] sm:$0xff]
        %v2398 = vld [vmem:[#allocation6 + $0x138] sm:$0xff]
        %v2399 = vld [vmem:[#allocation6 + $0x140] sm:$0xff]
        %v2400 = vld [vmem:[#allocation6 + $0x148] sm:$0xff]
        %v2401 = vld [vmem:[#allocation6 + $0x150] sm:$0xff]
        %v2402 = vld [vmem:[#allocation6 + $0x158] sm:$0xff]
        %v2403 = vld [vmem:[#allocation6 + $0x160] sm:$0xff]
        %v2404 = vld [vmem:[#allocation6 + $0x168] sm:$0xff]
        %v2405 = vld [vmem:[#allocation6 + $0x170] sm:$0xff]
        %v2406 = vld [vmem:[#allocation6 + $0x178] sm:$0xff]
        %v2407 = vld [vmem:[#allocation6 + $0x180] sm:$0xff]
        %v2408 = vld [vmem:[#allocation6 + $0x188] sm:$0xff]
        %v2409 = vld [vmem:[#allocation6 + $0x190] sm:$0xff]
        %v2410 = vld [vmem:[#allocation6 + $0x198] sm:$0xff]
        %v2411 = vld [vmem:[#allocation6 + $0x1a0] sm:$0xff]
        %v2412 = vld [vmem:[#allocation6 + $0x1a8] sm:$0xff]
        %v2413 = vld [vmem:[#allocation6 + $0x1b0] sm:$0xff]
        %v2414 = vld [vmem:[#allocation6 + $0x1b8] sm:$0xff]
        %v2415 = vld [vmem:[#allocation6 + $0x1c0] sm:$0xff]
        %v2416 = vld [vmem:[#allocation6 + $0x1c8] sm:$0xff]
        %v2417 = vld [vmem:[#allocation6 + $0x1d0] sm:$0xff]
        %v2418 = vld [vmem:[#allocation6 + $0x1d8] sm:$0xff]
        %v2419 = vld [vmem:[#allocation6 + $0x1e0] sm:$0xff]
        %v2420 = vld [vmem:[#allocation6 + $0x1e8] sm:$0xff]
        %v2421 = vld [vmem:[#allocation6 + $0x1f0] sm:$0xff]
        %v2422 = vld [vmem:[#allocation6 + $0x1f8] sm:$0xff]
        %v2423 = vld [vmem:[#allocation6 + $0x200] sm:$0xff]
        %v2424 = vld [vmem:[#allocation6 + $0x208] sm:$0xff]
        %v2425 = vld [vmem:[#allocation6 + $0x210] sm:$0xff]
        %v2426 = vld [vmem:[#allocation6 + $0x218] sm:$0xff]
        %v2427 = vld [vmem:[#allocation6 + $0x220] sm:$0xff]
        %v2428 = vld [vmem:[#allocation6 + $0x228] sm:$0xff]
        %v2429 = vld [vmem:[#allocation6 + $0x230] sm:$0xff]
        %v2430 = vld [vmem:[#allocation6 + $0x238] sm:$0xff]
        %v2431 = vld [vmem:[#allocation6 + $0x240] sm:$0xff]
        %v2432 = vld [vmem:[#allocation6 + $0x248] sm:$0xff]
        %v2433 = vld [vmem:[#allocation6 + $0x250] sm:$0xff]
        %v2434 = vld [vmem:[#allocation6 + $0x258] sm:$0xff]
        %v2435 = vld [vmem:[#allocation6 + $0x260] sm:$0xff]
        %v2436 = vld [vmem:[#allocation6 + $0x268] sm:$0xff]
        %v2437 = vld [vmem:[#allocation6 + $0x270] sm:$0xff]
        %v2438 = vld [vmem:[#allocation6 + $0x278] sm:$0xff]
        %v2439 = vld [vmem:[#allocation6 + $0x280] sm:$0xff]
        %v2440 = vld [vmem:[#allocation6 + $0x288] sm:$0xff]
        %v2441 = vld [vmem:[#allocation6 + $0x290] sm:$0xff]
        %v2442 = vld [vmem:[#allocation6 + $0x298] sm:$0xff]
        %v2443 = vld [vmem:[#allocation6 + $0x2a0] sm:$0xff]
        %v2444 = vld [vmem:[#allocation6 + $0x2a8] sm:$0xff]
        %v2445 = vld [vmem:[#allocation6 + $0x2b0] sm:$0xff]
        %v2446 = vld [vmem:[#allocation6 + $0x2b8] sm:$0xff]
        %v2447 = vld [vmem:[#allocation6 + $0x2c0] sm:$0xff]
        %v2448 = vld [vmem:[#allocation6 + $0x2c8] sm:$0xff]
        %v2449 = vld [vmem:[#allocation6 + $0x2d0] sm:$0xff]
        %v2450 = vld [vmem:[#allocation6 + $0x2d8] sm:$0xff]
        %v2451 = vld [vmem:[#allocation6 + $0x2e0] sm:$0xff]
        %v2452 = vld [vmem:[#allocation6 + $0x2e8] sm:$0xff]
        %v2453 = vld [vmem:[#allocation6 + $0x2f0] sm:$0xff]
        %v2454 = vld [vmem:[#allocation6 + $0x2f8] sm:$0xff]
        %v2455 = vld [vmem:[#allocation6 + $0x300] sm:$0xff]
        %v2456 = vld [vmem:[#allocation6 + $0x308] sm:$0xff]
        %v2457 = vld [vmem:[#allocation6 + $0x310] sm:$0xff]
        %v2458 = vld [vmem:[#allocation6 + $0x318] sm:$0xff]
        %v2459 = vld [vmem:[#allocation6 + $0x320] sm:$0xff]
        %v2460 = vld [vmem:[#allocation6 + $0x328] sm:$0xff]
        %v2461 = vld [vmem:[#allocation6 + $0x330] sm:$0xff]
        %v2462 = vld [vmem:[#allocation6 + $0x338] sm:$0xff]
        %v2463 = vld [vmem:[#allocation6 + $0x340] sm:$0xff]
        %v2464 = vld [vmem:[#allocation6 + $0x348] sm:$0xff]
        %v2465 = vld [vmem:[#allocation6 + $0x350] sm:$0xff]
        %v2466 = vld [vmem:[#allocation6 + $0x358] sm:$0xff]
        %v2467 = vld [vmem:[#allocation6 + $0x360] sm:$0xff]
        %v2468 = vld [vmem:[#allocation6 + $0x368] sm:$0xff]
        %v2469 = vld [vmem:[#allocation6 + $0x370] sm:$0xff]
        %v2470 = vld [vmem:[#allocation6 + $0x378] sm:$0xff]
        %v2471 = vld [vmem:[#allocation6 + $0x380] sm:$0xff]
        %v2472 = vld [vmem:[#allocation6 + $0x388] sm:$0xff]
        %v2473 = vld [vmem:[#allocation6 + $0x390] sm:$0xff]
        %v2474 = vld [vmem:[#allocation6 + $0x398] sm:$0xff]
        %v2475 = vld [vmem:[#allocation6 + $0x3a0] sm:$0xff]
        %v2476 = vld [vmem:[#allocation6 + $0x3a8] sm:$0xff]
        %v2477 = vld [vmem:[#allocation6 + $0x3b0] sm:$0xff]
        %v2478 = vld [vmem:[#allocation6 + $0x3b8] sm:$0xff]
        %v2479 = vld [vmem:[#allocation6 + $0x3c0] sm:$0xff]
        %v2480 = vld [vmem:[#allocation6 + $0x3c8] sm:$0xff]
        %v2481 = vld [vmem:[#allocation6 + $0x3d0] sm:$0xff]
        %v2482 = vld [vmem:[#allocation6 + $0x3d8] sm:$0xff]
        %v2483 = vld [vmem:[#allocation6 + $0x3e0] sm:$0xff]
        %v2484 = vld [vmem:[#allocation6 + $0x3e8] sm:$0xff]
        %v2485 = vld [vmem:[#allocation6 + $0x3f0] sm:$0xff]
        %v2486 = vld [vmem:[#allocation6 + $0x3f8] sm:$0xff]
        %v2487 = vld [vmem:[%s5] sm:$0xf]
        %v2489 = vlaneseq
        %v2490 = vshrl.u32 %v2489, 7
        %v2491 = vsub.s32 0, %v2490
        %v2492 = vrot.slane %v2487, %v2491
        %v2493 = vlaneseq
        %v2494 = vshrl.u32 %v2493, 7
        %v2495 = vsub.s32 1, %v2494
        %v2496 = vrot.slane %v2487, %v2495
        %v2497 = vlaneseq
        %v2498 = vshrl.u32 %v2497, 7
        %v2499 = vsub.s32 2, %v2498
        %v2500 = vrot.slane %v2487, %v2499
        %v2501 = vlaneseq
        %v2502 = vshrl.u32 %v2501, 7
        %v2503 = vsub.s32 3, %v2502
        %v2504 = vrot.slane %v2487, %v2503
        %v2637 = vunpack.c.l.b16 %v2359
        %v2638 = vunpack.c.h.b16 %v2359
        %v2639 = vunpack.c.l.b16 %v2360
        %v2640 = vunpack.c.h.b16 %v2360
        %v2641 = vunpack.c.l.b16 %v2361
        %v2642 = vunpack.c.h.b16 %v2361
        %v2643 = vunpack.c.l.b16 %v2362
        %v2644 = vunpack.c.h.b16 %v2362
        %v2645 = vunpack.c.l.b16 %v2363
        %v2646 = vunpack.c.h.b16 %v2363
        %v2647 = vunpack.c.l.b16 %v2364
        %v2648 = vunpack.c.h.b16 %v2364
        %v2649 = vunpack.c.l.b16 %v2365
        %v2650 = vunpack.c.h.b16 %v2365
        %v2651 = vunpack.c.l.b16 %v2366
        %v2652 = vunpack.c.h.b16 %v2366
        %v2653 = vunpack.c.l.b16 %v2367
        %v2654 = vunpack.c.h.b16 %v2367
        %v2655 = vunpack.c.l.b16 %v2368
        %v2656 = vunpack.c.h.b16 %v2368
        %v2657 = vunpack.c.l.b16 %v2369
        %v2658 = vunpack.c.h.b16 %v2369
        %v2659 = vunpack.c.l.b16 %v2370
        %v2660 = vunpack.c.h.b16 %v2370
        %v2661 = vunpack.c.l.b16 %v2371
        %v2662 = vunpack.c.h.b16 %v2371
        %v2663 = vunpack.c.l.b16 %v2372
        %v2664 = vunpack.c.h.b16 %v2372
        %v2665 = vunpack.c.l.b16 %v2373
        %v2666 = vunpack.c.h.b16 %v2373
        %v2667 = vunpack.c.l.b16 %v2374
        %v2668 = vunpack.c.h.b16 %v2374
        %v2669 = vunpack.c.l.b16 %v2375
        %v2670 = vunpack.c.h.b16 %v2375
        %v2671 = vunpack.c.l.b16 %v2376
        %v2672 = vunpack.c.h.b16 %v2376
        %v2673 = vunpack.c.l.b16 %v2377
        %v2674 = vunpack.c.h.b16 %v2377
        %v2675 = vunpack.c.l.b16 %v2378
        %v2676 = vunpack.c.h.b16 %v2378
        %v2677 = vunpack.c.l.b16 %v2379
        %v2678 = vunpack.c.h.b16 %v2379
        %v2679 = vunpack.c.l.b16 %v2380
        %v2680 = vunpack.c.h.b16 %v2380
        %v2681 = vunpack.c.l.b16 %v2381
        %v2682 = vunpack.c.h.b16 %v2381
        %v2683 = vunpack.c.l.b16 %v2382
        %v2684 = vunpack.c.h.b16 %v2382
        %v2685 = vunpack.c.l.b16 %v2383
        %v2686 = vunpack.c.h.b16 %v2383
        %v2687 = vunpack.c.l.b16 %v2384
        %v2688 = vunpack.c.h.b16 %v2384
        %v2689 = vunpack.c.l.b16 %v2385
        %v2690 = vunpack.c.h.b16 %v2385
        %v2691 = vunpack.c.l.b16 %v2386
        %v2692 = vunpack.c.h.b16 %v2386
        %v2693 = vunpack.c.l.b16 %v2387
        %v2694 = vunpack.c.h.b16 %v2387
        %v2695 = vunpack.c.l.b16 %v2388
        %v2696 = vunpack.c.h.b16 %v2388
        %v2697 = vunpack.c.l.b16 %v2389
        %v2698 = vunpack.c.h.b16 %v2389
        %v2699 = vunpack.c.l.b16 %v2390
        %v2700 = vunpack.c.h.b16 %v2390
        %v2701 = vunpack.c.l.b16 %v2391
        %v2702 = vunpack.c.h.b16 %v2391
        %v2703 = vunpack.c.l.b16 %v2392
        %v2704 = vunpack.c.h.b16 %v2392
        %v2705 = vunpack.c.l.b16 %v2393
        %v2706 = vunpack.c.h.b16 %v2393
        %v2707 = vunpack.c.l.b16 %v2394
        %v2708 = vunpack.c.h.b16 %v2394
        %v2709 = vunpack.c.l.b16 %v2395
        %v2710 = vunpack.c.h.b16 %v2395
        %v2711 = vunpack.c.l.b16 %v2396
        %v2712 = vunpack.c.h.b16 %v2396
        %v2713 = vunpack.c.l.b16 %v2397
        %v2714 = vunpack.c.h.b16 %v2397
        %v2715 = vunpack.c.l.b16 %v2398
        %v2716 = vunpack.c.h.b16 %v2398
        %v2717 = vunpack.c.l.b16 %v2399
        %v2718 = vunpack.c.h.b16 %v2399
        %v2719 = vunpack.c.l.b16 %v2400
        %v2720 = vunpack.c.h.b16 %v2400
        %v2721 = vunpack.c.l.b16 %v2401
        %v2722 = vunpack.c.h.b16 %v2401
        %v2723 = vunpack.c.l.b16 %v2402
        %v2724 = vunpack.c.h.b16 %v2402
        %v2725 = vunpack.c.l.b16 %v2403
        %v2726 = vunpack.c.h.b16 %v2403
        %v2727 = vunpack.c.l.b16 %v2404
        %v2728 = vunpack.c.h.b16 %v2404
        %v2729 = vunpack.c.l.b16 %v2405
        %v2730 = vunpack.c.h.b16 %v2405
        %v2731 = vunpack.c.l.b16 %v2406
        %v2732 = vunpack.c.h.b16 %v2406
        %v2733 = vunpack.c.l.b16 %v2407
        %v2734 = vunpack.c.h.b16 %v2407
        %v2735 = vunpack.c.l.b16 %v2408
        %v2736 = vunpack.c.h.b16 %v2408
        %v2737 = vunpack.c.l.b16 %v2409
        %v2738 = vunpack.c.h.b16 %v2409
        %v2739 = vunpack.c.l.b16 %v2410
        %v2740 = vunpack.c.h.b16 %v2410
        %v2741 = vunpack.c.l.b16 %v2411
        %v2742 = vunpack.c.h.b16 %v2411
        %v2743 = vunpack.c.l.b16 %v2412
        %v2744 = vunpack.c.h.b16 %v2412
        %v2745 = vunpack.c.l.b16 %v2413
        %v2746 = vunpack.c.h.b16 %v2413
        %v2747 = vunpack.c.l.b16 %v2414
        %v2748 = vunpack.c.h.b16 %v2414
        %v2749 = vunpack.c.l.b16 %v2415
        %v2750 = vunpack.c.h.b16 %v2415
        %v2751 = vunpack.c.l.b16 %v2416
        %v2752 = vunpack.c.h.b16 %v2416
        %v2753 = vunpack.c.l.b16 %v2417
        %v2754 = vunpack.c.h.b16 %v2417
        %v2755 = vunpack.c.l.b16 %v2418
        %v2756 = vunpack.c.h.b16 %v2418
        %v2757 = vunpack.c.l.b16 %v2419
        %v2758 = vunpack.c.h.b16 %v2419
        %v2759 = vunpack.c.l.b16 %v2420
        %v2760 = vunpack.c.h.b16 %v2420
        %v2761 = vunpack.c.l.b16 %v2421
        %v2762 = vunpack.c.h.b16 %v2421
        %v2763 = vunpack.c.l.b16 %v2422
        %v2764 = vunpack.c.h.b16 %v2422
        %v2765 = vunpack.c.l.b16 %v2423
        %v2766 = vunpack.c.h.b16 %v2423
        %v2767 = vunpack.c.l.b16 %v2424
        %v2768 = vunpack.c.h.b16 %v2424
        %v2769 = vunpack.c.l.b16 %v2425
        %v2770 = vunpack.c.h.b16 %v2425
        %v2771 = vunpack.c.l.b16 %v2426
        %v2772 = vunpack.c.h.b16 %v2426
        %v2773 = vunpack.c.l.b16 %v2427
        %v2774 = vunpack.c.h.b16 %v2427
        %v2775 = vunpack.c.l.b16 %v2428
        %v2776 = vunpack.c.h.b16 %v2428
        %v2777 = vunpack.c.l.b16 %v2429
        %v2778 = vunpack.c.h.b16 %v2429
        %v2779 = vunpack.c.l.b16 %v2430
        %v2780 = vunpack.c.h.b16 %v2430
        %v2781 = vunpack.c.l.b16 %v2431
        %v2782 = vunpack.c.h.b16 %v2431
        %v2783 = vunpack.c.l.b16 %v2432
        %v2784 = vunpack.c.h.b16 %v2432
        %v2785 = vunpack.c.l.b16 %v2433
        %v2786 = vunpack.c.h.b16 %v2433
        %v2787 = vunpack.c.l.b16 %v2434
        %v2788 = vunpack.c.h.b16 %v2434
        %v2789 = vunpack.c.l.b16 %v2435
        %v2790 = vunpack.c.h.b16 %v2435
        %v2791 = vunpack.c.l.b16 %v2436
        %v2792 = vunpack.c.h.b16 %v2436
        %v2793 = vunpack.c.l.b16 %v2437
        %v2794 = vunpack.c.h.b16 %v2437
        %v2795 = vunpack.c.l.b16 %v2438
        %v2796 = vunpack.c.h.b16 %v2438
        %v2797 = vunpack.c.l.b16 %v2439
        %v2798 = vunpack.c.h.b16 %v2439
        %v2799 = vunpack.c.l.b16 %v2440
        %v2800 = vunpack.c.h.b16 %v2440
        %v2801 = vunpack.c.l.b16 %v2441
        %v2802 = vunpack.c.h.b16 %v2441
        %v2803 = vunpack.c.l.b16 %v2442
        %v2804 = vunpack.c.h.b16 %v2442
        %v2805 = vunpack.c.l.b16 %v2443
        %v2806 = vunpack.c.h.b16 %v2443
        %v2807 = vunpack.c.l.b16 %v2444
        %v2808 = vunpack.c.h.b16 %v2444
        %v2809 = vunpack.c.l.b16 %v2445
        %v2810 = vunpack.c.h.b16 %v2445
        %v2811 = vunpack.c.l.b16 %v2446
        %v2812 = vunpack.c.h.b16 %v2446
        %v2813 = vunpack.c.l.b16 %v2447
        %v2814 = vunpack.c.h.b16 %v2447
        %v2815 = vunpack.c.l.b16 %v2448
        %v2816 = vunpack.c.h.b16 %v2448
        %v2817 = vunpack.c.l.b16 %v2449
        %v2818 = vunpack.c.h.b16 %v2449
        %v2819 = vunpack.c.l.b16 %v2450
        %v2820 = vunpack.c.h.b16 %v2450
        %v2821 = vunpack.c.l.b16 %v2451
        %v2822 = vunpack.c.h.b16 %v2451
        %v2823 = vunpack.c.l.b16 %v2452
        %v2824 = vunpack.c.h.b16 %v2452
        %v2825 = vunpack.c.l.b16 %v2453
        %v2826 = vunpack.c.h.b16 %v2453
        %v2827 = vunpack.c.l.b16 %v2454
        %v2828 = vunpack.c.h.b16 %v2454
        %v2829 = vunpack.c.l.b16 %v2455
        %v2830 = vunpack.c.h.b16 %v2455
        %v2831 = vunpack.c.l.b16 %v2456
        %v2832 = vunpack.c.h.b16 %v2456
        %v2833 = vunpack.c.l.b16 %v2457
        %v2834 = vunpack.c.h.b16 %v2457
        %v2835 = vunpack.c.l.b16 %v2458
        %v2836 = vunpack.c.h.b16 %v2458
        %v2837 = vunpack.c.l.b16 %v2459
        %v2838 = vunpack.c.h.b16 %v2459
        %v2839 = vunpack.c.l.b16 %v2460
        %v2840 = vunpack.c.h.b16 %v2460
        %v2841 = vunpack.c.l.b16 %v2461
        %v2842 = vunpack.c.h.b16 %v2461
        %v2843 = vunpack.c.l.b16 %v2462
        %v2844 = vunpack.c.h.b16 %v2462
        %v2845 = vunpack.c.l.b16 %v2463
        %v2846 = vunpack.c.h.b16 %v2463
        %v2847 = vunpack.c.l.b16 %v2464
        %v2848 = vunpack.c.h.b16 %v2464
        %v2849 = vunpack.c.l.b16 %v2465
        %v2850 = vunpack.c.h.b16 %v2465
        %v2851 = vunpack.c.l.b16 %v2466
        %v2852 = vunpack.c.h.b16 %v2466
        %v2853 = vunpack.c.l.b16 %v2467
        %v2854 = vunpack.c.h.b16 %v2467
        %v2855 = vunpack.c.l.b16 %v2468
        %v2856 = vunpack.c.h.b16 %v2468
        %v2857 = vunpack.c.l.b16 %v2469
        %v2858 = vunpack.c.h.b16 %v2469
        %v2859 = vunpack.c.l.b16 %v2470
        %v2860 = vunpack.c.h.b16 %v2470
        %v2861 = vunpack.c.l.b16 %v2471
        %v2862 = vunpack.c.h.b16 %v2471
        %v2863 = vunpack.c.l.b16 %v2472
        %v2864 = vunpack.c.h.b16 %v2472
        %v2865 = vunpack.c.l.b16 %v2473
        %v2866 = vunpack.c.h.b16 %v2473
        %v2867 = vunpack.c.l.b16 %v2474
        %v2868 = vunpack.c.h.b16 %v2474
        %v2869 = vunpack.c.l.b16 %v2475
        %v2870 = vunpack.c.h.b16 %v2475
        %v2871 = vunpack.c.l.b16 %v2476
        %v2872 = vunpack.c.h.b16 %v2476
        %v2873 = vunpack.c.l.b16 %v2477
        %v2874 = vunpack.c.h.b16 %v2477
        %v2875 = vunpack.c.l.b16 %v2478
        %v2876 = vunpack.c.h.b16 %v2478
        %v2877 = vunpack.c.l.b16 %v2479
        %v2878 = vunpack.c.h.b16 %v2479
        %v2879 = vunpack.c.l.b16 %v2480
        %v2880 = vunpack.c.h.b16 %v2480
        %v2881 = vunpack.c.l.b16 %v2481
        %v2882 = vunpack.c.h.b16 %v2481
        %v2883 = vunpack.c.l.b16 %v2482
        %v2884 = vunpack.c.h.b16 %v2482
        %v2885 = vunpack.c.l.b16 %v2483
        %v2886 = vunpack.c.h.b16 %v2483
        %v2887 = vunpack.c.l.b16 %v2484
        %v2888 = vunpack.c.h.b16 %v2484
        %v2889 = vunpack.c.l.b16 %v2485
        %v2890 = vunpack.c.h.b16 %v2485
        %v2891 = vunpack.c.l.b16 %v2486
        %v2892 = vunpack.c.h.b16 %v2486
        %v2893 = vpack.c.b16 %v2641, %v2637
        %v2894 = vpack.c.b16 %v2642, %v2638
        %v2895 = vpack.c.b16 %v2643, %v2639
        %v2896 = vpack.c.b16 %v2644, %v2640
        %v2897 = vpack.c.b16 %v2649, %v2645
        %v2898 = vpack.c.b16 %v2650, %v2646
        %v2899 = vpack.c.b16 %v2651, %v2647
        %v2900 = vpack.c.b16 %v2652, %v2648
        %v2901 = vpack.c.b16 %v2657, %v2653
        %v2902 = vpack.c.b16 %v2658, %v2654
        %v2903 = vpack.c.b16 %v2659, %v2655
        %v2904 = vpack.c.b16 %v2660, %v2656
        %v2905 = vpack.c.b16 %v2665, %v2661
        %v2906 = vpack.c.b16 %v2666, %v2662
        %v2907 = vpack.c.b16 %v2667, %v2663
        %v2908 = vpack.c.b16 %v2668, %v2664
        %v2909 = vpack.c.b16 %v2673, %v2669
        %v2910 = vpack.c.b16 %v2674, %v2670
        %v2911 = vpack.c.b16 %v2675, %v2671
        %v2912 = vpack.c.b16 %v2676, %v2672
        %v2913 = vpack.c.b16 %v2681, %v2677
        %v2914 = vpack.c.b16 %v2682, %v2678
        %v2915 = vpack.c.b16 %v2683, %v2679
        %v2916 = vpack.c.b16 %v2684, %v2680
        %v2917 = vpack.c.b16 %v2689, %v2685
        %v2918 = vpack.c.b16 %v2690, %v2686
        %v2919 = vpack.c.b16 %v2691, %v2687
        %v2920 = vpack.c.b16 %v2692, %v2688
        %v2921 = vpack.c.b16 %v2697, %v2693
        %v2922 = vpack.c.b16 %v2698, %v2694
        %v2923 = vpack.c.b16 %v2699, %v2695
        %v2924 = vpack.c.b16 %v2700, %v2696
        %v2925 = vpack.c.b16 %v2705, %v2701
        %v2926 = vpack.c.b16 %v2706, %v2702
        %v2927 = vpack.c.b16 %v2707, %v2703
        %v2928 = vpack.c.b16 %v2708, %v2704
        %v2929 = vpack.c.b16 %v2713, %v2709
        %v2930 = vpack.c.b16 %v2714, %v2710
        %v2931 = vpack.c.b16 %v2715, %v2711
        %v2932 = vpack.c.b16 %v2716, %v2712
        %v2933 = vpack.c.b16 %v2721, %v2717
        %v2934 = vpack.c.b16 %v2722, %v2718
        %v2935 = vpack.c.b16 %v2723, %v2719
        %v2936 = vpack.c.b16 %v2724, %v2720
        %v2937 = vpack.c.b16 %v2729, %v2725
        %v2938 = vpack.c.b16 %v2730, %v2726
        %v2939 = vpack.c.b16 %v2731, %v2727
        %v2940 = vpack.c.b16 %v2732, %v2728
        %v2941 = vpack.c.b16 %v2737, %v2733
        %v2942 = vpack.c.b16 %v2738, %v2734
        %v2943 = vpack.c.b16 %v2739, %v2735
        %v2944 = vpack.c.b16 %v2740, %v2736
        %v2945 = vpack.c.b16 %v2745, %v2741
        %v2946 = vpack.c.b16 %v2746, %v2742
        %v2947 = vpack.c.b16 %v2747, %v2743
        %v2948 = vpack.c.b16 %v2748, %v2744
        %v2949 = vpack.c.b16 %v2753, %v2749
        %v2950 = vpack.c.b16 %v2754, %v2750
        %v2951 = vpack.c.b16 %v2755, %v2751
        %v2952 = vpack.c.b16 %v2756, %v2752
        %v2953 = vpack.c.b16 %v2761, %v2757
        %v2954 = vpack.c.b16 %v2762, %v2758
        %v2955 = vpack.c.b16 %v2763, %v2759
        %v2956 = vpack.c.b16 %v2764, %v2760
        %v2957 = vpack.c.b16 %v2769, %v2765
        %v2958 = vpack.c.b16 %v2770, %v2766
        %v2959 = vpack.c.b16 %v2771, %v2767
        %v2960 = vpack.c.b16 %v2772, %v2768
        %v2961 = vpack.c.b16 %v2777, %v2773
        %v2962 = vpack.c.b16 %v2778, %v2774
        %v2963 = vpack.c.b16 %v2779, %v2775
        %v2964 = vpack.c.b16 %v2780, %v2776
        %v2965 = vpack.c.b16 %v2785, %v2781
        %v2966 = vpack.c.b16 %v2786, %v2782
        %v2967 = vpack.c.b16 %v2787, %v2783
        %v2968 = vpack.c.b16 %v2788, %v2784
        %v2969 = vpack.c.b16 %v2793, %v2789
        %v2970 = vpack.c.b16 %v2794, %v2790
        %v2971 = vpack.c.b16 %v2795, %v2791
        %v2972 = vpack.c.b16 %v2796, %v2792
        %v2973 = vpack.c.b16 %v2801, %v2797
        %v2974 = vpack.c.b16 %v2802, %v2798
        %v2975 = vpack.c.b16 %v2803, %v2799
        %v2976 = vpack.c.b16 %v2804, %v2800
        %v2977 = vpack.c.b16 %v2809, %v2805
        %v2978 = vpack.c.b16 %v2810, %v2806
        %v2979 = vpack.c.b16 %v2811, %v2807
        %v2980 = vpack.c.b16 %v2812, %v2808
        %v2981 = vpack.c.b16 %v2817, %v2813
        %v2982 = vpack.c.b16 %v2818, %v2814
        %v2983 = vpack.c.b16 %v2819, %v2815
        %v2984 = vpack.c.b16 %v2820, %v2816
        %v2985 = vpack.c.b16 %v2825, %v2821
        %v2986 = vpack.c.b16 %v2826, %v2822
        %v2987 = vpack.c.b16 %v2827, %v2823
        %v2988 = vpack.c.b16 %v2828, %v2824
        %v2989 = vpack.c.b16 %v2833, %v2829
        %v2990 = vpack.c.b16 %v2834, %v2830
        %v2991 = vpack.c.b16 %v2835, %v2831
        %v2992 = vpack.c.b16 %v2836, %v2832
        %v2993 = vpack.c.b16 %v2841, %v2837
        %v2994 = vpack.c.b16 %v2842, %v2838
        %v2995 = vpack.c.b16 %v2843, %v2839
        %v2996 = vpack.c.b16 %v2844, %v2840
        %v2997 = vpack.c.b16 %v2849, %v2845
        %v2998 = vpack.c.b16 %v2850, %v2846
        %v2999 = vpack.c.b16 %v2851, %v2847
        %v3000 = vpack.c.b16 %v2852, %v2848
        %v3001 = vpack.c.b16 %v2857, %v2853
        %v3002 = vpack.c.b16 %v2858, %v2854
        %v3003 = vpack.c.b16 %v2859, %v2855
        %v3004 = vpack.c.b16 %v2860, %v2856
        %v3005 = vpack.c.b16 %v2865, %v2861
        %v3006 = vpack.c.b16 %v2866, %v2862
        %v3007 = vpack.c.b16 %v2867, %v2863
        %v3008 = vpack.c.b16 %v2868, %v2864
        %v3009 = vpack.c.b16 %v2873, %v2869
        %v3010 = vpack.c.b16 %v2874, %v2870
        %v3011 = vpack.c.b16 %v2875, %v2871
        %v3012 = vpack.c.b16 %v2876, %v2872
        %v3013 = vpack.c.b16 %v2881, %v2877
        %v3014 = vpack.c.b16 %v2882, %v2878
        %v3015 = vpack.c.b16 %v2883, %v2879
        %v3016 = vpack.c.b16 %v2884, %v2880
        %v3017 = vpack.c.b16 %v2889, %v2885
        %v3018 = vpack.c.b16 %v2890, %v2886
        %v3019 = vpack.c.b16 %v2891, %v2887
        %v3020 = vpack.c.b16 %v2892, %v2888
        %3149 = vmatprep.subr.bf16.mxu0 %v2894
        %3150 = vmatpush1.bf16.msra.mxu0 %v2893
        %3151 = vmatprep.subr.bf16.mxu0 %v2898
        %3152 = vmatpush1.bf16.msra.mxu0 %v2897
        %3153 = vmatprep.subr.bf16.mxu0 %v2902
        %3154 = vmatpush1.bf16.msra.mxu0 %v2901
        %3155 = vmatprep.subr.bf16.mxu0 %v2906
        %3156 = vmatpush1.bf16.msra.mxu0 %v2905
        %3157 = vmatprep.subr.bf16.mxu0 %v2910
        %3158 = vmatpush1.bf16.msra.mxu0 %v2909
        %3159 = vmatprep.subr.bf16.mxu0 %v2914
        %3160 = vmatpush1.bf16.msra.mxu0 %v2913
        %3161 = vmatprep.subr.bf16.mxu0 %v2918
        %3162 = vmatpush1.bf16.msra.mxu0 %v2917
        %3163 = vmatprep.subr.bf16.mxu0 %v2922
        %3164 = vmatpush1.bf16.msra.mxu0 %v2921
        %3165 = vmatprep.subr.bf16.mxu0 %v2926
        %3166 = vmatpush1.bf16.msra.mxu0 %v2925
        %3167 = vmatprep.subr.bf16.mxu0 %v2930
        %3168 = vmatpush1.bf16.msra.mxu0 %v2929
        %3169 = vmatprep.subr.bf16.mxu0 %v2934
        %3170 = vmatpush1.bf16.msra.mxu0 %v2933
        %3171 = vmatprep.subr.bf16.mxu0 %v2938
        %3172 = vmatpush1.bf16.msra.mxu0 %v2937
        %3173 = vmatprep.subr.bf16.mxu0 %v2942
        %3174 = vmatpush1.bf16.msra.mxu0 %v2941
        %3175 = vmatprep.subr.bf16.mxu0 %v2946
        %3176 = vmatpush1.bf16.msra.mxu0 %v2945
        %3177 = vmatprep.subr.bf16.mxu0 %v2950
        %3178 = vmatpush1.bf16.msra.mxu0 %v2949
        %3179 = vmatprep.subr.bf16.mxu0 %v2954
        %3180 = vmatpush1.bf16.msra.mxu0 %v2953
        %3181 = vmatprep.mubr.bf16.mxu0 %v2356
        %3182 = vmatmul.mubr.bf16.gmra.mrb[0].mxu0 %v2355
        %v3183 = vpop.f32.mrb[0].mxu0
        %v3184 = vadd.f32 %v2492, %v3183
        %v3185 = vpop.f32.mrb[0].mxu0
        %v3186 = vadd.f32 %v2496, %v3185
        %v3187 = vpop.f32.mrb[0].mxu0
        %v3188 = vpop.f32.mrb[0].mxu0
        %3189 = vdwg.mxu0
        %3190 = vmatprep.subr.bf16.mxu0 %v2958
        %3191 = vmatpush1.bf16.msra.mxu0 %v2957
        %3192 = vmatprep.subr.bf16.mxu0 %v2962
        %3193 = vmatpush1.bf16.msra.mxu0 %v2961
        %3194 = vmatprep.subr.bf16.mxu0 %v2966
        %3195 = vmatpush1.bf16.msra.mxu0 %v2965
        %3196 = vmatprep.subr.bf16.mxu0 %v2970
        %3197 = vmatpush1.bf16.msra.mxu0 %v2969
        %3198 = vmatprep.subr.bf16.mxu0 %v2974
        %3199 = vmatpush1.bf16.msra.mxu0 %v2973
        %3200 = vmatprep.subr.bf16.mxu0 %v2978
        %3201 = vmatpush1.bf16.msra.mxu0 %v2977
        %3202 = vmatprep.subr.bf16.mxu0 %v2982
        %3203 = vmatpush1.bf16.msra.mxu0 %v2981
        %3204 = vmatprep.subr.bf16.mxu0 %v2986
        %3205 = vmatpush1.bf16.msra.mxu0 %v2985
        %3206 = vmatprep.subr.bf16.mxu0 %v2990
        %3207 = vmatpush1.bf16.msra.mxu0 %v2989
        %3208 = vmatprep.subr.bf16.mxu0 %v2994
        %3209 = vmatpush1.bf16.msra.mxu0 %v2993
        %3210 = vmatprep.subr.bf16.mxu0 %v2998
        %3211 = vmatpush1.bf16.msra.mxu0 %v2997
        %3212 = vmatprep.subr.bf16.mxu0 %v3002
        %3213 = vmatpush1.bf16.msra.mxu0 %v3001
        %3214 = vmatprep.subr.bf16.mxu0 %v3006
        %3215 = vmatpush1.bf16.msra.mxu0 %v3005
        %3216 = vmatprep.subr.bf16.mxu0 %v3010
        %3217 = vmatpush1.bf16.msra.mxu0 %v3009
        %3218 = vmatprep.subr.bf16.mxu0 %v3014
        %3219 = vmatpush1.bf16.msra.mxu0 %v3013
        %3220 = vmatprep.subr.bf16.mxu0 %v3018
        %3221 = vmatpush1.bf16.msra.mxu0 %v3017
        %3222 = vmatprep.mubr.bf16.mxu0 %v2358
        %3223 = vmatmul.mubr.bf16.gmra.mrb[0].mxu0 %v2357
        %v3224 = vpop.f32.mrb[0].mxu0
        %v3225 = vadd.f32 %v3184, %v3224
        %v3226 = vpop.f32.mrb[0].mxu0
        %v3227 = vadd.f32 %v3186, %v3226
        %v3228 = vpop.f32.mrb[0].mxu0
        %v3229 = vpop.f32.mrb[0].mxu0
        %3230 = vdwg.mxu0
        %3231 = vmatprep.subr.bf16.mxu0 %v2896
        %3232 = vmatpush1.bf16.msra.mxu0 %v2895
        %3233 = vmatprep.subr.bf16.mxu0 %v2900
        %3234 = vmatpush1.bf16.msra.mxu0 %v2899
        %3235 = vmatprep.subr.bf16.mxu0 %v2904
        %3236 = vmatpush1.bf16.msra.mxu0 %v2903
        %3237 = vmatprep.subr.bf16.mxu0 %v2908
        %3238 = vmatpush1.bf16.msra.mxu0 %v2907
        %3239 = vmatprep.subr.bf16.mxu0 %v2912
        %3240 = vmatpush1.bf16.msra.mxu0 %v2911
        %3241 = vmatprep.subr.bf16.mxu0 %v2916
        %3242 = vmatpush1.bf16.msra.mxu0 %v2915
        %3243 = vmatprep.subr.bf16.mxu0 %v2920
        %3244 = vmatpush1.bf16.msra.mxu0 %v2919
        %3245 = vmatprep.subr.bf16.mxu0 %v2924
        %3246 = vmatpush1.bf16.msra.mxu0 %v2923
        %3247 = vmatprep.subr.bf16.mxu0 %v2928
        %3248 = vmatpush1.bf16.msra.mxu0 %v2927
        %3249 = vmatprep.subr.bf16.mxu0 %v2932
        %3250 = vmatpush1.bf16.msra.mxu0 %v2931
        %3251 = vmatprep.subr.bf16.mxu0 %v2936
        %3252 = vmatpush1.bf16.msra.mxu0 %v2935
        %3253 = vmatprep.subr.bf16.mxu0 %v2940
        %3254 = vmatpush1.bf16.msra.mxu0 %v2939
        %3255 = vmatprep.subr.bf16.mxu0 %v2944
        %3256 = vmatpush1.bf16.msra.mxu0 %v2943
        %3257 = vmatprep.subr.bf16.mxu0 %v2948
        %3258 = vmatpush1.bf16.msra.mxu0 %v2947
        %3259 = vmatprep.subr.bf16.mxu0 %v2952
        %3260 = vmatpush1.bf16.msra.mxu0 %v2951
        %3261 = vmatprep.subr.bf16.mxu0 %v2956
        %3262 = vmatpush1.bf16.msra.mxu0 %v2955
        %3263 = vmatprep.mubr.bf16.mxu0 %v2356
        %3264 = vmatmul.mubr.bf16.gmra.mrb[0].mxu0 %v2355
        %v3265 = vpop.f32.mrb[0].mxu0
        %v3266 = vadd.f32 %v2500, %v3265
        %v3267 = vpop.f32.mrb[0].mxu0
        %v3268 = vadd.f32 %v2504, %v3267
        %v3269 = vpop.f32.mrb[0].mxu0
        %v3270 = vpop.f32.mrb[0].mxu0
        %3271 = vdwg.mxu0
        %3272 = vmatprep.subr.bf16.mxu0 %v2960
        %3273 = vmatpush1.bf16.msra.mxu0 %v2959
        %3274 = vmatprep.subr.bf16.mxu0 %v2964
        %3275 = vmatpush1.bf16.msra.mxu0 %v2963
        %3276 = vmatprep.subr.bf16.mxu0 %v2968
        %3277 = vmatpush1.bf16.msra.mxu0 %v2967
        %3278 = vmatprep.subr.bf16.mxu0 %v2972
        %3279 = vmatpush1.bf16.msra.mxu0 %v2971
        %3280 = vmatprep.subr.bf16.mxu0 %v2976
        %3281 = vmatpush1.bf16.msra.mxu0 %v2975
        %3282 = vmatprep.subr.bf16.mxu0 %v2980
        %3283 = vmatpush1.bf16.msra.mxu0 %v2979
        %3284 = vmatprep.subr.bf16.mxu0 %v2984
        %3285 = vmatpush1.bf16.msra.mxu0 %v2983
        %3286 = vmatprep.subr.bf16.mxu0 %v2988
        %3287 = vmatpush1.bf16.msra.mxu0 %v2987
        %3288 = vmatprep.subr.bf16.mxu0 %v2992
        %3289 = vmatpush1.bf16.msra.mxu0 %v2991
        %3290 = vmatprep.subr.bf16.mxu0 %v2996
        %3291 = vmatpush1.bf16.msra.mxu0 %v2995
        %3292 = vmatprep.subr.bf16.mxu0 %v3000
        %3293 = vmatpush1.bf16.msra.mxu0 %v2999
        %3294 = vmatprep.subr.bf16.mxu0 %v3004
        %3295 = vmatpush1.bf16.msra.mxu0 %v3003
        %3296 = vmatprep.subr.bf16.mxu0 %v3008
        %3297 = vmatpush1.bf16.msra.mxu0 %v3007
        %3298 = vmatprep.subr.bf16.mxu0 %v3012
        %3299 = vmatpush1.bf16.msra.mxu0 %v3011
        %3300 = vmatprep.subr.bf16.mxu0 %v3016
        %3301 = vmatpush1.bf16.msra.mxu0 %v3015
        %3302 = vmatprep.subr.bf16.mxu0 %v3020
        %3303 = vmatpush1.bf16.msra.mxu0 %v3019
        %3304 = vmatprep.mubr.bf16.mxu0 %v2358
        %3305 = vmatmul.mubr.bf16.gmra.mrb[0].mxu0 %v2357
        %v3306 = vpop.f32.mrb[0].mxu0
        %v3307 = vadd.f32 %v3266, %v3306
        %v3308 = vpop.f32.mrb[0].mxu0
        %v3309 = vadd.f32 %v3268, %v3308
        %v3310 = vpop.f32.mrb[0].mxu0
        %v3311 = vpop.f32.mrb[0].mxu0
        %3312 = vdwg.mxu0
        %v3313 = vtanh.pop %v3225
        %v3314 = vtanh.pop %v3227
        %v3315 = vxor.u32 %v3307, 2147483648
        %v3316 = vxor.u32 %v3309, 2147483648
        %v3317 = vmul.f32 %v3315, 1.442695
        %v3318 = vpow.pop %v3317
        %v3319 = vmul.f32 %v3316, 1.442695
        %v3320 = vpow.pop %v3319
        %v3321 = vadd.f32 %v3318, 1.0
        %v3322 = vadd.f32 %v3320, 1.0
        %v3323 = vrcp.pop %v3321
        %v3324 = vmul.f32 1.0, %v3323
        %v3325 = vrcp.pop %v3322
        %v3326 = vmul.f32 1.0, %v3325
        %v3327 = vmul.f32 %v3313, %v3324
        %v3328 = vmul.f32 %v3314, %v3326
        %v3329 = vld [vmem:[%s6] ss:$2 sm:$0x3]
        %v3331 = vlaneseq
        %v3332 = vshrl.u32 %v3331, 7
        %v3333 = vsub.s32 0, %v3332
        %v3334 = vrot.slane %v3329, %v3333
        %v3335 = vlaneseq
        %v3336 = vshrl.u32 %v3335, 7
        %v3337 = vsub.s32 1, %v3336
        %v3338 = vrot.slane %v3329, %v3337
        %v3341 = vmul.f32 %v3327, %v3334
        %v3342 = vmul.f32 %v3328, %v3338
        %v3343 = vadd.f32 %v3341, %v3342
        %3344 = vadd.xlane.f32.xlu0 %v3343
        %v3345 = vpop.xlane.xlu0 %3344
        %v3346 = vld [vmem:[%s7] sm:$0x1]
        %v3348 = vlaneseq
        %v3349 = vshrl.u32 %v3348, 7
        %v3350 = vsub.s32 0, %v3349
        %v3351 = vrot.slane %v3346, %v3350
        %v3353 = vadd.f32 %v3345, %v3351
        %s3354 = scalar_lea.vmem %s6, 1
        %v3355 = vld [vmem:[%s3354] ss:$2 sm:$0x3]
        %v3357 = vlaneseq
        %v3358 = vshrl.u32 %v3357, 7
        %v3359 = vsub.s32 0, %v3358
        %v3360 = vrot.slane %v3355, %v3359
        %v3361 = vlaneseq
        %v3362 = vshrl.u32 %v3361, 7
        %v3363 = vsub.s32 1, %v3362
        %v3364 = vrot.slane %v3355, %v3363
        %v3367 = vmul.f32 %v3327, %v3360
        %v3368 = vmul.f32 %v3328, %v3364
        %v3369 = vadd.f32 %v3367, %v3368
        %3370 = vadd.xlane.f32.xlu0 %v3369
        %v3371 = vpop.xlane.xlu0 %3370
        %v3372 = vadd.f32 %v3371, %v3351
        %v3373 = vld [vmem:[%s444] sm:$0xff]
        %v3374 = vmul.f32 %v3372, 0.5
        %v3375 = vmul.f32 %v3374, 1.442695
        %v3376 = vpow.pop %v3375
        %3378 = vrot.lane.b32.xlu0 %v3376, 127
        %v3379 = vpop.permute.xlu0 %3378
        %v3381 = vmul.f32 %v3373, %v3379
        %v3382 = vadd.f32 %v3353, %v3381
        %v3383 = vxor.u32 %v3382, 2147483648
        %v3384 = vmul.f32 %v3383, 1.442695
        %v3385 = vpow.pop %v3384
        %v3386 = vadd.f32 %v3385, 1.0
        %v3387 = vrcp.pop %v3386
        %v3388 = vmul.f32 1.0, %v3387
        %v3389 = vld [vmem:[%s10] sm:$0x1]
        %v3391 = vlaneseq
        %v3392 = vshrl.u32 %v3391, 7
        %v3393 = vsub.s32 0, %v3392
        %v3394 = vrot.slane %v3389, %v3393
        %v3396 = vsub.f32 %v3394, %v3372
        %v3397 = vrcp.pop 2.0
        %v3398 = vmul.f32 %v3396, %v3397
        %v3399 = vmul.f32 %v3372, %v3372
        %v3400 = vsub.f32 %v3394, %v3353
        %v3401 = vmul.f32 %v3400, %v3400
        %3403 = vrot.lane.b32.xlu0 %v3401, 1
        %v3404 = vpop.permute.xlu0 %3403
        %v3406 = vadd.f32 %v3399, %v3404
        %v3407 = vmul.f32 %v3389, 2.0
        %v3408 = vmul.f32 %v3407, %v3389
        %v3410 = vlaneseq
        %v3411 = vshrl.u32 %v3410, 7
        %v3412 = vsub.s32 0, %v3411
        %v3413 = vrot.slane %v3408, %v3412
        %v3415 = vrcp.pop %v3413
        %v3416 = vmul.f32 %v3406, %v3415
        %v3417 = vadd.f32 %v3398, %v3416
        %v3418 = vsub.f32 %v3417, 0.5
        %3420 = vset.pattern.permute.xlu0 0
        %3421 = vperm.xlu0 %3420, %v3388
        %v3422 = vpop.permute.xlu0 %3421
        %v3424 = vmul.f32 %v3422, %v2351
        %v3425 = vmul.f32 %v3422, %v2352
        %v3426 = vmul.f32 %v3422, %v2353
        %v3427 = vmul.f32 %v3422, %v2354
        %v3428 = vrot.slane %v3424, 4
        %v3429 = vadd.f32 %v3424, %v3428
        %v3430 = vrot.slane %v3429, 2
        %v3431 = vadd.f32 %v3429, %v3430
        %v3432 = vrot.slane %v3431, 1
        %v3433 = vadd.f32 %v3431, %v3432
        %v3434 = vrot.slane %v3425, 4
        %v3435 = vadd.f32 %v3425, %v3434
        %v3436 = vrot.slane %v3435, 2
        %v3437 = vadd.f32 %v3435, %v3436
        %v3438 = vrot.slane %v3437, 1
        %v3439 = vadd.f32 %v3437, %v3438
        %v3440 = vrot.slane %v3426, 4
        %v3441 = vadd.f32 %v3426, %v3440
        %v3442 = vrot.slane %v3441, 2
        %v3443 = vadd.f32 %v3441, %v3442
        %v3444 = vrot.slane %v3443, 1
        %v3445 = vadd.f32 %v3443, %v3444
        %v3446 = vrot.slane %v3427, 4
        %v3447 = vadd.f32 %v3427, %v3446
        %v3448 = vrot.slane %v3447, 2
        %v3449 = vadd.f32 %v3447, %v3448
        %v3450 = vrot.slane %v3449, 1
        %v3451 = vadd.f32 %v3449, %v3450
        %vm3452 = vcmask 7168
        %v3453 = vsel %vm3452, %v3388, 0.0
        %3454 = vadd.xlane.f32.xlu0 %v3453
        %v3455 = vpop.xlane.xlu0 %3454
        %v3456 = vrot.slane %v3455, 4
        %v3457 = vadd.f32 %v3455, %v3456
        %v3458 = vrot.slane %v3457, 2
        %v3459 = vadd.f32 %v3457, %v3458
        %v3460 = vrot.slane %v3459, 1
        %v3461 = vadd.f32 %v3459, %v3460
        %s3462 = vtos %v3461
        %v3463 = vstv %s3462
        %v3464 = vrcp.pop %v3463
        %v3465 = vmul.f32 %v3433, %v3464
        %v3466 = vmul.f32 %v3439, %v3464
        %v3467 = vmul.f32 %v3445, %v3464
        %v3468 = vmul.f32 %v3451, %v3464
        %v3469 = vld [vmem:[%s8] ss:$2 sm:$0xf]
        %v3471 = vlaneseq
        %v3472 = vshrl.u32 %v3471, 7
        %v3473 = vsub.s32 0, %v3472
        %v3474 = vrot.slane %v3469, %v3473
        %v3475 = vlaneseq
        %v3476 = vshrl.u32 %v3475, 7
        %v3477 = vsub.s32 1, %v3476
        %v3478 = vrot.slane %v3469, %v3477
        %v3479 = vlaneseq
        %v3480 = vshrl.u32 %v3479, 7
        %v3481 = vsub.s32 2, %v3480
        %v3482 = vrot.slane %v3469, %v3481
        %v3483 = vlaneseq
        %v3484 = vshrl.u32 %v3483, 7
        %v3485 = vsub.s32 3, %v3484
        %v3486 = vrot.slane %v3469, %v3485
        %v3491 = vmul.f32 %v3465, %v3474
        %v3492 = vmul.f32 %v3466, %v3478
        %v3493 = vmul.f32 %v3467, %v3482
        %v3494 = vmul.f32 %v3468, %v3486
        %vm3495 = vcmask 1040384
        %v3496 = vsel %vm3495, %v3491, 0.0
        %v3497 = vsel %vm3495, %v3492, 0.0
        %v3498 = vadd.f32 %v3496, %v3497
        %v3499 = vsel %vm3495, %v3493, 0.0
        %v3500 = vadd.f32 %v3498, %v3499
        %v3501 = vsel %vm3495, %v3494, 0.0
        %v3502 = vadd.f32 %v3500, %v3501
        %3503 = vadd.xlane.f32.xlu0 %v3502
        %v3504 = vpop.xlane.xlu0 %3503
        %v3505 = vld [vmem:[%s9] sm:$0x1]
        %v3506 = vadd.f32 %v3504, %v3505
        %s3507 = scalar_lea.vmem %s8, 1
        %v3508 = vld [vmem:[%s3507] ss:$2 sm:$0xf]
        %v3510 = vlaneseq
        %v3511 = vshrl.u32 %v3510, 7
        %v3512 = vsub.s32 0, %v3511
        %v3513 = vrot.slane %v3508, %v3512
        %v3514 = vlaneseq
        %v3515 = vshrl.u32 %v3514, 7
        %v3516 = vsub.s32 1, %v3515
        %v3517 = vrot.slane %v3508, %v3516
        %v3518 = vlaneseq
        %v3519 = vshrl.u32 %v3518, 7
        %v3520 = vsub.s32 2, %v3519
        %v3521 = vrot.slane %v3508, %v3520
        %v3522 = vlaneseq
        %v3523 = vshrl.u32 %v3522, 7
        %v3524 = vsub.s32 3, %v3523
        %v3525 = vrot.slane %v3508, %v3524
        %v3530 = vmul.f32 %v3465, %v3513
        %v3531 = vmul.f32 %v3466, %v3517
        %v3532 = vmul.f32 %v3467, %v3521
        %v3533 = vmul.f32 %v3468, %v3525
        %v3534 = vsel %vm3495, %v3530, 0.0
        %v3535 = vsel %vm3495, %v3531, 0.0
        %v3536 = vadd.f32 %v3534, %v3535
        %v3537 = vsel %vm3495, %v3532, 0.0
        %v3538 = vadd.f32 %v3536, %v3537
        %v3539 = vsel %vm3495, %v3533, 0.0
        %v3540 = vadd.f32 %v3538, %v3539
        %3541 = vadd.xlane.f32.xlu0 %v3540
        %v3542 = vpop.xlane.xlu0 %3541
        %v3544 = vlaneseq
        %v3545 = vshrl.u32 %v3544, 7
        %v3546 = vsub.s32 0, %v3545
        %v3547 = vrot.slane %v3505, %v3546
        %3548 = vrot.lane.b32.xlu0 %v3547, 127
        %v3549 = vpop.permute.xlu0 %3548
        %v3551 = vadd.f32 %v3542, %v3549
        %v3552 = vlaneseq
        %v3553 = vand.u32 %v3552, 127
        %vm3554 = vcmp.eq.s32.totalorder %v3553, 0
        %v3555 = vsel %vm3554, %v3422, 0.0
        %vm3556 = vcmp.eq.s32.totalorder %v3553, 1
        %3558 = vset.pattern.permute.xlu0 1
        %3559 = vperm.xlu0 %3558, %v3418
        %v3560 = vpop.permute.xlu0 %3559
        %v3562 = vsel %vm3556, %v3560, %v3555
        %vm3563 = vcmp.eq.s32.totalorder %v3553, 2
        %s3565 = vtos %v3506
        %v3566 = vstv %s3565
        %v3568 = vsel %vm3563, %v3566, %v3562
        %vm3569 = vcmp.eq.s32.totalorder %v3553, 3
        %s3571 = vtos %v3551
        %v3572 = vstv %s3571
        %v3574 = vsel %vm3569, %v3572, %v3568
        %3575 = vst [vmem:[%s448] sm:$0xff] %v3574
        %p3576 = scmp.lt.s32.totalorder %s26, 3
        %s3577 = scalar_select %p3576, %s26, 3
        %s3578 = smul.addr %s3577, 8
        %s3579 = scalar_lea.vmem %s11, %s3578
        // Predicated region
        $region77: #{bmil_forward.1} parent=63 // pred_check
          %p3580 = pneg %p285
        $region78: #{bmil_forward.1} parent=63 // pred_check_branch
          %3582 = sbr.rel (%p3580) target = $region80
        $region79: #{bmil_forward.1} parent=63 // pred_region
          _
        $region80: #{bmil_forward.1} parent=63 // pred_fallthru
          _
      $region64: #{bmil_forward.1} parent=5 // pred_fallthru
        _
      %p3583 = scmp.le.s32.totalorder 2, %s21
      // Predicated region
      $region81: #{bmil_forward.1} parent=5 // pred_check
        %p3584 = pneg %p3583
      $region82: #{bmil_forward.1} parent=5 // pred_check_branch
        %3586 = sbr.rel (%p3584) target = $region84
      $region83: #{bmil_forward.1} parent=5 // pred_region
        %s3587 = ssub.s32 %s21, 2
        // Predicated region
        $region85: #{bmil_forward.1} parent=83 // pred_check
          %p3588 = pneg %p291
        $region86: #{bmil_forward.1} parent=83 // pred_check_branch
          %3590 = sbr.rel (%p3588) target = $region88
        $region87: #{bmil_forward.1} parent=83 // pred_region
          %p3591 = scmp.lt.s32.totalorder %s27, 3
          %s3592 = scalar_select %p3591, %s27, 3
          %s3593 = smul.addr %s3592, 8
          %s3594 = scalar_lea.vmem %s11, %s3593
        $region88: #{bmil_forward.1} parent=83 // pred_fallthru
          _
      $region84: #{bmil_forward.1} parent=5 // pred_fallthru
        _
    $region6: #{bmil_forward.1} parent=1 // loop_footer
      %s25 = sadd.s32 1, %s21
    $region7: #{bmil_forward.1} parent=1 // loop_footer_branch
      %20 = sbr.rel target = $region3
    $region8: #{bmil_forward.1} parent=1 // loop_exit
      _
    %3595 = vsyncpa [#allocation3], 1
    %s3596 = scalar_lea.sflag [#allocation3], 1
    %3597 = vsyncpa %s3596, 1
    %3598 = vsyncpa [#allocation5], 1

</llo_original>
